<compile_context>
chip_gen: v7x
topology: tpu7x:2x2x1
jax: 0.10.0
libtpu: 0.0.40
codegen_flags: <defaults>
</compile_context>

<pallas_src>
import functools

import jax
import jax.numpy as jnp
from jax.experimental import pallas as pl
from jax.experimental.pallas import tpu as pltpu

LANE = 128
SUBLANE = 8
T_BLK = 16


def _round_up(x, m):
    return ((x + m - 1) // m) * m


def _const_spec(block_shape, index_map):
    """BlockSpec for blocks whose index is (nearly) constant across the grid:
    single-buffer them so they don't burn 2x resident VMEM on dead
    double-buffering (critical at production H under v7x's 64 MiB budget)."""
    try:
        return pl.BlockSpec(block_shape, index_map,
                            pipeline_mode=pl.Buffered(1))
    except TypeError:  # older jax without pipeline_mode on BlockSpec
        return pl.BlockSpec(block_shape, index_map)


def _gru_dir_block_kernel(len_ref, emb_ref, wih_ref, whh_ref, bih_ref, bhh_ref,
                          out_ref, h_ref, gi_scr,
                          *, t_blk, bp, hp, nblk):
    """One (direction, time-block) grid step of the bidirectional GRU.

    Grid = (2, NB): axis 0 is the direction (parallel -> separate TensorCores
    on v7x), axis 1 is the time-block position along that direction's traversal
    (arbitrary -> carries the recurrence).  h_ref is the VMEM-resident
    hidden-state carry: its block index is constant along the time axis.
    """
    d = pl.program_id(0)          # 0 = forward, 1 = backward
    i = pl.program_id(1)          # position along this direction's traversal
    tp = nblk * t_blk

    @pl.when(i == 0)
    def _():
        h_ref[...] = jnp.zeros_like(h_ref)

    # Block-level input projection: one (t_blk*BP, HP) @ (HP, 3HP) MXU matmul
    # (b_ih folded in), accumulated in f32 into a VMEM scratch.
    gi_scr[...] = jnp.dot(emb_ref[...], wih_ref[...],
                          preferred_element_type=jnp.float32) + bih_ref[...]

    lengths = len_ref[...]        # (BP, 1) int32
    whh = whh_ref[...]            # (HP, 3HP) compute dtype (bf16 in prod mode)
    bhh = bhh_ref[...]            # (1, 3HP)  f32
    h = h_ref[...]                # (BP, HP)  f32 hidden-state carry

    # Unrolled recurrence over the time block.  Only the tiny (BP,HP)@(HP,3HP)
    # hidden projection + f32 gate math sit on the serial critical path.
    for j in range(t_blk):
        # Row inside the block / absolute time step for this direction:
        #   forward  (d=0): row j,          t = i*t_blk + j
        #   backward (d=1): row t_blk-1-j,  t = TP-1 - (i*t_blk + j)
        jj = j + d * (t_blk - 1 - 2 * j)
        s = i * t_blk + j
        t = s + d * (tp - 1 - 2 * s)
        row0 = pl.multiple_of(jj * bp, bp)

        gi = gi_scr[pl.ds(row0, bp), :]                        # (BP, 3HP) f32
        gh = jnp.dot(h.astype(whh.dtype), whh,
                     preferred_element_type=jnp.float32) + bhh
        r = jax.nn.sigmoid(gi[:, :hp] + gh[:, :hp])
        z = jax.nn.sigmoid(gi[:, hp:2 * hp] + gh[:, hp:2 * hp])
        n = jnp.tanh(gi[:, 2 * hp:] + r * gh[:, 2 * hp:])
        h_new = n + z * (h - n)                                # == (1-z)*n + z*h
        # Packed-sequence semantics: freeze hidden / zero output past length.
        m = (lengths > t).astype(jnp.float32)                  # (BP, 1)
        h = h + m * (h_new - h)
        out_ref[pl.ds(row0, bp), :] = (m * h_new).astype(out_ref.dtype)

    h_ref[...] = h


def bigru_pallas(lengths, emb2d, wih, whh, bih, bhh, *, t_blk, bp, hp, out_dtype):
    """Single pallas_call running both GRU directions.

    lengths : (BP, 1) int32
    emb2d   : (TP*BP, HP) compute dtype   (time-major, row = t*BP + b)
    wih/whh : (2, HP, 3HP) compute dtype  (dir 0 = fwd, dir 1 = bwd)
    bih/bhh : (2, 1, 3HP) float32
    returns : out (2, TP*BP, HP) out_dtype, h_n (2, BP, HP) float32
    """
    g = 3 * hp
    nblk = emb2d.shape[0] // (t_blk * bp)

    kernel = functools.partial(_gru_dir_block_kernel,
                               t_blk=t_blk, bp=bp, hp=hp, nblk=nblk)

    # Time-block owned by (direction d, step i): fwd walks 0..NB-1, bwd NB-1..0.
    def tblk_idx(d, i):
        return i + d * (nblk - 1 - 2 * i)

    grid_spec = pltpu.PrefetchScalarGridSpec(
        num_scalar_prefetch=0,
        grid=(2, nblk),
        in_specs=[
            _const_spec((bp, 1), lambda d, i: (0, 0)),                  # lengths
            pl.BlockSpec((t_blk * bp, hp),
                         lambda d, i: (tblk_idx(d, i), 0)),             # emb slab
            _const_spec((None, hp, g), lambda d, i: (d, 0, 0)),         # W_ih^T
            _const_spec((None, hp, g), lambda d, i: (d, 0, 0)),         # W_hh^T
            _const_spec((None, 1, g), lambda d, i: (d, 0, 0)),          # b_ih
            _const_spec((None, 1, g), lambda d, i: (d, 0, 0)),          # b_hh
        ],
        out_specs=[
            pl.BlockSpec((None, t_blk * bp, hp),
                         lambda d, i: (d, tblk_idx(d, i), 0)),          # outputs
            pl.BlockSpec((None, bp, hp), lambda d, i: (d, 0, 0)),       # final h
        ],
        scratch_shapes=[pltpu.VMEM((t_blk * bp, g), jnp.float32)],      # gi block
    )

    return pl.pallas_call(
        kernel,
        out_shape=(
            jax.ShapeDtypeStruct((2, emb2d.shape[0], hp), out_dtype),
            jax.ShapeDtypeStruct((2, bp, hp), jnp.float32),
        ),
        grid_spec=grid_spec,
        # Direction axis is "parallel" (split across the 2 TensorCores on v7x).
        # The time axis MUST stay "arbitrary": the final-hidden output block is
        # revisited every step and carries the recurrence state.
        compiler_params=pltpu.CompilerParams(
            dimension_semantics=("parallel", "arbitrary"),
            vmem_limit_bytes=48 * 1024 * 1024),
    )(lengths, emb2d, wih, whh, bih, bhh)


def encoder_rnn_forward(params, input_seq, input_lengths, *,
                        t_blk=T_BLK, compute_dtype=jnp.bfloat16):
    """Forward pass equivalent to EncoderRNN.forward (n_layers=1, dropout=0)."""
    # Embedding lookup (glue, plain JAX gather).
    emb = params["embedding"][input_seq]                        # (T, B, H) f32
    T, B, H = emb.shape
    HP = _round_up(H, LANE)
    BP = _round_up(B, SUBLANE)
    TP = _round_up(T, t_blk)
    G = 3 * HP

    # Per-gate padded weight layout: gate gt occupies columns [gt*HP, gt*HP+H).
    # Zero padding keeps padded lanes / rows numerically inert.
    def pad_gates(w):                                           # (R,3H)->(R,3HP)
        out = jnp.zeros((w.shape[0], G), jnp.float32)
        for gt in range(3):
            out = out.at[:, gt * HP:gt * HP + H].set(w[:, gt * H:(gt + 1) * H])
        return out

    def pad_rows(w):                                            # (H,G)->(HP,G)
        return jnp.pad(w, ((0, HP - w.shape[0]), (0, 0)))

    wih = jnp.stack([pad_rows(pad_gates(params["wih_f"])),
                     pad_rows(pad_gates(params["wih_b"]))]).astype(compute_dtype)
    whh = jnp.stack([pad_rows(pad_gates(params["whh_f"])),
                     pad_rows(pad_gates(params["whh_b"]))]).astype(compute_dtype)
    bih = jnp.stack([pad_gates(params["bih_f"]), pad_gates(params["bih_b"])])
    bhh = jnp.stack([pad_gates(params["bhh_f"]), pad_gates(params["bhh_b"])])

    # Embedding slab: pad to (TP, BP, HP) and flatten (time, batch) so each
    # grid step streams one lane/sublane-dense (t_blk*BP, HP) block.
    emb_p = jnp.pad(emb, ((0, TP - T), (0, BP - B), (0, HP - H)))
    emb2d = emb_p.reshape(TP * BP, HP).astype(compute_dtype)

    # Lengths live in a tiny single-buffered VMEM block; padded batch rows get
    # length 0 so their hidden state and outputs stay exactly zero.  Clamp to T
    # so padded (zero-embedding) time steps can never be treated as valid.
    lengths = jnp.zeros((BP, 1), jnp.int32).at[:B, 0].set(
        jnp.minimum(input_lengths.astype(jnp.int32), T))

    out2, h_n = bigru_pallas(lengths, emb2d, wih, whh, bih, bhh,
                             t_blk=t_blk, bp=BP, hp=HP, out_dtype=compute_dtype)

    out4 = out2.reshape(2, TP, BP, HP)
    # outputs[:, :, :H] + outputs[:, :, H:] of the PyTorch module; slice padding.
    outputs = (out4[0].astype(jnp.float32)
               + out4[1].astype(jnp.float32))[:T, :B, :H]
    hidden = h_n[:, :B, :H]                                     # (2, B, H) f32
    return outputs, hidden


# ----------------------------------------------------------------------------
# Pure-JAX reference (lax.scan) for correctness checking.
# ----------------------------------------------------------------------------
def gru_direction_ref(x, mask, wih_t, whh_t, bih, bhh, reverse):
    T, B, H = x.shape

    def step(h_prev, inp):
        xt, mt = inp
        gi = xt @ wih_t + bih
        gh = h_prev @ whh_t + bhh
        r = jax.nn.sigmoid(gi[:, :H] + gh[:, :H])
        z = jax.nn.sigmoid(gi[:, H:2 * H] + gh[:, H:2 * H])
        n = jnp.tanh(gi[:, 2 * H:] + r * gh[:, 2 * H:])
        h_new = (1.0 - z) * n + z * h_prev
        h = mt * h_new + (1.0 - mt) * h_prev
        return h, h_new * mt

    xs = (x[::-1], mask[::-1]) if reverse else (x, mask)
    h_n, outs = jax.lax.scan(step, jnp.zeros((B, H), jnp.float32), xs)
    if reverse:
        outs = outs[::-1]
    return outs, h_n


def encoder_rnn_ref(params, input_seq, input_lengths):
    emb = params["embedding"][input_seq]
    T = emb.shape[0]
    mask = (jnp.arange(T)[:, None] < input_lengths[None, :]).astype(jnp.float32)[:, :, None]
    out_f, h_f = gru_direction_ref(emb, mask, params["wih_f"], params["whh_f"],
                                   params["bih_f"], params["bhh_f"], False)
    out_b, h_b = gru_direction_ref(emb, mask, params["wih_b"], params["whh_b"],
                                   params["bih_b"], params["bhh_b"], True)
    return out_f + out_b, jnp.stack([h_f, h_b], axis=0)


def init_params(key, vocab_size, hidden_size):
    ks = jax.random.split(key, 9)
    H = hidden_size
    s = 0.1

    def w(k, shape):
        return jax.random.normal(k, shape, dtype=jnp.float32) * s

    return {
        "embedding": w(ks[0], (vocab_size, H)),
        # Stored already transposed: (H, 3H) so projections are x @ W^T directly.
        "wih_f": w(ks[1], (H, 3 * H)),
        "whh_f": w(ks[2], (H, 3 * H)),
        "bih_f": w(ks[3], (1, 3 * H)),
        "bhh_f": w(ks[4], (1, 3 * H)),
        "wih_b": w(ks[5], (H, 3 * H)),
        "whh_b": w(ks[6], (H, 3 * H)),
        "bih_b": w(ks[7], (1, 3 * H)),
        "bhh_b": w(ks[8], (1, 3 * H)),
    }


if __name__ == "__main__":
    key = jax.random.PRNGKey(0)
    hidden_size = 32
    vocab_size = 20
    T, B = 8, 2

    k_param, k_seq = jax.random.split(key)
    params = init_params(k_param, vocab_size, hidden_size)

    input_seq = jax.random.randint(k_seq, (T, B), 0, vocab_size, dtype=jnp.int32)
    # pack_padded_sequence expects descending lengths.
    input_lengths = jnp.array([8, 5], dtype=jnp.int32)

    ref_out, ref_hid = encoder_rnn_ref(params, input_seq, input_lengths)

    # f32-compute path: tight check against the lax.scan reference.
    fwd_f32 = jax.jit(functools.partial(encoder_rnn_forward,
                                        compute_dtype=jnp.float32))
    out32, hid32 = fwd_f32(params, input_seq, input_lengths)
    out32 = jax.block_until_ready(out32)
    hid32 = jax.block_until_ready(hid32)
    assert out32.shape == (T, B, hidden_size)
    assert hid32.shape == (2, B, hidden_size)
    assert jnp.allclose(out32, ref_out, atol=1e-4), "f32 outputs mismatch"
    assert jnp.allclose(hid32, ref_hid, atol=1e-4), "f32 hidden mismatch"

    # bf16-streaming path (production config): looser tolerance.
    fwd_bf16 = jax.jit(functools.partial(encoder_rnn_forward,
                                         compute_dtype=jnp.bfloat16))
    outbf, hidbf = fwd_bf16(params, input_seq, input_lengths)
    outbf = jax.block_until_ready(outbf)
    hidbf = jax.block_until_ready(hidbf)
    assert outbf.shape == (T, B, hidden_size)
    assert hidbf.shape == (2, B, hidden_size)
    assert jnp.allclose(outbf, ref_out, atol=2e-2), "bf16 outputs mismatch"
    assert jnp.allclose(hidbf, ref_hid, atol=2e-2), "bf16 hidden mismatch"

    print("KERNEL_OK")
</pallas_src>

<mosaic_0001>
module attributes {stable_mosaic.version = 11 : i64} {
  func.func @_gru_dir_block_kernel(%arg0: i32, %arg1: i32, %arg2: memref<8x1xi32, #tpu.memory_space<vmem>>, %arg3: memref<128x128xf32, #tpu.memory_space<vmem>>, %arg4: memref<1x128x384xf32, #tpu.memory_space<vmem>>, %arg5: memref<1x128x384xf32, #tpu.memory_space<vmem>>, %arg6: memref<1x1x384xf32, #tpu.memory_space<vmem>>, %arg7: memref<1x1x384xf32, #tpu.memory_space<vmem>>, %arg8: memref<1x128x128xf32, #tpu.memory_space<vmem>>, %arg9: memref<1x8x128xf32, #tpu.memory_space<vmem>>, %arg10: memref<128x384xf32, #tpu.memory_space<vmem>>) attributes {dimension_semantics = [#tpu.dimension_semantics<parallel>, #tpu.dimension_semantics<arbitrary>], iteration_bounds = array<i64: 2, 1>, scalar_prefetch = 0 : i64, scratch_operands = 1 : i64, tpu.core_type = #tpu.core_type<tc>, window_params = [{pipeline_mode = #tpu.pipeline_mode<synchronous>, transform_indices = @transform_0, window_bounds = array<i64: 8, 1>}, {transform_indices = @transform_1, window_bounds = array<i64: 128, 128>}, {pipeline_mode = #tpu.pipeline_mode<synchronous>, transform_indices = @transform_2, window_bounds = array<i64: 1, 128, 384>}, {pipeline_mode = #tpu.pipeline_mode<synchronous>, transform_indices = @transform_3, window_bounds = array<i64: 1, 128, 384>}, {pipeline_mode = #tpu.pipeline_mode<synchronous>, transform_indices = @transform_4, window_bounds = array<i64: 1, 1, 384>}, {pipeline_mode = #tpu.pipeline_mode<synchronous>, transform_indices = @transform_5, window_bounds = array<i64: 1, 1, 384>}, {transform_indices = @transform_6, window_bounds = array<i64: 1, 128, 128>}, {transform_indices = @transform_7, window_bounds = array<i64: 1, 8, 128>}]} {
    %c0_i32 = arith.constant 0 : i32
    %0 = arith.cmpi eq, %arg1, %c0_i32 : i32
    %1 = arith.extui %0 : i1 to i32
    %c0_i32_0 = arith.constant 0 : i32
    %2 = arith.cmpi ne, %1, %c0_i32_0 : i32
    scf.if %2 {
      %cst_208 = arith.constant 0.000000e+00 : f32
      %870 = vector.broadcast %cst_208 : f32 to vector<8x128xf32>
      %c0_209 = arith.constant 0 : index
      %c0_210 = arith.constant 0 : index
      %c0_211 = arith.constant 0 : index
      %871 = vector.load %arg9[%c0_209, %c0_210, %c0_211] : memref<1x8x128xf32, #tpu.memory_space<vmem>>, vector<1x8x128xf32>
      %872 = vector.shape_cast %871 : vector<1x8x128xf32> to vector<8x128xf32>
      %873 = vector.shape_cast %870 : vector<8x128xf32> to vector<1x8x128xf32>
      tpu.vector_store %arg9[%c0_209, %c0_210, %c0_211], %873 {strides = array<i32>} : memref<1x8x128xf32, #tpu.memory_space<vmem>>, vector<1x8x128xf32>,
    } else {
    }
    %c0 = arith.constant 0 : index
    %c0_1 = arith.constant 0 : index
    %3 = vector.load %arg3[%c0, %c0_1] : memref<128x128xf32, #tpu.memory_space<vmem>>, vector<128x128xf32>
    %c0_2 = arith.constant 0 : index
    %c0_3 = arith.constant 0 : index
    %c0_4 = arith.constant 0 : index
    %4 = vector.load %arg4[%c0_2, %c0_3, %c0_4] : memref<1x128x384xf32, #tpu.memory_space<vmem>>, vector<1x128x384xf32>
    %5 = vector.shape_cast %4 : vector<1x128x384xf32> to vector<128x384xf32>
    %cst = arith.constant dense<0.000000e+00> : vector<128x384xf32>
    %6 = tpu.matmul %3, %5, %cst {dimension_numbers = #tpu.dot_dimension_numbers<[1], [0], [0], [1], [0, 0, 1, 1], [], []>} : vector<128x128xf32>, vector<128x384xf32>, vector<128x384xf32> -> vector<128x384xf32>
    %c0_5 = arith.constant 0 : index
    %c0_6 = arith.constant 0 : index
    %c0_7 = arith.constant 0 : index
    %7 = vector.load %arg6[%c0_5, %c0_6, %c0_7] : memref<1x1x384xf32, #tpu.memory_space<vmem>>, vector<1x1x384xf32>
    %8 = vector.shape_cast %7 : vector<1x1x384xf32> to vector<1x384xf32>
    %9 = vector.broadcast %8 : vector<1x384xf32> to vector<128x384xf32>
    %10 = arith.addf %6, %9 : vector<128x384xf32>
    %c0_8 = arith.constant 0 : index
    %c0_9 = arith.constant 0 : index
    %11 = vector.load %arg10[%c0_8, %c0_9] : memref<128x384xf32, #tpu.memory_space<vmem>>, vector<128x384xf32>
    tpu.vector_store %arg10[%c0_8, %c0_9], %10 {strides = array<i32>} : memref<128x384xf32, #tpu.memory_space<vmem>>, vector<128x384xf32>,
    %c0_10 = arith.constant 0 : index
    %c0_11 = arith.constant 0 : index
    %12 = vector.load %arg2[%c0_10, %c0_11] : memref<8x1xi32, #tpu.memory_space<vmem>>, vector<8x1xi32>
    %c0_12 = arith.constant 0 : index
    %c0_13 = arith.constant 0 : index
    %c0_14 = arith.constant 0 : index
    %13 = vector.load %arg5[%c0_12, %c0_13, %c0_14] : memref<1x128x384xf32, #tpu.memory_space<vmem>>, vector<1x128x384xf32>
    %14 = vector.shape_cast %13 : vector<1x128x384xf32> to vector<128x384xf32>
    %c0_15 = arith.constant 0 : index
    %c0_16 = arith.constant 0 : index
    %c0_17 = arith.constant 0 : index
    %15 = vector.load %arg7[%c0_15, %c0_16, %c0_17] : memref<1x1x384xf32, #tpu.memory_space<vmem>>, vector<1x1x384xf32>
    %16 = vector.shape_cast %15 : vector<1x1x384xf32> to vector<1x384xf32>
    %c0_18 = arith.constant 0 : index
    %c0_19 = arith.constant 0 : index
    %c0_20 = arith.constant 0 : index
    %17 = vector.load %arg9[%c0_18, %c0_19, %c0_20] : memref<1x8x128xf32, #tpu.memory_space<vmem>>, vector<1x8x128xf32>
    %18 = vector.shape_cast %17 : vector<1x8x128xf32> to vector<8x128xf32>
    %c15_i32 = arith.constant 15 : i32
    %19 = arith.muli %arg0, %c15_i32 : i32
    %c0_i32_21 = arith.constant 0 : i32
    %20 = arith.addi %c0_i32_21, %19 : i32
    %c16_i32 = arith.constant 16 : i32
    %21 = arith.muli %arg1, %c16_i32 : i32
    %c0_i32_22 = arith.constant 0 : i32
    %22 = arith.addi %21, %c0_i32_22 : i32
    %c2_i32 = arith.constant 2 : i32
    %23 = arith.muli %c2_i32, %22 : i32
    %c15_i32_23 = arith.constant 15 : i32
    %24 = arith.subi %c15_i32_23, %23 : i32
    %25 = arith.muli %arg0, %24 : i32
    %26 = arith.addi %22, %25 : i32
    %c8_i32 = arith.constant 8 : i32
    %27 = arith.muli %20, %c8_i32 : i32
    %28 = tpu.assume_multiple %27, 8 : i32
    %29 = arith.index_cast %28 : i32 to index
    %c0_24 = arith.constant 0 : index
    %30 = vector.load %arg10[%29, %c0_24] : memref<128x384xf32, #tpu.memory_space<vmem>>, vector<8x384xf32>
    %cst_25 = arith.constant dense<0.000000e+00> : vector<8x384xf32>
    %31 = tpu.matmul %18, %14, %cst_25 {dimension_numbers = #tpu.dot_dimension_numbers<[1], [0], [0], [1], [0, 0, 1, 1], [], []>} : vector<8x128xf32>, vector<128x384xf32>, vector<8x384xf32> -> vector<8x384xf32>
    %32 = vector.broadcast %16 : vector<1x384xf32> to vector<8x384xf32>
    %33 = arith.addf %31, %32 : vector<8x384xf32>
    %34 = vector.extract_strided_slice %30 {offsets = [0, 0], sizes = [8, 128], strides = [1, 1]} : vector<8x384xf32> to vector<8x128xf32>
    %35 = vector.extract_strided_slice %33 {offsets = [0, 0], sizes = [8, 128], strides = [1, 1]} : vector<8x384xf32> to vector<8x128xf32>
    %36 = arith.addf %34, %35 : vector<8x128xf32>
    %37 = arith.negf %36 : vector<8x128xf32>
    %38 = math.exp %37 : vector<8x128xf32>
    %cst_26 = arith.constant 1.000000e+00 : f32
    %39 = vector.broadcast %cst_26 : f32 to vector<8x128xf32>
    %40 = arith.addf %39, %38 : vector<8x128xf32>
    %41 = arith.divf %39, %40 : vector<8x128xf32>
    %42 = vector.extract_strided_slice %30 {offsets = [0, 128], sizes = [8, 128], strides = [1, 1]} : vector<8x384xf32> to vector<8x128xf32>
    %43 = vector.extract_strided_slice %33 {offsets = [0, 128], sizes = [8, 128], strides = [1, 1]} : vector<8x384xf32> to vector<8x128xf32>
    %44 = arith.addf %42, %43 : vector<8x128xf32>
    %45 = arith.negf %44 : vector<8x128xf32>
    %46 = math.exp %45 : vector<8x128xf32>
    %cst_27 = arith.constant 1.000000e+00 : f32
    %47 = vector.broadcast %cst_27 : f32 to vector<8x128xf32>
    %48 = arith.addf %47, %46 : vector<8x128xf32>
    %49 = arith.divf %47, %48 : vector<8x128xf32>
    %50 = vector.extract_strided_slice %30 {offsets = [0, 256], sizes = [8, 128], strides = [1, 1]} : vector<8x384xf32> to vector<8x128xf32>
    %51 = vector.extract_strided_slice %33 {offsets = [0, 256], sizes = [8, 128], strides = [1, 1]} : vector<8x384xf32> to vector<8x128xf32>
    %52 = arith.mulf %41, %51 : vector<8x128xf32>
    %53 = arith.addf %50, %52 : vector<8x128xf32>
    %54 = math.tanh %53 : vector<8x128xf32>
    %55 = arith.subf %18, %54 : vector<8x128xf32>
    %56 = arith.mulf %49, %55 : vector<8x128xf32>
    %57 = arith.addf %54, %56 : vector<8x128xf32>
    %58 = vector.broadcast %26 : i32 to vector<8x1xi32>
    %59 = arith.cmpi sgt, %12, %58 : vector<8x1xi32>
    %60 = arith.extui %59 : vector<8x1xi1> to vector<8x1xi32>
    %61 = arith.sitofp %60 : vector<8x1xi32> to vector<8x1xf32>
    %62 = arith.subf %57, %18 : vector<8x128xf32>
    %63 = vector.broadcast %61 : vector<8x1xf32> to vector<8x128xf32>
    %64 = arith.mulf %63, %62 : vector<8x128xf32>
    %65 = arith.addf %18, %64 : vector<8x128xf32>
    %66 = vector.broadcast %61 : vector<8x1xf32> to vector<8x128xf32>
    %67 = arith.mulf %66, %57 : vector<8x128xf32>
    %c0_28 = arith.constant 0 : index
    %68 = arith.index_cast %28 : i32 to index
    %c0_29 = arith.constant 0 : index
    %69 = vector.load %arg8[%c0_28, %68, %c0_29] : memref<1x128x128xf32, #tpu.memory_space<vmem>>, vector<1x8x128xf32>
    %70 = vector.shape_cast %69 : vector<1x8x128xf32> to vector<8x128xf32>
    %71 = vector.shape_cast %67 : vector<8x128xf32> to vector<1x8x128xf32>
    tpu.vector_store %arg8[%c0_28, %68, %c0_29], %71 {strides = array<i32>} : memref<1x128x128xf32, #tpu.memory_space<vmem>>, vector<1x8x128xf32>,
    %c13_i32 = arith.constant 13 : i32
    %72 = arith.muli %arg0, %c13_i32 : i32
    %c1_i32 = arith.constant 1 : i32
    %73 = arith.addi %c1_i32, %72 : i32
    %c16_i32_30 = arith.constant 16 : i32
    %74 = arith.muli %arg1, %c16_i32_30 : i32
    %c1_i32_31 = arith.constant 1 : i32
    %75 = arith.addi %74, %c1_i32_31 : i32
    %c2_i32_32 = arith.constant 2 : i32
    %76 = arith.muli %c2_i32_32, %75 : i32
    %c15_i32_33 = arith.constant 15 : i32
    %77 = arith.subi %c15_i32_33, %76 : i32
    %78 = arith.muli %arg0, %77 : i32
    %79 = arith.addi %75, %78 : i32
    %c8_i32_34 = arith.constant 8 : i32
    %80 = arith.muli %73, %c8_i32_34 : i32
    %81 = tpu.assume_multiple %80, 8 : i32
    %82 = arith.index_cast %81 : i32 to index
    %c0_35 = arith.constant 0 : index
    %83 = vector.load %arg10[%82, %c0_35] : memref<128x384xf32, #tpu.memory_space<vmem>>, vector<8x384xf32>
    %cst_36 = arith.constant dense<0.000000e+00> : vector<8x384xf32>
    %84 = tpu.matmul %65, %14, %cst_36 {dimension_numbers = #tpu.dot_dimension_numbers<[1], [0], [0], [1], [0, 0, 1, 1], [], []>} : vector<8x128xf32>, vector<128x384xf32>, vector<8x384xf32> -> vector<8x384xf32>
    %85 = vector.broadcast %16 : vector<1x384xf32> to vector<8x384xf32>
    %86 = arith.addf %84, %85 : vector<8x384xf32>
    %87 = vector.extract_strided_slice %83 {offsets = [0, 0], sizes = [8, 128], strides = [1, 1]} : vector<8x384xf32> to vector<8x128xf32>
    %88 = vector.extract_strided_slice %86 {offsets = [0, 0], sizes = [8, 128], strides = [1, 1]} : vector<8x384xf32> to vector<8x128xf32>
    %89 = arith.addf %87, %88 : vector<8x128xf32>
    %90 = arith.negf %89 : vector<8x128xf32>
    %91 = math.exp %90 : vector<8x128xf32>
    %cst_37 = arith.constant 1.000000e+00 : f32
    %92 = vector.broadcast %cst_37 : f32 to vector<8x128xf32>
    %93 = arith.addf %92, %91 : vector<8x128xf32>
    %94 = arith.divf %92, %93 : vector<8x128xf32>
    %95 = vector.extract_strided_slice %83 {offsets = [0, 128], sizes = [8, 128], strides = [1, 1]} : vector<8x384xf32> to vector<8x128xf32>
    %96 = vector.extract_strided_slice %86 {offsets = [0, 128], sizes = [8, 128], strides = [1, 1]} : vector<8x384xf32> to vector<8x128xf32>
    %97 = arith.addf %95, %96 : vector<8x128xf32>
    %98 = arith.negf %97 : vector<8x128xf32>
    %99 = math.exp %98 : vector<8x128xf32>
    %cst_38 = arith.constant 1.000000e+00 : f32
    %100 = vector.broadcast %cst_38 : f32 to vector<8x128xf32>
    %101 = arith.addf %100, %99 : vector<8x128xf32>
    %102 = arith.divf %100, %101 : vector<8x128xf32>
    %103 = vector.extract_strided_slice %83 {offsets = [0, 256], sizes = [8, 128], strides = [1, 1]} : vector<8x384xf32> to vector<8x128xf32>
    %104 = vector.extract_strided_slice %86 {offsets = [0, 256], sizes = [8, 128], strides = [1, 1]} : vector<8x384xf32> to vector<8x128xf32>
    %105 = arith.mulf %94, %104 : vector<8x128xf32>
    %106 = arith.addf %103, %105 : vector<8x128xf32>
    %107 = math.tanh %106 : vector<8x128xf32>
    %108 = arith.subf %65, %107 : vector<8x128xf32>
    %109 = arith.mulf %102, %108 : vector<8x128xf32>
    %110 = arith.addf %107, %109 : vector<8x128xf32>
    %111 = vector.broadcast %79 : i32 to vector<8x1xi32>
    %112 = arith.cmpi sgt, %12, %111 : vector<8x1xi32>
    %113 = arith.extui %112 : vector<8x1xi1> to vector<8x1xi32>
    %114 = arith.sitofp %113 : vector<8x1xi32> to vector<8x1xf32>
    %115 = arith.subf %110, %65 : vector<8x128xf32>
    %116 = vector.broadcast %114 : vector<8x1xf32> to vector<8x128xf32>
    %117 = arith.mulf %116, %115 : vector<8x128xf32>
    %118 = arith.addf %65, %117 : vector<8x128xf32>
    %119 = vector.broadcast %114 : vector<8x1xf32> to vector<8x128xf32>
    %120 = arith.mulf %119, %110 : vector<8x128xf32>
    %c0_39 = arith.constant 0 : index
    %121 = arith.index_cast %81 : i32 to index
    %c0_40 = arith.constant 0 : index
    %122 = vector.load %arg8[%c0_39, %121, %c0_40] : memref<1x128x128xf32, #tpu.memory_space<vmem>>, vector<1x8x128xf32>
    %123 = vector.shape_cast %122 : vector<1x8x128xf32> to vector<8x128xf32>
    %124 = vector.shape_cast %120 : vector<8x128xf32> to vector<1x8x128xf32>
    tpu.vector_store %arg8[%c0_39, %121, %c0_40], %124 {strides = array<i32>} : memref<1x128x128xf32, #tpu.memory_space<vmem>>, vector<1x8x128xf32>,
    %c11_i32 = arith.constant 11 : i32
    %125 = arith.muli %arg0, %c11_i32 : i32
    %c2_i32_41 = arith.constant 2 : i32
    %126 = arith.addi %c2_i32_41, %125 : i32
    %c16_i32_42 = arith.constant 16 : i32
    %127 = arith.muli %arg1, %c16_i32_42 : i32
    %c2_i32_43 = arith.constant 2 : i32
    %128 = arith.addi %127, %c2_i32_43 : i32
    %c2_i32_44 = arith.constant 2 : i32
    %129 = arith.muli %c2_i32_44, %128 : i32
    %c15_i32_45 = arith.constant 15 : i32
    %130 = arith.subi %c15_i32_45, %129 : i32
    %131 = arith.muli %arg0, %130 : i32
    %132 = arith.addi %128, %131 : i32
    %c8_i32_46 = arith.constant 8 : i32
    %133 = arith.muli %126, %c8_i32_46 : i32
    %134 = tpu.assume_multiple %133, 8 : i32
    %135 = arith.index_cast %134 : i32 to index
    %c0_47 = arith.constant 0 : index
    %136 = vector.load %arg10[%135, %c0_47] : memref<128x384xf32, #tpu.memory_space<vmem>>, vector<8x384xf32>
    %cst_48 = arith.constant dense<0.000000e+00> : vector<8x384xf32>
    %137 = tpu.matmul %118, %14, %cst_48 {dimension_numbers = #tpu.dot_dimension_numbers<[1], [0], [0], [1], [0, 0, 1, 1], [], []>} : vector<8x128xf32>, vector<128x384xf32>, vector<8x384xf32> -> vector<8x384xf32>
    %138 = vector.broadcast %16 : vector<1x384xf32> to vector<8x384xf32>
    %139 = arith.addf %137, %138 : vector<8x384xf32>
    %140 = vector.extract_strided_slice %136 {offsets = [0, 0], sizes = [8, 128], strides = [1, 1]} : vector<8x384xf32> to vector<8x128xf32>
    %141 = vector.extract_strided_slice %139 {offsets = [0, 0], sizes = [8, 128], strides = [1, 1]} : vector<8x384xf32> to vector<8x128xf32>
    %142 = arith.addf %140, %141 : vector<8x128xf32>
    %143 = arith.negf %142 : vector<8x128xf32>
    %144 = math.exp %143 : vector<8x128xf32>
    %cst_49 = arith.constant 1.000000e+00 : f32
    %145 = vector.broadcast %cst_49 : f32 to vector<8x128xf32>
    %146 = arith.addf %145, %144 : vector<8x128xf32>
    %147 = arith.divf %145, %146 : vector<8x128xf32>
    %148 = vector.extract_strided_slice %136 {offsets = [0, 128], sizes = [8, 128], strides = [1, 1]} : vector<8x384xf32> to vector<8x128xf32>
    %149 = vector.extract_strided_slice %139 {offsets = [0, 128], sizes = [8, 128], strides = [1, 1]} : vector<8x384xf32> to vector<8x128xf32>
    %150 = arith.addf %148, %149 : vector<8x128xf32>
    %151 = arith.negf %150 : vector<8x128xf32>
    %152 = math.exp %151 : vector<8x128xf32>
    %cst_50 = arith.constant 1.000000e+00 : f32
    %153 = vector.broadcast %cst_50 : f32 to vector<8x128xf32>
    %154 = arith.addf %153, %152 : vector<8x128xf32>
    %155 = arith.divf %153, %154 : vector<8x128xf32>
    %156 = vector.extract_strided_slice %136 {offsets = [0, 256], sizes = [8, 128], strides = [1, 1]} : vector<8x384xf32> to vector<8x128xf32>
    %157 = vector.extract_strided_slice %139 {offsets = [0, 256], sizes = [8, 128], strides = [1, 1]} : vector<8x384xf32> to vector<8x128xf32>
    %158 = arith.mulf %147, %157 : vector<8x128xf32>
    %159 = arith.addf %156, %158 : vector<8x128xf32>
    %160 = math.tanh %159 : vector<8x128xf32>
    %161 = arith.subf %118, %160 : vector<8x128xf32>
    %162 = arith.mulf %155, %161 : vector<8x128xf32>
    %163 = arith.addf %160, %162 : vector<8x128xf32>
    %164 = vector.broadcast %132 : i32 to vector<8x1xi32>
    %165 = arith.cmpi sgt, %12, %164 : vector<8x1xi32>
    %166 = arith.extui %165 : vector<8x1xi1> to vector<8x1xi32>
    %167 = arith.sitofp %166 : vector<8x1xi32> to vector<8x1xf32>
    %168 = arith.subf %163, %118 : vector<8x128xf32>
    %169 = vector.broadcast %167 : vector<8x1xf32> to vector<8x128xf32>
    %170 = arith.mulf %169, %168 : vector<8x128xf32>
    %171 = arith.addf %118, %170 : vector<8x128xf32>
    %172 = vector.broadcast %167 : vector<8x1xf32> to vector<8x128xf32>
    %173 = arith.mulf %172, %163 : vector<8x128xf32>
    %c0_51 = arith.constant 0 : index
    %174 = arith.index_cast %134 : i32 to index
    %c0_52 = arith.constant 0 : index
    %175 = vector.load %arg8[%c0_51, %174, %c0_52] : memref<1x128x128xf32, #tpu.memory_space<vmem>>, vector<1x8x128xf32>
    %176 = vector.shape_cast %175 : vector<1x8x128xf32> to vector<8x128xf32>
    %177 = vector.shape_cast %173 : vector<8x128xf32> to vector<1x8x128xf32>
    tpu.vector_store %arg8[%c0_51, %174, %c0_52], %177 {strides = array<i32>} : memref<1x128x128xf32, #tpu.memory_space<vmem>>, vector<1x8x128xf32>,
    %c9_i32 = arith.constant 9 : i32
    %178 = arith.muli %arg0, %c9_i32 : i32
    %c3_i32 = arith.constant 3 : i32
    %179 = arith.addi %c3_i32, %178 : i32
    %c16_i32_53 = arith.constant 16 : i32
    %180 = arith.muli %arg1, %c16_i32_53 : i32
    %c3_i32_54 = arith.constant 3 : i32
    %181 = arith.addi %180, %c3_i32_54 : i32
    %c2_i32_55 = arith.constant 2 : i32
    %182 = arith.muli %c2_i32_55, %181 : i32
    %c15_i32_56 = arith.constant 15 : i32
    %183 = arith.subi %c15_i32_56, %182 : i32
    %184 = arith.muli %arg0, %183 : i32
    %185 = arith.addi %181, %184 : i32
    %c8_i32_57 = arith.constant 8 : i32
    %186 = arith.muli %179, %c8_i32_57 : i32
    %187 = tpu.assume_multiple %186, 8 : i32
    %188 = arith.index_cast %187 : i32 to index
    %c0_58 = arith.constant 0 : index
    %189 = vector.load %arg10[%188, %c0_58] : memref<128x384xf32, #tpu.memory_space<vmem>>, vector<8x384xf32>
    %cst_59 = arith.constant dense<0.000000e+00> : vector<8x384xf32>
    %190 = tpu.matmul %171, %14, %cst_59 {dimension_numbers = #tpu.dot_dimension_numbers<[1], [0], [0], [1], [0, 0, 1, 1], [], []>} : vector<8x128xf32>, vector<128x384xf32>, vector<8x384xf32> -> vector<8x384xf32>
    %191 = vector.broadcast %16 : vector<1x384xf32> to vector<8x384xf32>
    %192 = arith.addf %190, %191 : vector<8x384xf32>
    %193 = vector.extract_strided_slice %189 {offsets = [0, 0], sizes = [8, 128], strides = [1, 1]} : vector<8x384xf32> to vector<8x128xf32>
    %194 = vector.extract_strided_slice %192 {offsets = [0, 0], sizes = [8, 128], strides = [1, 1]} : vector<8x384xf32> to vector<8x128xf32>
    %195 = arith.addf %193, %194 : vector<8x128xf32>
    %196 = arith.negf %195 : vector<8x128xf32>
    %197 = math.exp %196 : vector<8x128xf32>
    %cst_60 = arith.constant 1.000000e+00 : f32
    %198 = vector.broadcast %cst_60 : f32 to vector<8x128xf32>
    %199 = arith.addf %198, %197 : vector<8x128xf32>
    %200 = arith.divf %198, %199 : vector<8x128xf32>
    %201 = vector.extract_strided_slice %189 {offsets = [0, 128], sizes = [8, 128], strides = [1, 1]} : vector<8x384xf32> to vector<8x128xf32>
    %202 = vector.extract_strided_slice %192 {offsets = [0, 128], sizes = [8, 128], strides = [1, 1]} : vector<8x384xf32> to vector<8x128xf32>
    %203 = arith.addf %201, %202 : vector<8x128xf32>
    %204 = arith.negf %203 : vector<8x128xf32>
    %205 = math.exp %204 : vector<8x128xf32>
    %cst_61 = arith.constant 1.000000e+00 : f32
    %206 = vector.broadcast %cst_61 : f32 to vector<8x128xf32>
    %207 = arith.addf %206, %205 : vector<8x128xf32>
    %208 = arith.divf %206, %207 : vector<8x128xf32>
    %209 = vector.extract_strided_slice %189 {offsets = [0, 256], sizes = [8, 128], strides = [1, 1]} : vector<8x384xf32> to vector<8x128xf32>
    %210 = vector.extract_strided_slice %192 {offsets = [0, 256], sizes = [8, 128], strides = [1, 1]} : vector<8x384xf32> to vector<8x128xf32>
    %211 = arith.mulf %200, %210 : vector<8x128xf32>
    %212 = arith.addf %209, %211 : vector<8x128xf32>
    %213 = math.tanh %212 : vector<8x128xf32>
    %214 = arith.subf %171, %213 : vector<8x128xf32>
    %215 = arith.mulf %208, %214 : vector<8x128xf32>
    %216 = arith.addf %213, %215 : vector<8x128xf32>
    %217 = vector.broadcast %185 : i32 to vector<8x1xi32>
    %218 = arith.cmpi sgt, %12, %217 : vector<8x1xi32>
    %219 = arith.extui %218 : vector<8x1xi1> to vector<8x1xi32>
    %220 = arith.sitofp %219 : vector<8x1xi32> to vector<8x1xf32>
    %221 = arith.subf %216, %171 : vector<8x128xf32>
    %222 = vector.broadcast %220 : vector<8x1xf32> to vector<8x128xf32>
    %223 = arith.mulf %222, %221 : vector<8x128xf32>
    %224 = arith.addf %171, %223 : vector<8x128xf32>
    %225 = vector.broadcast %220 : vector<8x1xf32> to vector<8x128xf32>
    %226 = arith.mulf %225, %216 : vector<8x128xf32>
    %c0_62 = arith.constant 0 : index
    %227 = arith.index_cast %187 : i32 to index
    %c0_63 = arith.constant 0 : index
    %228 = vector.load %arg8[%c0_62, %227, %c0_63] : memref<1x128x128xf32, #tpu.memory_space<vmem>>, vector<1x8x128xf32>
    %229 = vector.shape_cast %228 : vector<1x8x128xf32> to vector<8x128xf32>
    %230 = vector.shape_cast %226 : vector<8x128xf32> to vector<1x8x128xf32>
    tpu.vector_store %arg8[%c0_62, %227, %c0_63], %230 {strides = array<i32>} : memref<1x128x128xf32, #tpu.memory_space<vmem>>, vector<1x8x128xf32>,
    %c7_i32 = arith.constant 7 : i32
    %231 = arith.muli %arg0, %c7_i32 : i32
    %c4_i32 = arith.constant 4 : i32
    %232 = arith.addi %c4_i32, %231 : i32
    %c16_i32_64 = arith.constant 16 : i32
    %233 = arith.muli %arg1, %c16_i32_64 : i32
    %c4_i32_65 = arith.constant 4 : i32
    %234 = arith.addi %233, %c4_i32_65 : i32
    %c2_i32_66 = arith.constant 2 : i32
    %235 = arith.muli %c2_i32_66, %234 : i32
    %c15_i32_67 = arith.constant 15 : i32
    %236 = arith.subi %c15_i32_67, %235 : i32
    %237 = arith.muli %arg0, %236 : i32
    %238 = arith.addi %234, %237 : i32
    %c8_i32_68 = arith.constant 8 : i32
    %239 = arith.muli %232, %c8_i32_68 : i32
    %240 = tpu.assume_multiple %239, 8 : i32
    %241 = arith.index_cast %240 : i32 to index
    %c0_69 = arith.constant 0 : index
    %242 = vector.load %arg10[%241, %c0_69] : memref<128x384xf32, #tpu.memory_space<vmem>>, vector<8x384xf32>
    %cst_70 = arith.constant dense<0.000000e+00> : vector<8x384xf32>
    %243 = tpu.matmul %224, %14, %cst_70 {dimension_numbers = #tpu.dot_dimension_numbers<[1], [0], [0], [1], [0, 0, 1, 1], [], []>} : vector<8x128xf32>, vector<128x384xf32>, vector<8x384xf32> -> vector<8x384xf32>
    %244 = vector.broadcast %16 : vector<1x384xf32> to vector<8x384xf32>
    %245 = arith.addf %243, %244 : vector<8x384xf32>
    %246 = vector.extract_strided_slice %242 {offsets = [0, 0], sizes = [8, 128], strides = [1, 1]} : vector<8x384xf32> to vector<8x128xf32>
    %247 = vector.extract_strided_slice %245 {offsets = [0, 0], sizes = [8, 128], strides = [1, 1]} : vector<8x384xf32> to vector<8x128xf32>
    %248 = arith.addf %246, %247 : vector<8x128xf32>
    %249 = arith.negf %248 : vector<8x128xf32>
    %250 = math.exp %249 : vector<8x128xf32>
    %cst_71 = arith.constant 1.000000e+00 : f32
    %251 = vector.broadcast %cst_71 : f32 to vector<8x128xf32>
    %252 = arith.addf %251, %250 : vector<8x128xf32>
    %253 = arith.divf %251, %252 : vector<8x128xf32>
    %254 = vector.extract_strided_slice %242 {offsets = [0, 128], sizes = [8, 128], strides = [1, 1]} : vector<8x384xf32> to vector<8x128xf32>
    %255 = vector.extract_strided_slice %245 {offsets = [0, 128], sizes = [8, 128], strides = [1, 1]} : vector<8x384xf32> to vector<8x128xf32>
    %256 = arith.addf %254, %255 : vector<8x128xf32>
    %257 = arith.negf %256 : vector<8x128xf32>
    %258 = math.exp %257 : vector<8x128xf32>
    %cst_72 = arith.constant 1.000000e+00 : f32
    %259 = vector.broadcast %cst_72 : f32 to vector<8x128xf32>
    %260 = arith.addf %259, %258 : vector<8x128xf32>
    %261 = arith.divf %259, %260 : vector<8x128xf32>
    %262 = vector.extract_strided_slice %242 {offsets = [0, 256], sizes = [8, 128], strides = [1, 1]} : vector<8x384xf32> to vector<8x128xf32>
    %263 = vector.extract_strided_slice %245 {offsets = [0, 256], sizes = [8, 128], strides = [1, 1]} : vector<8x384xf32> to vector<8x128xf32>
    %264 = arith.mulf %253, %263 : vector<8x128xf32>
    %265 = arith.addf %262, %264 : vector<8x128xf32>
    %266 = math.tanh %265 : vector<8x128xf32>
    %267 = arith.subf %224, %266 : vector<8x128xf32>
    %268 = arith.mulf %261, %267 : vector<8x128xf32>
    %269 = arith.addf %266, %268 : vector<8x128xf32>
    %270 = vector.broadcast %238 : i32 to vector<8x1xi32>
    %271 = arith.cmpi sgt, %12, %270 : vector<8x1xi32>
    %272 = arith.extui %271 : vector<8x1xi1> to vector<8x1xi32>
    %273 = arith.sitofp %272 : vector<8x1xi32> to vector<8x1xf32>
    %274 = arith.subf %269, %224 : vector<8x128xf32>
    %275 = vector.broadcast %273 : vector<8x1xf32> to vector<8x128xf32>
    %276 = arith.mulf %275, %274 : vector<8x128xf32>
    %277 = arith.addf %224, %276 : vector<8x128xf32>
    %278 = vector.broadcast %273 : vector<8x1xf32> to vector<8x128xf32>
    %279 = arith.mulf %278, %269 : vector<8x128xf32>
    %c0_73 = arith.constant 0 : index
    %280 = arith.index_cast %240 : i32 to index
    %c0_74 = arith.constant 0 : index
    %281 = vector.load %arg8[%c0_73, %280, %c0_74] : memref<1x128x128xf32, #tpu.memory_space<vmem>>, vector<1x8x128xf32>
    %282 = vector.shape_cast %281 : vector<1x8x128xf32> to vector<8x128xf32>
    %283 = vector.shape_cast %279 : vector<8x128xf32> to vector<1x8x128xf32>
    tpu.vector_store %arg8[%c0_73, %280, %c0_74], %283 {strides = array<i32>} : memref<1x128x128xf32, #tpu.memory_space<vmem>>, vector<1x8x128xf32>,
    %c5_i32 = arith.constant 5 : i32
    %284 = arith.muli %arg0, %c5_i32 : i32
    %c5_i32_75 = arith.constant 5 : i32
    %285 = arith.addi %c5_i32_75, %284 : i32
    %c16_i32_76 = arith.constant 16 : i32
    %286 = arith.muli %arg1, %c16_i32_76 : i32
    %c5_i32_77 = arith.constant 5 : i32
    %287 = arith.addi %286, %c5_i32_77 : i32
    %c2_i32_78 = arith.constant 2 : i32
    %288 = arith.muli %c2_i32_78, %287 : i32
    %c15_i32_79 = arith.constant 15 : i32
    %289 = arith.subi %c15_i32_79, %288 : i32
    %290 = arith.muli %arg0, %289 : i32
    %291 = arith.addi %287, %290 : i32
    %c8_i32_80 = arith.constant 8 : i32
    %292 = arith.muli %285, %c8_i32_80 : i32
    %293 = tpu.assume_multiple %292, 8 : i32
    %294 = arith.index_cast %293 : i32 to index
    %c0_81 = arith.constant 0 : index
    %295 = vector.load %arg10[%294, %c0_81] : memref<128x384xf32, #tpu.memory_space<vmem>>, vector<8x384xf32>
    %cst_82 = arith.constant dense<0.000000e+00> : vector<8x384xf32>
    %296 = tpu.matmul %277, %14, %cst_82 {dimension_numbers = #tpu.dot_dimension_numbers<[1], [0], [0], [1], [0, 0, 1, 1], [], []>} : vector<8x128xf32>, vector<128x384xf32>, vector<8x384xf32> -> vector<8x384xf32>
    %297 = vector.broadcast %16 : vector<1x384xf32> to vector<8x384xf32>
    %298 = arith.addf %296, %297 : vector<8x384xf32>
    %299 = vector.extract_strided_slice %295 {offsets = [0, 0], sizes = [8, 128], strides = [1, 1]} : vector<8x384xf32> to vector<8x128xf32>
    %300 = vector.extract_strided_slice %298 {offsets = [0, 0], sizes = [8, 128], strides = [1, 1]} : vector<8x384xf32> to vector<8x128xf32>
    %301 = arith.addf %299, %300 : vector<8x128xf32>
    %302 = arith.negf %301 : vector<8x128xf32>
    %303 = math.exp %302 : vector<8x128xf32>
    %cst_83 = arith.constant 1.000000e+00 : f32
    %304 = vector.broadcast %cst_83 : f32 to vector<8x128xf32>
    %305 = arith.addf %304, %303 : vector<8x128xf32>
    %306 = arith.divf %304, %305 : vector<8x128xf32>
    %307 = vector.extract_strided_slice %295 {offsets = [0, 128], sizes = [8, 128], strides = [1, 1]} : vector<8x384xf32> to vector<8x128xf32>
    %308 = vector.extract_strided_slice %298 {offsets = [0, 128], sizes = [8, 128], strides = [1, 1]} : vector<8x384xf32> to vector<8x128xf32>
    %309 = arith.addf %307, %308 : vector<8x128xf32>
    %310 = arith.negf %309 : vector<8x128xf32>
    %311 = math.exp %310 : vector<8x128xf32>
    %cst_84 = arith.constant 1.000000e+00 : f32
    %312 = vector.broadcast %cst_84 : f32 to vector<8x128xf32>
    %313 = arith.addf %312, %311 : vector<8x128xf32>
    %314 = arith.divf %312, %313 : vector<8x128xf32>
    %315 = vector.extract_strided_slice %295 {offsets = [0, 256], sizes = [8, 128], strides = [1, 1]} : vector<8x384xf32> to vector<8x128xf32>
    %316 = vector.extract_strided_slice %298 {offsets = [0, 256], sizes = [8, 128], strides = [1, 1]} : vector<8x384xf32> to vector<8x128xf32>
    %317 = arith.mulf %306, %316 : vector<8x128xf32>
    %318 = arith.addf %315, %317 : vector<8x128xf32>
    %319 = math.tanh %318 : vector<8x128xf32>
    %320 = arith.subf %277, %319 : vector<8x128xf32>
    %321 = arith.mulf %314, %320 : vector<8x128xf32>
    %322 = arith.addf %319, %321 : vector<8x128xf32>
    %323 = vector.broadcast %291 : i32 to vector<8x1xi32>
    %324 = arith.cmpi sgt, %12, %323 : vector<8x1xi32>
    %325 = arith.extui %324 : vector<8x1xi1> to vector<8x1xi32>
    %326 = arith.sitofp %325 : vector<8x1xi32> to vector<8x1xf32>
    %327 = arith.subf %322, %277 : vector<8x128xf32>
    %328 = vector.broadcast %326 : vector<8x1xf32> to vector<8x128xf32>
    %329 = arith.mulf %328, %327 : vector<8x128xf32>
    %330 = arith.addf %277, %329 : vector<8x128xf32>
    %331 = vector.broadcast %326 : vector<8x1xf32> to vector<8x128xf32>
    %332 = arith.mulf %331, %322 : vector<8x128xf32>
    %c0_85 = arith.constant 0 : index
    %333 = arith.index_cast %293 : i32 to index
    %c0_86 = arith.constant 0 : index
    %334 = vector.load %arg8[%c0_85, %333, %c0_86] : memref<1x128x128xf32, #tpu.memory_space<vmem>>, vector<1x8x128xf32>
    %335 = vector.shape_cast %334 : vector<1x8x128xf32> to vector<8x128xf32>
    %336 = vector.shape_cast %332 : vector<8x128xf32> to vector<1x8x128xf32>
    tpu.vector_store %arg8[%c0_85, %333, %c0_86], %336 {strides = array<i32>} : memref<1x128x128xf32, #tpu.memory_space<vmem>>, vector<1x8x128xf32>,
    %c3_i32_87 = arith.constant 3 : i32
    %337 = arith.muli %arg0, %c3_i32_87 : i32
    %c6_i32 = arith.constant 6 : i32
    %338 = arith.addi %c6_i32, %337 : i32
    %c16_i32_88 = arith.constant 16 : i32
    %339 = arith.muli %arg1, %c16_i32_88 : i32
    %c6_i32_89 = arith.constant 6 : i32
    %340 = arith.addi %339, %c6_i32_89 : i32
    %c2_i32_90 = arith.constant 2 : i32
    %341 = arith.muli %c2_i32_90, %340 : i32
    %c15_i32_91 = arith.constant 15 : i32
    %342 = arith.subi %c15_i32_91, %341 : i32
    %343 = arith.muli %arg0, %342 : i32
    %344 = arith.addi %340, %343 : i32
    %c8_i32_92 = arith.constant 8 : i32
    %345 = arith.muli %338, %c8_i32_92 : i32
    %346 = tpu.assume_multiple %345, 8 : i32
    %347 = arith.index_cast %346 : i32 to index
    %c0_93 = arith.constant 0 : index
    %348 = vector.load %arg10[%347, %c0_93] : memref<128x384xf32, #tpu.memory_space<vmem>>, vector<8x384xf32>
    %cst_94 = arith.constant dense<0.000000e+00> : vector<8x384xf32>
    %349 = tpu.matmul %330, %14, %cst_94 {dimension_numbers = #tpu.dot_dimension_numbers<[1], [0], [0], [1], [0, 0, 1, 1], [], []>} : vector<8x128xf32>, vector<128x384xf32>, vector<8x384xf32> -> vector<8x384xf32>
    %350 = vector.broadcast %16 : vector<1x384xf32> to vector<8x384xf32>
    %351 = arith.addf %349, %350 : vector<8x384xf32>
    %352 = vector.extract_strided_slice %348 {offsets = [0, 0], sizes = [8, 128], strides = [1, 1]} : vector<8x384xf32> to vector<8x128xf32>
    %353 = vector.extract_strided_slice %351 {offsets = [0, 0], sizes = [8, 128], strides = [1, 1]} : vector<8x384xf32> to vector<8x128xf32>
    %354 = arith.addf %352, %353 : vector<8x128xf32>
    %355 = arith.negf %354 : vector<8x128xf32>
    %356 = math.exp %355 : vector<8x128xf32>
    %cst_95 = arith.constant 1.000000e+00 : f32
    %357 = vector.broadcast %cst_95 : f32 to vector<8x128xf32>
    %358 = arith.addf %357, %356 : vector<8x128xf32>
    %359 = arith.divf %357, %358 : vector<8x128xf32>
    %360 = vector.extract_strided_slice %348 {offsets = [0, 128], sizes = [8, 128], strides = [1, 1]} : vector<8x384xf32> to vector<8x128xf32>
    %361 = vector.extract_strided_slice %351 {offsets = [0, 128], sizes = [8, 128], strides = [1, 1]} : vector<8x384xf32> to vector<8x128xf32>
    %362 = arith.addf %360, %361 : vector<8x128xf32>
    %363 = arith.negf %362 : vector<8x128xf32>
    %364 = math.exp %363 : vector<8x128xf32>
    %cst_96 = arith.constant 1.000000e+00 : f32
    %365 = vector.broadcast %cst_96 : f32 to vector<8x128xf32>
    %366 = arith.addf %365, %364 : vector<8x128xf32>
    %367 = arith.divf %365, %366 : vector<8x128xf32>
    %368 = vector.extract_strided_slice %348 {offsets = [0, 256], sizes = [8, 128], strides = [1, 1]} : vector<8x384xf32> to vector<8x128xf32>
    %369 = vector.extract_strided_slice %351 {offsets = [0, 256], sizes = [8, 128], strides = [1, 1]} : vector<8x384xf32> to vector<8x128xf32>
    %370 = arith.mulf %359, %369 : vector<8x128xf32>
    %371 = arith.addf %368, %370 : vector<8x128xf32>
    %372 = math.tanh %371 : vector<8x128xf32>
    %373 = arith.subf %330, %372 : vector<8x128xf32>
    %374 = arith.mulf %367, %373 : vector<8x128xf32>
    %375 = arith.addf %372, %374 : vector<8x128xf32>
    %376 = vector.broadcast %344 : i32 to vector<8x1xi32>
    %377 = arith.cmpi sgt, %12, %376 : vector<8x1xi32>
    %378 = arith.extui %377 : vector<8x1xi1> to vector<8x1xi32>
    %379 = arith.sitofp %378 : vector<8x1xi32> to vector<8x1xf32>
    %380 = arith.subf %375, %330 : vector<8x128xf32>
    %381 = vector.broadcast %379 : vector<8x1xf32> to vector<8x128xf32>
    %382 = arith.mulf %381, %380 : vector<8x128xf32>
    %383 = arith.addf %330, %382 : vector<8x128xf32>
    %384 = vector.broadcast %379 : vector<8x1xf32> to vector<8x128xf32>
    %385 = arith.mulf %384, %375 : vector<8x128xf32>
    %c0_97 = arith.constant 0 : index
    %386 = arith.index_cast %346 : i32 to index
    %c0_98 = arith.constant 0 : index
    %387 = vector.load %arg8[%c0_97, %386, %c0_98] : memref<1x128x128xf32, #tpu.memory_space<vmem>>, vector<1x8x128xf32>
    %388 = vector.shape_cast %387 : vector<1x8x128xf32> to vector<8x128xf32>
    %389 = vector.shape_cast %385 : vector<8x128xf32> to vector<1x8x128xf32>
    tpu.vector_store %arg8[%c0_97, %386, %c0_98], %389 {strides = array<i32>} : memref<1x128x128xf32, #tpu.memory_space<vmem>>, vector<1x8x128xf32>,
    %c1_i32_99 = arith.constant 1 : i32
    %390 = arith.muli %arg0, %c1_i32_99 : i32
    %c7_i32_100 = arith.constant 7 : i32
    %391 = arith.addi %c7_i32_100, %390 : i32
    %c16_i32_101 = arith.constant 16 : i32
    %392 = arith.muli %arg1, %c16_i32_101 : i32
    %c7_i32_102 = arith.constant 7 : i32
    %393 = arith.addi %392, %c7_i32_102 : i32
    %c2_i32_103 = arith.constant 2 : i32
    %394 = arith.muli %c2_i32_103, %393 : i32
    %c15_i32_104 = arith.constant 15 : i32
    %395 = arith.subi %c15_i32_104, %394 : i32
    %396 = arith.muli %arg0, %395 : i32
    %397 = arith.addi %393, %396 : i32
    %c8_i32_105 = arith.constant 8 : i32
    %398 = arith.muli %391, %c8_i32_105 : i32
    %399 = tpu.assume_multiple %398, 8 : i32
    %400 = arith.index_cast %399 : i32 to index
    %c0_106 = arith.constant 0 : index
    %401 = vector.load %arg10[%400, %c0_106] : memref<128x384xf32, #tpu.memory_space<vmem>>, vector<8x384xf32>
    %cst_107 = arith.constant dense<0.000000e+00> : vector<8x384xf32>
    %402 = tpu.matmul %383, %14, %cst_107 {dimension_numbers = #tpu.dot_dimension_numbers<[1], [0], [0], [1], [0, 0, 1, 1], [], []>} : vector<8x128xf32>, vector<128x384xf32>, vector<8x384xf32> -> vector<8x384xf32>
    %403 = vector.broadcast %16 : vector<1x384xf32> to vector<8x384xf32>
    %404 = arith.addf %402, %403 : vector<8x384xf32>
    %405 = vector.extract_strided_slice %401 {offsets = [0, 0], sizes = [8, 128], strides = [1, 1]} : vector<8x384xf32> to vector<8x128xf32>
    %406 = vector.extract_strided_slice %404 {offsets = [0, 0], sizes = [8, 128], strides = [1, 1]} : vector<8x384xf32> to vector<8x128xf32>
    %407 = arith.addf %405, %406 : vector<8x128xf32>
    %408 = arith.negf %407 : vector<8x128xf32>
    %409 = math.exp %408 : vector<8x128xf32>
    %cst_108 = arith.constant 1.000000e+00 : f32
    %410 = vector.broadcast %cst_108 : f32 to vector<8x128xf32>
    %411 = arith.addf %410, %409 : vector<8x128xf32>
    %412 = arith.divf %410, %411 : vector<8x128xf32>
    %413 = vector.extract_strided_slice %401 {offsets = [0, 128], sizes = [8, 128], strides = [1, 1]} : vector<8x384xf32> to vector<8x128xf32>
    %414 = vector.extract_strided_slice %404 {offsets = [0, 128], sizes = [8, 128], strides = [1, 1]} : vector<8x384xf32> to vector<8x128xf32>
    %415 = arith.addf %413, %414 : vector<8x128xf32>
    %416 = arith.negf %415 : vector<8x128xf32>
    %417 = math.exp %416 : vector<8x128xf32>
    %cst_109 = arith.constant 1.000000e+00 : f32
    %418 = vector.broadcast %cst_109 : f32 to vector<8x128xf32>
    %419 = arith.addf %418, %417 : vector<8x128xf32>
    %420 = arith.divf %418, %419 : vector<8x128xf32>
    %421 = vector.extract_strided_slice %401 {offsets = [0, 256], sizes = [8, 128], strides = [1, 1]} : vector<8x384xf32> to vector<8x128xf32>
    %422 = vector.extract_strided_slice %404 {offsets = [0, 256], sizes = [8, 128], strides = [1, 1]} : vector<8x384xf32> to vector<8x128xf32>
    %423 = arith.mulf %412, %422 : vector<8x128xf32>
    %424 = arith.addf %421, %423 : vector<8x128xf32>
    %425 = math.tanh %424 : vector<8x128xf32>
    %426 = arith.subf %383, %425 : vector<8x128xf32>
    %427 = arith.mulf %420, %426 : vector<8x128xf32>
    %428 = arith.addf %425, %427 : vector<8x128xf32>
    %429 = vector.broadcast %397 : i32 to vector<8x1xi32>
    %430 = arith.cmpi sgt, %12, %429 : vector<8x1xi32>
    %431 = arith.extui %430 : vector<8x1xi1> to vector<8x1xi32>
    %432 = arith.sitofp %431 : vector<8x1xi32> to vector<8x1xf32>
    %433 = arith.subf %428, %383 : vector<8x128xf32>
    %434 = vector.broadcast %432 : vector<8x1xf32> to vector<8x128xf32>
    %435 = arith.mulf %434, %433 : vector<8x128xf32>
    %436 = arith.addf %383, %435 : vector<8x128xf32>
    %437 = vector.broadcast %432 : vector<8x1xf32> to vector<8x128xf32>
    %438 = arith.mulf %437, %428 : vector<8x128xf32>
    %c0_110 = arith.constant 0 : index
    %439 = arith.index_cast %399 : i32 to index
    %c0_111 = arith.constant 0 : index
    %440 = vector.load %arg8[%c0_110, %439, %c0_111] : memref<1x128x128xf32, #tpu.memory_space<vmem>>, vector<1x8x128xf32>
    %441 = vector.shape_cast %440 : vector<1x8x128xf32> to vector<8x128xf32>
    %442 = vector.shape_cast %438 : vector<8x128xf32> to vector<1x8x128xf32>
    tpu.vector_store %arg8[%c0_110, %439, %c0_111], %442 {strides = array<i32>} : memref<1x128x128xf32, #tpu.memory_space<vmem>>, vector<1x8x128xf32>,
    %c-1_i32 = arith.constant -1 : i32
    %443 = arith.muli %arg0, %c-1_i32 : i32
    %c8_i32_112 = arith.constant 8 : i32
    %444 = arith.addi %c8_i32_112, %443 : i32
    %c16_i32_113 = arith.constant 16 : i32
    %445 = arith.muli %arg1, %c16_i32_113 : i32
    %c8_i32_114 = arith.constant 8 : i32
    %446 = arith.addi %445, %c8_i32_114 : i32
    %c2_i32_115 = arith.constant 2 : i32
    %447 = arith.muli %c2_i32_115, %446 : i32
    %c15_i32_116 = arith.constant 15 : i32
    %448 = arith.subi %c15_i32_116, %447 : i32
    %449 = arith.muli %arg0, %448 : i32
    %450 = arith.addi %446, %449 : i32
    %c8_i32_117 = arith.constant 8 : i32
    %451 = arith.muli %444, %c8_i32_117 : i32
    %452 = tpu.assume_multiple %451, 8 : i32
    %453 = arith.index_cast %452 : i32 to index
    %c0_118 = arith.constant 0 : index
    %454 = vector.load %arg10[%453, %c0_118] : memref<128x384xf32, #tpu.memory_space<vmem>>, vector<8x384xf32>
    %cst_119 = arith.constant dense<0.000000e+00> : vector<8x384xf32>
    %455 = tpu.matmul %436, %14, %cst_119 {dimension_numbers = #tpu.dot_dimension_numbers<[1], [0], [0], [1], [0, 0, 1, 1], [], []>} : vector<8x128xf32>, vector<128x384xf32>, vector<8x384xf32> -> vector<8x384xf32>
    %456 = vector.broadcast %16 : vector<1x384xf32> to vector<8x384xf32>
    %457 = arith.addf %455, %456 : vector<8x384xf32>
    %458 = vector.extract_strided_slice %454 {offsets = [0, 0], sizes = [8, 128], strides = [1, 1]} : vector<8x384xf32> to vector<8x128xf32>
    %459 = vector.extract_strided_slice %457 {offsets = [0, 0], sizes = [8, 128], strides = [1, 1]} : vector<8x384xf32> to vector<8x128xf32>
    %460 = arith.addf %458, %459 : vector<8x128xf32>
    %461 = arith.negf %460 : vector<8x128xf32>
    %462 = math.exp %461 : vector<8x128xf32>
    %cst_120 = arith.constant 1.000000e+00 : f32
    %463 = vector.broadcast %cst_120 : f32 to vector<8x128xf32>
    %464 = arith.addf %463, %462 : vector<8x128xf32>
    %465 = arith.divf %463, %464 : vector<8x128xf32>
    %466 = vector.extract_strided_slice %454 {offsets = [0, 128], sizes = [8, 128], strides = [1, 1]} : vector<8x384xf32> to vector<8x128xf32>
    %467 = vector.extract_strided_slice %457 {offsets = [0, 128], sizes = [8, 128], strides = [1, 1]} : vector<8x384xf32> to vector<8x128xf32>
    %468 = arith.addf %466, %467 : vector<8x128xf32>
    %469 = arith.negf %468 : vector<8x128xf32>
    %470 = math.exp %469 : vector<8x128xf32>
    %cst_121 = arith.constant 1.000000e+00 : f32
    %471 = vector.broadcast %cst_121 : f32 to vector<8x128xf32>
    %472 = arith.addf %471, %470 : vector<8x128xf32>
    %473 = arith.divf %471, %472 : vector<8x128xf32>
    %474 = vector.extract_strided_slice %454 {offsets = [0, 256], sizes = [8, 128], strides = [1, 1]} : vector<8x384xf32> to vector<8x128xf32>
    %475 = vector.extract_strided_slice %457 {offsets = [0, 256], sizes = [8, 128], strides = [1, 1]} : vector<8x384xf32> to vector<8x128xf32>
    %476 = arith.mulf %465, %475 : vector<8x128xf32>
    %477 = arith.addf %474, %476 : vector<8x128xf32>
    %478 = math.tanh %477 : vector<8x128xf32>
    %479 = arith.subf %436, %478 : vector<8x128xf32>
    %480 = arith.mulf %473, %479 : vector<8x128xf32>
    %481 = arith.addf %478, %480 : vector<8x128xf32>
    %482 = vector.broadcast %450 : i32 to vector<8x1xi32>
    %483 = arith.cmpi sgt, %12, %482 : vector<8x1xi32>
    %484 = arith.extui %483 : vector<8x1xi1> to vector<8x1xi32>
    %485 = arith.sitofp %484 : vector<8x1xi32> to vector<8x1xf32>
    %486 = arith.subf %481, %436 : vector<8x128xf32>
    %487 = vector.broadcast %485 : vector<8x1xf32> to vector<8x128xf32>
    %488 = arith.mulf %487, %486 : vector<8x128xf32>
    %489 = arith.addf %436, %488 : vector<8x128xf32>
    %490 = vector.broadcast %485 : vector<8x1xf32> to vector<8x128xf32>
    %491 = arith.mulf %490, %481 : vector<8x128xf32>
    %c0_122 = arith.constant 0 : index
    %492 = arith.index_cast %452 : i32 to index
    %c0_123 = arith.constant 0 : index
    %493 = vector.load %arg8[%c0_122, %492, %c0_123] : memref<1x128x128xf32, #tpu.memory_space<vmem>>, vector<1x8x128xf32>
    %494 = vector.shape_cast %493 : vector<1x8x128xf32> to vector<8x128xf32>
    %495 = vector.shape_cast %491 : vector<8x128xf32> to vector<1x8x128xf32>
    tpu.vector_store %arg8[%c0_122, %492, %c0_123], %495 {strides = array<i32>} : memref<1x128x128xf32, #tpu.memory_space<vmem>>, vector<1x8x128xf32>,
    %c-3_i32 = arith.constant -3 : i32
    %496 = arith.muli %arg0, %c-3_i32 : i32
    %c9_i32_124 = arith.constant 9 : i32
    %497 = arith.addi %c9_i32_124, %496 : i32
    %c16_i32_125 = arith.constant 16 : i32
    %498 = arith.muli %arg1, %c16_i32_125 : i32
    %c9_i32_126 = arith.constant 9 : i32
    %499 = arith.addi %498, %c9_i32_126 : i32
    %c2_i32_127 = arith.constant 2 : i32
    %500 = arith.muli %c2_i32_127, %499 : i32
    %c15_i32_128 = arith.constant 15 : i32
    %501 = arith.subi %c15_i32_128, %500 : i32
    %502 = arith.muli %arg0, %501 : i32
    %503 = arith.addi %499, %502 : i32
    %c8_i32_129 = arith.constant 8 : i32
    %504 = arith.muli %497, %c8_i32_129 : i32
    %505 = tpu.assume_multiple %504, 8 : i32
    %506 = arith.index_cast %505 : i32 to index
    %c0_130 = arith.constant 0 : index
    %507 = vector.load %arg10[%506, %c0_130] : memref<128x384xf32, #tpu.memory_space<vmem>>, vector<8x384xf32>
    %cst_131 = arith.constant dense<0.000000e+00> : vector<8x384xf32>
    %508 = tpu.matmul %489, %14, %cst_131 {dimension_numbers = #tpu.dot_dimension_numbers<[1], [0], [0], [1], [0, 0, 1, 1], [], []>} : vector<8x128xf32>, vector<128x384xf32>, vector<8x384xf32> -> vector<8x384xf32>
    %509 = vector.broadcast %16 : vector<1x384xf32> to vector<8x384xf32>
    %510 = arith.addf %508, %509 : vector<8x384xf32>
    %511 = vector.extract_strided_slice %507 {offsets = [0, 0], sizes = [8, 128], strides = [1, 1]} : vector<8x384xf32> to vector<8x128xf32>
    %512 = vector.extract_strided_slice %510 {offsets = [0, 0], sizes = [8, 128], strides = [1, 1]} : vector<8x384xf32> to vector<8x128xf32>
    %513 = arith.addf %511, %512 : vector<8x128xf32>
    %514 = arith.negf %513 : vector<8x128xf32>
    %515 = math.exp %514 : vector<8x128xf32>
    %cst_132 = arith.constant 1.000000e+00 : f32
    %516 = vector.broadcast %cst_132 : f32 to vector<8x128xf32>
    %517 = arith.addf %516, %515 : vector<8x128xf32>
    %518 = arith.divf %516, %517 : vector<8x128xf32>
    %519 = vector.extract_strided_slice %507 {offsets = [0, 128], sizes = [8, 128], strides = [1, 1]} : vector<8x384xf32> to vector<8x128xf32>
    %520 = vector.extract_strided_slice %510 {offsets = [0, 128], sizes = [8, 128], strides = [1, 1]} : vector<8x384xf32> to vector<8x128xf32>
    %521 = arith.addf %519, %520 : vector<8x128xf32>
    %522 = arith.negf %521 : vector<8x128xf32>
    %523 = math.exp %522 : vector<8x128xf32>
    %cst_133 = arith.constant 1.000000e+00 : f32
    %524 = vector.broadcast %cst_133 : f32 to vector<8x128xf32>
    %525 = arith.addf %524, %523 : vector<8x128xf32>
    %526 = arith.divf %524, %525 : vector<8x128xf32>
    %527 = vector.extract_strided_slice %507 {offsets = [0, 256], sizes = [8, 128], strides = [1, 1]} : vector<8x384xf32> to vector<8x128xf32>
    %528 = vector.extract_strided_slice %510 {offsets = [0, 256], sizes = [8, 128], strides = [1, 1]} : vector<8x384xf32> to vector<8x128xf32>
    %529 = arith.mulf %518, %528 : vector<8x128xf32>
    %530 = arith.addf %527, %529 : vector<8x128xf32>
    %531 = math.tanh %530 : vector<8x128xf32>
    %532 = arith.subf %489, %531 : vector<8x128xf32>
    %533 = arith.mulf %526, %532 : vector<8x128xf32>
    %534 = arith.addf %531, %533 : vector<8x128xf32>
    %535 = vector.broadcast %503 : i32 to vector<8x1xi32>
    %536 = arith.cmpi sgt, %12, %535 : vector<8x1xi32>
    %537 = arith.extui %536 : vector<8x1xi1> to vector<8x1xi32>
    %538 = arith.sitofp %537 : vector<8x1xi32> to vector<8x1xf32>
    %539 = arith.subf %534, %489 : vector<8x128xf32>
    %540 = vector.broadcast %538 : vector<8x1xf32> to vector<8x128xf32>
    %541 = arith.mulf %540, %539 : vector<8x128xf32>
    %542 = arith.addf %489, %541 : vector<8x128xf32>
    %543 = vector.broadcast %538 : vector<8x1xf32> to vector<8x128xf32>
    %544 = arith.mulf %543, %534 : vector<8x128xf32>
    %c0_134 = arith.constant 0 : index
    %545 = arith.index_cast %505 : i32 to index
    %c0_135 = arith.constant 0 : index
    %546 = vector.load %arg8[%c0_134, %545, %c0_135] : memref<1x128x128xf32, #tpu.memory_space<vmem>>, vector<1x8x128xf32>
    %547 = vector.shape_cast %546 : vector<1x8x128xf32> to vector<8x128xf32>
    %548 = vector.shape_cast %544 : vector<8x128xf32> to vector<1x8x128xf32>
    tpu.vector_store %arg8[%c0_134, %545, %c0_135], %548 {strides = array<i32>} : memref<1x128x128xf32, #tpu.memory_space<vmem>>, vector<1x8x128xf32>,
    %c-5_i32 = arith.constant -5 : i32
    %549 = arith.muli %arg0, %c-5_i32 : i32
    %c10_i32 = arith.constant 10 : i32
    %550 = arith.addi %c10_i32, %549 : i32
    %c16_i32_136 = arith.constant 16 : i32
    %551 = arith.muli %arg1, %c16_i32_136 : i32
    %c10_i32_137 = arith.constant 10 : i32
    %552 = arith.addi %551, %c10_i32_137 : i32
    %c2_i32_138 = arith.constant 2 : i32
    %553 = arith.muli %c2_i32_138, %552 : i32
    %c15_i32_139 = arith.constant 15 : i32
    %554 = arith.subi %c15_i32_139, %553 : i32
    %555 = arith.muli %arg0, %554 : i32
    %556 = arith.addi %552, %555 : i32
    %c8_i32_140 = arith.constant 8 : i32
    %557 = arith.muli %550, %c8_i32_140 : i32
    %558 = tpu.assume_multiple %557, 8 : i32
    %559 = arith.index_cast %558 : i32 to index
    %c0_141 = arith.constant 0 : index
    %560 = vector.load %arg10[%559, %c0_141] : memref<128x384xf32, #tpu.memory_space<vmem>>, vector<8x384xf32>
    %cst_142 = arith.constant dense<0.000000e+00> : vector<8x384xf32>
    %561 = tpu.matmul %542, %14, %cst_142 {dimension_numbers = #tpu.dot_dimension_numbers<[1], [0], [0], [1], [0, 0, 1, 1], [], []>} : vector<8x128xf32>, vector<128x384xf32>, vector<8x384xf32> -> vector<8x384xf32>
    %562 = vector.broadcast %16 : vector<1x384xf32> to vector<8x384xf32>
    %563 = arith.addf %561, %562 : vector<8x384xf32>
    %564 = vector.extract_strided_slice %560 {offsets = [0, 0], sizes = [8, 128], strides = [1, 1]} : vector<8x384xf32> to vector<8x128xf32>
    %565 = vector.extract_strided_slice %563 {offsets = [0, 0], sizes = [8, 128], strides = [1, 1]} : vector<8x384xf32> to vector<8x128xf32>
    %566 = arith.addf %564, %565 : vector<8x128xf32>
    %567 = arith.negf %566 : vector<8x128xf32>
    %568 = math.exp %567 : vector<8x128xf32>
    %cst_143 = arith.constant 1.000000e+00 : f32
    %569 = vector.broadcast %cst_143 : f32 to vector<8x128xf32>
    %570 = arith.addf %569, %568 : vector<8x128xf32>
    %571 = arith.divf %569, %570 : vector<8x128xf32>
    %572 = vector.extract_strided_slice %560 {offsets = [0, 128], sizes = [8, 128], strides = [1, 1]} : vector<8x384xf32> to vector<8x128xf32>
    %573 = vector.extract_strided_slice %563 {offsets = [0, 128], sizes = [8, 128], strides = [1, 1]} : vector<8x384xf32> to vector<8x128xf32>
    %574 = arith.addf %572, %573 : vector<8x128xf32>
    %575 = arith.negf %574 : vector<8x128xf32>
    %576 = math.exp %575 : vector<8x128xf32>
    %cst_144 = arith.constant 1.000000e+00 : f32
    %577 = vector.broadcast %cst_144 : f32 to vector<8x128xf32>
    %578 = arith.addf %577, %576 : vector<8x128xf32>
    %579 = arith.divf %577, %578 : vector<8x128xf32>
    %580 = vector.extract_strided_slice %560 {offsets = [0, 256], sizes = [8, 128], strides = [1, 1]} : vector<8x384xf32> to vector<8x128xf32>
    %581 = vector.extract_strided_slice %563 {offsets = [0, 256], sizes = [8, 128], strides = [1, 1]} : vector<8x384xf32> to vector<8x128xf32>
    %582 = arith.mulf %571, %581 : vector<8x128xf32>
    %583 = arith.addf %580, %582 : vector<8x128xf32>
    %584 = math.tanh %583 : vector<8x128xf32>
    %585 = arith.subf %542, %584 : vector<8x128xf32>
    %586 = arith.mulf %579, %585 : vector<8x128xf32>
    %587 = arith.addf %584, %586 : vector<8x128xf32>
    %588 = vector.broadcast %556 : i32 to vector<8x1xi32>
    %589 = arith.cmpi sgt, %12, %588 : vector<8x1xi32>
    %590 = arith.extui %589 : vector<8x1xi1> to vector<8x1xi32>
    %591 = arith.sitofp %590 : vector<8x1xi32> to vector<8x1xf32>
    %592 = arith.subf %587, %542 : vector<8x128xf32>
    %593 = vector.broadcast %591 : vector<8x1xf32> to vector<8x128xf32>
    %594 = arith.mulf %593, %592 : vector<8x128xf32>
    %595 = arith.addf %542, %594 : vector<8x128xf32>
    %596 = vector.broadcast %591 : vector<8x1xf32> to vector<8x128xf32>
    %597 = arith.mulf %596, %587 : vector<8x128xf32>
    %c0_145 = arith.constant 0 : index
    %598 = arith.index_cast %558 : i32 to index
    %c0_146 = arith.constant 0 : index
    %599 = vector.load %arg8[%c0_145, %598, %c0_146] : memref<1x128x128xf32, #tpu.memory_space<vmem>>, vector<1x8x128xf32>
    %600 = vector.shape_cast %599 : vector<1x8x128xf32> to vector<8x128xf32>
    %601 = vector.shape_cast %597 : vector<8x128xf32> to vector<1x8x128xf32>
    tpu.vector_store %arg8[%c0_145, %598, %c0_146], %601 {strides = array<i32>} : memref<1x128x128xf32, #tpu.memory_space<vmem>>, vector<1x8x128xf32>,
    %c-7_i32 = arith.constant -7 : i32
    %602 = arith.muli %arg0, %c-7_i32 : i32
    %c11_i32_147 = arith.constant 11 : i32
    %603 = arith.addi %c11_i32_147, %602 : i32
    %c16_i32_148 = arith.constant 16 : i32
    %604 = arith.muli %arg1, %c16_i32_148 : i32
    %c11_i32_149 = arith.constant 11 : i32
    %605 = arith.addi %604, %c11_i32_149 : i32
    %c2_i32_150 = arith.constant 2 : i32
    %606 = arith.muli %c2_i32_150, %605 : i32
    %c15_i32_151 = arith.constant 15 : i32
    %607 = arith.subi %c15_i32_151, %606 : i32
    %608 = arith.muli %arg0, %607 : i32
    %609 = arith.addi %605, %608 : i32
    %c8_i32_152 = arith.constant 8 : i32
    %610 = arith.muli %603, %c8_i32_152 : i32
    %611 = tpu.assume_multiple %610, 8 : i32
    %612 = arith.index_cast %611 : i32 to index
    %c0_153 = arith.constant 0 : index
    %613 = vector.load %arg10[%612, %c0_153] : memref<128x384xf32, #tpu.memory_space<vmem>>, vector<8x384xf32>
    %cst_154 = arith.constant dense<0.000000e+00> : vector<8x384xf32>
    %614 = tpu.matmul %595, %14, %cst_154 {dimension_numbers = #tpu.dot_dimension_numbers<[1], [0], [0], [1], [0, 0, 1, 1], [], []>} : vector<8x128xf32>, vector<128x384xf32>, vector<8x384xf32> -> vector<8x384xf32>
    %615 = vector.broadcast %16 : vector<1x384xf32> to vector<8x384xf32>
    %616 = arith.addf %614, %615 : vector<8x384xf32>
    %617 = vector.extract_strided_slice %613 {offsets = [0, 0], sizes = [8, 128], strides = [1, 1]} : vector<8x384xf32> to vector<8x128xf32>
    %618 = vector.extract_strided_slice %616 {offsets = [0, 0], sizes = [8, 128], strides = [1, 1]} : vector<8x384xf32> to vector<8x128xf32>
    %619 = arith.addf %617, %618 : vector<8x128xf32>
    %620 = arith.negf %619 : vector<8x128xf32>
    %621 = math.exp %620 : vector<8x128xf32>
    %cst_155 = arith.constant 1.000000e+00 : f32
    %622 = vector.broadcast %cst_155 : f32 to vector<8x128xf32>
    %623 = arith.addf %622, %621 : vector<8x128xf32>
    %624 = arith.divf %622, %623 : vector<8x128xf32>
    %625 = vector.extract_strided_slice %613 {offsets = [0, 128], sizes = [8, 128], strides = [1, 1]} : vector<8x384xf32> to vector<8x128xf32>
    %626 = vector.extract_strided_slice %616 {offsets = [0, 128], sizes = [8, 128], strides = [1, 1]} : vector<8x384xf32> to vector<8x128xf32>
    %627 = arith.addf %625, %626 : vector<8x128xf32>
    %628 = arith.negf %627 : vector<8x128xf32>
    %629 = math.exp %628 : vector<8x128xf32>
    %cst_156 = arith.constant 1.000000e+00 : f32
    %630 = vector.broadcast %cst_156 : f32 to vector<8x128xf32>
    %631 = arith.addf %630, %629 : vector<8x128xf32>
    %632 = arith.divf %630, %631 : vector<8x128xf32>
    %633 = vector.extract_strided_slice %613 {offsets = [0, 256], sizes = [8, 128], strides = [1, 1]} : vector<8x384xf32> to vector<8x128xf32>
    %634 = vector.extract_strided_slice %616 {offsets = [0, 256], sizes = [8, 128], strides = [1, 1]} : vector<8x384xf32> to vector<8x128xf32>
    %635 = arith.mulf %624, %634 : vector<8x128xf32>
    %636 = arith.addf %633, %635 : vector<8x128xf32>
    %637 = math.tanh %636 : vector<8x128xf32>
    %638 = arith.subf %595, %637 : vector<8x128xf32>
    %639 = arith.mulf %632, %638 : vector<8x128xf32>
    %640 = arith.addf %637, %639 : vector<8x128xf32>
    %641 = vector.broadcast %609 : i32 to vector<8x1xi32>
    %642 = arith.cmpi sgt, %12, %641 : vector<8x1xi32>
    %643 = arith.extui %642 : vector<8x1xi1> to vector<8x1xi32>
    %644 = arith.sitofp %643 : vector<8x1xi32> to vector<8x1xf32>
    %645 = arith.subf %640, %595 : vector<8x128xf32>
    %646 = vector.broadcast %644 : vector<8x1xf32> to vector<8x128xf32>
    %647 = arith.mulf %646, %645 : vector<8x128xf32>
    %648 = arith.addf %595, %647 : vector<8x128xf32>
    %649 = vector.broadcast %644 : vector<8x1xf32> to vector<8x128xf32>
    %650 = arith.mulf %649, %640 : vector<8x128xf32>
    %c0_157 = arith.constant 0 : index
    %651 = arith.index_cast %611 : i32 to index
    %c0_158 = arith.constant 0 : index
    %652 = vector.load %arg8[%c0_157, %651, %c0_158] : memref<1x128x128xf32, #tpu.memory_space<vmem>>, vector<1x8x128xf32>
    %653 = vector.shape_cast %652 : vector<1x8x128xf32> to vector<8x128xf32>
    %654 = vector.shape_cast %650 : vector<8x128xf32> to vector<1x8x128xf32>
    tpu.vector_store %arg8[%c0_157, %651, %c0_158], %654 {strides = array<i32>} : memref<1x128x128xf32, #tpu.memory_space<vmem>>, vector<1x8x128xf32>,
    %c-9_i32 = arith.constant -9 : i32
    %655 = arith.muli %arg0, %c-9_i32 : i32
    %c12_i32 = arith.constant 12 : i32
    %656 = arith.addi %c12_i32, %655 : i32
    %c16_i32_159 = arith.constant 16 : i32
    %657 = arith.muli %arg1, %c16_i32_159 : i32
    %c12_i32_160 = arith.constant 12 : i32
    %658 = arith.addi %657, %c12_i32_160 : i32
    %c2_i32_161 = arith.constant 2 : i32
    %659 = arith.muli %c2_i32_161, %658 : i32
    %c15_i32_162 = arith.constant 15 : i32
    %660 = arith.subi %c15_i32_162, %659 : i32
    %661 = arith.muli %arg0, %660 : i32
    %662 = arith.addi %658, %661 : i32
    %c8_i32_163 = arith.constant 8 : i32
    %663 = arith.muli %656, %c8_i32_163 : i32
    %664 = tpu.assume_multiple %663, 8 : i32
    %665 = arith.index_cast %664 : i32 to index
    %c0_164 = arith.constant 0 : index
    %666 = vector.load %arg10[%665, %c0_164] : memref<128x384xf32, #tpu.memory_space<vmem>>, vector<8x384xf32>
    %cst_165 = arith.constant dense<0.000000e+00> : vector<8x384xf32>
    %667 = tpu.matmul %648, %14, %cst_165 {dimension_numbers = #tpu.dot_dimension_numbers<[1], [0], [0], [1], [0, 0, 1, 1], [], []>} : vector<8x128xf32>, vector<128x384xf32>, vector<8x384xf32> -> vector<8x384xf32>
    %668 = vector.broadcast %16 : vector<1x384xf32> to vector<8x384xf32>
    %669 = arith.addf %667, %668 : vector<8x384xf32>
    %670 = vector.extract_strided_slice %666 {offsets = [0, 0], sizes = [8, 128], strides = [1, 1]} : vector<8x384xf32> to vector<8x128xf32>
    %671 = vector.extract_strided_slice %669 {offsets = [0, 0], sizes = [8, 128], strides = [1, 1]} : vector<8x384xf32> to vector<8x128xf32>
    %672 = arith.addf %670, %671 : vector<8x128xf32>
    %673 = arith.negf %672 : vector<8x128xf32>
    %674 = math.exp %673 : vector<8x128xf32>
    %cst_166 = arith.constant 1.000000e+00 : f32
    %675 = vector.broadcast %cst_166 : f32 to vector<8x128xf32>
    %676 = arith.addf %675, %674 : vector<8x128xf32>
    %677 = arith.divf %675, %676 : vector<8x128xf32>
    %678 = vector.extract_strided_slice %666 {offsets = [0, 128], sizes = [8, 128], strides = [1, 1]} : vector<8x384xf32> to vector<8x128xf32>
    %679 = vector.extract_strided_slice %669 {offsets = [0, 128], sizes = [8, 128], strides = [1, 1]} : vector<8x384xf32> to vector<8x128xf32>
    %680 = arith.addf %678, %679 : vector<8x128xf32>
    %681 = arith.negf %680 : vector<8x128xf32>
    %682 = math.exp %681 : vector<8x128xf32>
    %cst_167 = arith.constant 1.000000e+00 : f32
    %683 = vector.broadcast %cst_167 : f32 to vector<8x128xf32>
    %684 = arith.addf %683, %682 : vector<8x128xf32>
    %685 = arith.divf %683, %684 : vector<8x128xf32>
    %686 = vector.extract_strided_slice %666 {offsets = [0, 256], sizes = [8, 128], strides = [1, 1]} : vector<8x384xf32> to vector<8x128xf32>
    %687 = vector.extract_strided_slice %669 {offsets = [0, 256], sizes = [8, 128], strides = [1, 1]} : vector<8x384xf32> to vector<8x128xf32>
    %688 = arith.mulf %677, %687 : vector<8x128xf32>
    %689 = arith.addf %686, %688 : vector<8x128xf32>
    %690 = math.tanh %689 : vector<8x128xf32>
    %691 = arith.subf %648, %690 : vector<8x128xf32>
    %692 = arith.mulf %685, %691 : vector<8x128xf32>
    %693 = arith.addf %690, %692 : vector<8x128xf32>
    %694 = vector.broadcast %662 : i32 to vector<8x1xi32>
    %695 = arith.cmpi sgt, %12, %694 : vector<8x1xi32>
    %696 = arith.extui %695 : vector<8x1xi1> to vector<8x1xi32>
    %697 = arith.sitofp %696 : vector<8x1xi32> to vector<8x1xf32>
    %698 = arith.subf %693, %648 : vector<8x128xf32>
    %699 = vector.broadcast %697 : vector<8x1xf32> to vector<8x128xf32>
    %700 = arith.mulf %699, %698 : vector<8x128xf32>
    %701 = arith.addf %648, %700 : vector<8x128xf32>
    %702 = vector.broadcast %697 : vector<8x1xf32> to vector<8x128xf32>
    %703 = arith.mulf %702, %693 : vector<8x128xf32>
    %c0_168 = arith.constant 0 : index
    %704 = arith.index_cast %664 : i32 to index
    %c0_169 = arith.constant 0 : index
    %705 = vector.load %arg8[%c0_168, %704, %c0_169] : memref<1x128x128xf32, #tpu.memory_space<vmem>>, vector<1x8x128xf32>
    %706 = vector.shape_cast %705 : vector<1x8x128xf32> to vector<8x128xf32>
    %707 = vector.shape_cast %703 : vector<8x128xf32> to vector<1x8x128xf32>
    tpu.vector_store %arg8[%c0_168, %704, %c0_169], %707 {strides = array<i32>} : memref<1x128x128xf32, #tpu.memory_space<vmem>>, vector<1x8x128xf32>,
    %c-11_i32 = arith.constant -11 : i32
    %708 = arith.muli %arg0, %c-11_i32 : i32
    %c13_i32_170 = arith.constant 13 : i32
    %709 = arith.addi %c13_i32_170, %708 : i32
    %c16_i32_171 = arith.constant 16 : i32
    %710 = arith.muli %arg1, %c16_i32_171 : i32
    %c13_i32_172 = arith.constant 13 : i32
    %711 = arith.addi %710, %c13_i32_172 : i32
    %c2_i32_173 = arith.constant 2 : i32
    %712 = arith.muli %c2_i32_173, %711 : i32
    %c15_i32_174 = arith.constant 15 : i32
    %713 = arith.subi %c15_i32_174, %712 : i32
    %714 = arith.muli %arg0, %713 : i32
    %715 = arith.addi %711, %714 : i32
    %c8_i32_175 = arith.constant 8 : i32
    %716 = arith.muli %709, %c8_i32_175 : i32
    %717 = tpu.assume_multiple %716, 8 : i32
    %718 = arith.index_cast %717 : i32 to index
    %c0_176 = arith.constant 0 : index
    %719 = vector.load %arg10[%718, %c0_176] : memref<128x384xf32, #tpu.memory_space<vmem>>, vector<8x384xf32>
    %cst_177 = arith.constant dense<0.000000e+00> : vector<8x384xf32>
    %720 = tpu.matmul %701, %14, %cst_177 {dimension_numbers = #tpu.dot_dimension_numbers<[1], [0], [0], [1], [0, 0, 1, 1], [], []>} : vector<8x128xf32>, vector<128x384xf32>, vector<8x384xf32> -> vector<8x384xf32>
    %721 = vector.broadcast %16 : vector<1x384xf32> to vector<8x384xf32>
    %722 = arith.addf %720, %721 : vector<8x384xf32>
    %723 = vector.extract_strided_slice %719 {offsets = [0, 0], sizes = [8, 128], strides = [1, 1]} : vector<8x384xf32> to vector<8x128xf32>
    %724 = vector.extract_strided_slice %722 {offsets = [0, 0], sizes = [8, 128], strides = [1, 1]} : vector<8x384xf32> to vector<8x128xf32>
    %725 = arith.addf %723, %724 : vector<8x128xf32>
    %726 = arith.negf %725 : vector<8x128xf32>
    %727 = math.exp %726 : vector<8x128xf32>
    %cst_178 = arith.constant 1.000000e+00 : f32
    %728 = vector.broadcast %cst_178 : f32 to vector<8x128xf32>
    %729 = arith.addf %728, %727 : vector<8x128xf32>
    %730 = arith.divf %728, %729 : vector<8x128xf32>
    %731 = vector.extract_strided_slice %719 {offsets = [0, 128], sizes = [8, 128], strides = [1, 1]} : vector<8x384xf32> to vector<8x128xf32>
    %732 = vector.extract_strided_slice %722 {offsets = [0, 128], sizes = [8, 128], strides = [1, 1]} : vector<8x384xf32> to vector<8x128xf32>
    %733 = arith.addf %731, %732 : vector<8x128xf32>
    %734 = arith.negf %733 : vector<8x128xf32>
    %735 = math.exp %734 : vector<8x128xf32>
    %cst_179 = arith.constant 1.000000e+00 : f32
    %736 = vector.broadcast %cst_179 : f32 to vector<8x128xf32>
    %737 = arith.addf %736, %735 : vector<8x128xf32>
    %738 = arith.divf %736, %737 : vector<8x128xf32>
    %739 = vector.extract_strided_slice %719 {offsets = [0, 256], sizes = [8, 128], strides = [1, 1]} : vector<8x384xf32> to vector<8x128xf32>
    %740 = vector.extract_strided_slice %722 {offsets = [0, 256], sizes = [8, 128], strides = [1, 1]} : vector<8x384xf32> to vector<8x128xf32>
    %741 = arith.mulf %730, %740 : vector<8x128xf32>
    %742 = arith.addf %739, %741 : vector<8x128xf32>
    %743 = math.tanh %742 : vector<8x128xf32>
    %744 = arith.subf %701, %743 : vector<8x128xf32>
    %745 = arith.mulf %738, %744 : vector<8x128xf32>
    %746 = arith.addf %743, %745 : vector<8x128xf32>
    %747 = vector.broadcast %715 : i32 to vector<8x1xi32>
    %748 = arith.cmpi sgt, %12, %747 : vector<8x1xi32>
    %749 = arith.extui %748 : vector<8x1xi1> to vector<8x1xi32>
    %750 = arith.sitofp %749 : vector<8x1xi32> to vector<8x1xf32>
    %751 = arith.subf %746, %701 : vector<8x128xf32>
    %752 = vector.broadcast %750 : vector<8x1xf32> to vector<8x128xf32>
    %753 = arith.mulf %752, %751 : vector<8x128xf32>
    %754 = arith.addf %701, %753 : vector<8x128xf32>
    %755 = vector.broadcast %750 : vector<8x1xf32> to vector<8x128xf32>
    %756 = arith.mulf %755, %746 : vector<8x128xf32>
    %c0_180 = arith.constant 0 : index
    %757 = arith.index_cast %717 : i32 to index
    %c0_181 = arith.constant 0 : index
    %758 = vector.load %arg8[%c0_180, %757, %c0_181] : memref<1x128x128xf32, #tpu.memory_space<vmem>>, vector<1x8x128xf32>
    %759 = vector.shape_cast %758 : vector<1x8x128xf32> to vector<8x128xf32>
    %760 = vector.shape_cast %756 : vector<8x128xf32> to vector<1x8x128xf32>
    tpu.vector_store %arg8[%c0_180, %757, %c0_181], %760 {strides = array<i32>} : memref<1x128x128xf32, #tpu.memory_space<vmem>>, vector<1x8x128xf32>,
    %c-13_i32 = arith.constant -13 : i32
    %761 = arith.muli %arg0, %c-13_i32 : i32
    %c14_i32 = arith.constant 14 : i32
    %762 = arith.addi %c14_i32, %761 : i32
    %c16_i32_182 = arith.constant 16 : i32
    %763 = arith.muli %arg1, %c16_i32_182 : i32
    %c14_i32_183 = arith.constant 14 : i32
    %764 = arith.addi %763, %c14_i32_183 : i32
    %c2_i32_184 = arith.constant 2 : i32
    %765 = arith.muli %c2_i32_184, %764 : i32
    %c15_i32_185 = arith.constant 15 : i32
    %766 = arith.subi %c15_i32_185, %765 : i32
    %767 = arith.muli %arg0, %766 : i32
    %768 = arith.addi %764, %767 : i32
    %c8_i32_186 = arith.constant 8 : i32
    %769 = arith.muli %762, %c8_i32_186 : i32
    %770 = tpu.assume_multiple %769, 8 : i32
    %771 = arith.index_cast %770 : i32 to index
    %c0_187 = arith.constant 0 : index
    %772 = vector.load %arg10[%771, %c0_187] : memref<128x384xf32, #tpu.memory_space<vmem>>, vector<8x384xf32>
    %cst_188 = arith.constant dense<0.000000e+00> : vector<8x384xf32>
    %773 = tpu.matmul %754, %14, %cst_188 {dimension_numbers = #tpu.dot_dimension_numbers<[1], [0], [0], [1], [0, 0, 1, 1], [], []>} : vector<8x128xf32>, vector<128x384xf32>, vector<8x384xf32> -> vector<8x384xf32>
    %774 = vector.broadcast %16 : vector<1x384xf32> to vector<8x384xf32>
    %775 = arith.addf %773, %774 : vector<8x384xf32>
    %776 = vector.extract_strided_slice %772 {offsets = [0, 0], sizes = [8, 128], strides = [1, 1]} : vector<8x384xf32> to vector<8x128xf32>
    %777 = vector.extract_strided_slice %775 {offsets = [0, 0], sizes = [8, 128], strides = [1, 1]} : vector<8x384xf32> to vector<8x128xf32>
    %778 = arith.addf %776, %777 : vector<8x128xf32>
    %779 = arith.negf %778 : vector<8x128xf32>
    %780 = math.exp %779 : vector<8x128xf32>
    %cst_189 = arith.constant 1.000000e+00 : f32
    %781 = vector.broadcast %cst_189 : f32 to vector<8x128xf32>
    %782 = arith.addf %781, %780 : vector<8x128xf32>
    %783 = arith.divf %781, %782 : vector<8x128xf32>
    %784 = vector.extract_strided_slice %772 {offsets = [0, 128], sizes = [8, 128], strides = [1, 1]} : vector<8x384xf32> to vector<8x128xf32>
    %785 = vector.extract_strided_slice %775 {offsets = [0, 128], sizes = [8, 128], strides = [1, 1]} : vector<8x384xf32> to vector<8x128xf32>
    %786 = arith.addf %784, %785 : vector<8x128xf32>
    %787 = arith.negf %786 : vector<8x128xf32>
    %788 = math.exp %787 : vector<8x128xf32>
    %cst_190 = arith.constant 1.000000e+00 : f32
    %789 = vector.broadcast %cst_190 : f32 to vector<8x128xf32>
    %790 = arith.addf %789, %788 : vector<8x128xf32>
    %791 = arith.divf %789, %790 : vector<8x128xf32>
    %792 = vector.extract_strided_slice %772 {offsets = [0, 256], sizes = [8, 128], strides = [1, 1]} : vector<8x384xf32> to vector<8x128xf32>
    %793 = vector.extract_strided_slice %775 {offsets = [0, 256], sizes = [8, 128], strides = [1, 1]} : vector<8x384xf32> to vector<8x128xf32>
    %794 = arith.mulf %783, %793 : vector<8x128xf32>
    %795 = arith.addf %792, %794 : vector<8x128xf32>
    %796 = math.tanh %795 : vector<8x128xf32>
    %797 = arith.subf %754, %796 : vector<8x128xf32>
    %798 = arith.mulf %791, %797 : vector<8x128xf32>
    %799 = arith.addf %796, %798 : vector<8x128xf32>
    %800 = vector.broadcast %768 : i32 to vector<8x1xi32>
    %801 = arith.cmpi sgt, %12, %800 : vector<8x1xi32>
    %802 = arith.extui %801 : vector<8x1xi1> to vector<8x1xi32>
    %803 = arith.sitofp %802 : vector<8x1xi32> to vector<8x1xf32>
    %804 = arith.subf %799, %754 : vector<8x128xf32>
    %805 = vector.broadcast %803 : vector<8x1xf32> to vector<8x128xf32>
    %806 = arith.mulf %805, %804 : vector<8x128xf32>
    %807 = arith.addf %754, %806 : vector<8x128xf32>
    %808 = vector.broadcast %803 : vector<8x1xf32> to vector<8x128xf32>
    %809 = arith.mulf %808, %799 : vector<8x128xf32>
    %c0_191 = arith.constant 0 : index
    %810 = arith.index_cast %770 : i32 to index
    %c0_192 = arith.constant 0 : index
    %811 = vector.load %arg8[%c0_191, %810, %c0_192] : memref<1x128x128xf32, #tpu.memory_space<vmem>>, vector<1x8x128xf32>
    %812 = vector.shape_cast %811 : vector<1x8x128xf32> to vector<8x128xf32>
    %813 = vector.shape_cast %809 : vector<8x128xf32> to vector<1x8x128xf32>
    tpu.vector_store %arg8[%c0_191, %810, %c0_192], %813 {strides = array<i32>} : memref<1x128x128xf32, #tpu.memory_space<vmem>>, vector<1x8x128xf32>,
    %c-15_i32 = arith.constant -15 : i32
    %814 = arith.muli %arg0, %c-15_i32 : i32
    %c15_i32_193 = arith.constant 15 : i32
    %815 = arith.addi %c15_i32_193, %814 : i32
    %c16_i32_194 = arith.constant 16 : i32
    %816 = arith.muli %arg1, %c16_i32_194 : i32
    %c15_i32_195 = arith.constant 15 : i32
    %817 = arith.addi %816, %c15_i32_195 : i32
    %c2_i32_196 = arith.constant 2 : i32
    %818 = arith.muli %c2_i32_196, %817 : i32
    %c15_i32_197 = arith.constant 15 : i32
    %819 = arith.subi %c15_i32_197, %818 : i32
    %820 = arith.muli %arg0, %819 : i32
    %821 = arith.addi %817, %820 : i32
    %c8_i32_198 = arith.constant 8 : i32
    %822 = arith.muli %815, %c8_i32_198 : i32
    %823 = tpu.assume_multiple %822, 8 : i32
    %824 = arith.index_cast %823 : i32 to index
    %c0_199 = arith.constant 0 : index
    %825 = vector.load %arg10[%824, %c0_199] : memref<128x384xf32, #tpu.memory_space<vmem>>, vector<8x384xf32>
    %cst_200 = arith.constant dense<0.000000e+00> : vector<8x384xf32>
    %826 = tpu.matmul %807, %14, %cst_200 {dimension_numbers = #tpu.dot_dimension_numbers<[1], [0], [0], [1], [0, 0, 1, 1], [], []>} : vector<8x128xf32>, vector<128x384xf32>, vector<8x384xf32> -> vector<8x384xf32>
    %827 = vector.broadcast %16 : vector<1x384xf32> to vector<8x384xf32>
    %828 = arith.addf %826, %827 : vector<8x384xf32>
    %829 = vector.extract_strided_slice %825 {offsets = [0, 0], sizes = [8, 128], strides = [1, 1]} : vector<8x384xf32> to vector<8x128xf32>
    %830 = vector.extract_strided_slice %828 {offsets = [0, 0], sizes = [8, 128], strides = [1, 1]} : vector<8x384xf32> to vector<8x128xf32>
    %831 = arith.addf %829, %830 : vector<8x128xf32>
    %832 = arith.negf %831 : vector<8x128xf32>
    %833 = math.exp %832 : vector<8x128xf32>
    %cst_201 = arith.constant 1.000000e+00 : f32
    %834 = vector.broadcast %cst_201 : f32 to vector<8x128xf32>
    %835 = arith.addf %834, %833 : vector<8x128xf32>
    %836 = arith.divf %834, %835 : vector<8x128xf32>
    %837 = vector.extract_strided_slice %825 {offsets = [0, 128], sizes = [8, 128], strides = [1, 1]} : vector<8x384xf32> to vector<8x128xf32>
    %838 = vector.extract_strided_slice %828 {offsets = [0, 128], sizes = [8, 128], strides = [1, 1]} : vector<8x384xf32> to vector<8x128xf32>
    %839 = arith.addf %837, %838 : vector<8x128xf32>
    %840 = arith.negf %839 : vector<8x128xf32>
    %841 = math.exp %840 : vector<8x128xf32>
    %cst_202 = arith.constant 1.000000e+00 : f32
    %842 = vector.broadcast %cst_202 : f32 to vector<8x128xf32>
    %843 = arith.addf %842, %841 : vector<8x128xf32>
    %844 = arith.divf %842, %843 : vector<8x128xf32>
    %845 = vector.extract_strided_slice %825 {offsets = [0, 256], sizes = [8, 128], strides = [1, 1]} : vector<8x384xf32> to vector<8x128xf32>
    %846 = vector.extract_strided_slice %828 {offsets = [0, 256], sizes = [8, 128], strides = [1, 1]} : vector<8x384xf32> to vector<8x128xf32>
    %847 = arith.mulf %836, %846 : vector<8x128xf32>
    %848 = arith.addf %845, %847 : vector<8x128xf32>
    %849 = math.tanh %848 : vector<8x128xf32>
    %850 = arith.subf %807, %849 : vector<8x128xf32>
    %851 = arith.mulf %844, %850 : vector<8x128xf32>
    %852 = arith.addf %849, %851 : vector<8x128xf32>
    %853 = vector.broadcast %821 : i32 to vector<8x1xi32>
    %854 = arith.cmpi sgt, %12, %853 : vector<8x1xi32>
    %855 = arith.extui %854 : vector<8x1xi1> to vector<8x1xi32>
    %856 = arith.sitofp %855 : vector<8x1xi32> to vector<8x1xf32>
    %857 = arith.subf %852, %807 : vector<8x128xf32>
    %858 = vector.broadcast %856 : vector<8x1xf32> to vector<8x128xf32>
    %859 = arith.mulf %858, %857 : vector<8x128xf32>
    %860 = arith.addf %807, %859 : vector<8x128xf32>
    %861 = vector.broadcast %856 : vector<8x1xf32> to vector<8x128xf32>
    %862 = arith.mulf %861, %852 : vector<8x128xf32>
    %c0_203 = arith.constant 0 : index
    %863 = arith.index_cast %823 : i32 to index
    %c0_204 = arith.constant 0 : index
    %864 = vector.load %arg8[%c0_203, %863, %c0_204] : memref<1x128x128xf32, #tpu.memory_space<vmem>>, vector<1x8x128xf32>
    %865 = vector.shape_cast %864 : vector<1x8x128xf32> to vector<8x128xf32>
    %866 = vector.shape_cast %862 : vector<8x128xf32> to vector<1x8x128xf32>
    tpu.vector_store %arg8[%c0_203, %863, %c0_204], %866 {strides = array<i32>} : memref<1x128x128xf32, #tpu.memory_space<vmem>>, vector<1x8x128xf32>,
    %c0_205 = arith.constant 0 : index
    %c0_206 = arith.constant 0 : index
    %c0_207 = arith.constant 0 : index
    %867 = vector.load %arg9[%c0_205, %c0_206, %c0_207] : memref<1x8x128xf32, #tpu.memory_space<vmem>>, vector<1x8x128xf32>
    %868 = vector.shape_cast %867 : vector<1x8x128xf32> to vector<8x128xf32>
    %869 = vector.shape_cast %860 : vector<8x128xf32> to vector<1x8x128xf32>
    tpu.vector_store %arg9[%c0_205, %c0_206, %c0_207], %869 {strides = array<i32>} : memref<1x8x128xf32, #tpu.memory_space<vmem>>, vector<1x8x128xf32>,
    return
  }
  func.func @transform_0(%arg0: i32, %arg1: i32) -> (i32, i32) {
    %c0_i32 = arith.constant 0 : i32
    %c0_i32_0 = arith.constant 0 : i32
    %c0_i32_1 = arith.constant 0 : i32
    return %c0_i32, %c0_i32_0 : i32, i32
  }
  func.func @transform_1(%arg0: i32, %arg1: i32) -> (i32, i32) {
    %c2_i32 = arith.constant 2 : i32
    %0 = arith.muli %c2_i32, %arg1 : i32
    %c0_i32 = arith.constant 0 : i32
    %1 = arith.subi %c0_i32, %0 : i32
    %2 = arith.muli %arg0, %1 : i32
    %3 = arith.addi %arg1, %2 : i32
    %c0_i32_0 = arith.constant 0 : i32
    %c0_i32_1 = arith.constant 0 : i32
    return %3, %c0_i32_0 : i32, i32
  }
  func.func @transform_2(%arg0: i32, %arg1: i32) -> (i32, i32, i32) {
    %c0_i32 = arith.constant 0 : i32
    %c0_i32_0 = arith.constant 0 : i32
    %c0_i32_1 = arith.constant 0 : i32
    return %arg0, %c0_i32, %c0_i32_0 : i32, i32, i32
  }
  func.func @transform_3(%arg0: i32, %arg1: i32) -> (i32, i32, i32) {
    %c0_i32 = arith.constant 0 : i32
    %c0_i32_0 = arith.constant 0 : i32
    %c0_i32_1 = arith.constant 0 : i32
    return %arg0, %c0_i32, %c0_i32_0 : i32, i32, i32
  }
  func.func @transform_4(%arg0: i32, %arg1: i32) -> (i32, i32, i32) {
    %c0_i32 = arith.constant 0 : i32
    %c0_i32_0 = arith.constant 0 : i32
    %c0_i32_1 = arith.constant 0 : i32
    return %arg0, %c0_i32, %c0_i32_0 : i32, i32, i32
  }
  func.func @transform_5(%arg0: i32, %arg1: i32) -> (i32, i32, i32) {
    %c0_i32 = arith.constant 0 : i32
    %c0_i32_0 = arith.constant 0 : i32
    %c0_i32_1 = arith.constant 0 : i32
    return %arg0, %c0_i32, %c0_i32_0 : i32, i32, i32
  }
  func.func @transform_6(%arg0: i32, %arg1: i32) -> (i32, i32, i32) {
    %c2_i32 = arith.constant 2 : i32
    %0 = arith.muli %c2_i32, %arg1 : i32
    %c0_i32 = arith.constant 0 : i32
    %1 = arith.subi %c0_i32, %0 : i32
    %2 = arith.muli %arg0, %1 : i32
    %3 = arith.addi %arg1, %2 : i32
    %c0_i32_0 = arith.constant 0 : i32
    %c0_i32_1 = arith.constant 0 : i32
    return %arg0, %3, %c0_i32_0 : i32, i32, i32
  }
  func.func @transform_7(%arg0: i32, %arg1: i32) -> (i32, i32, i32) {
    %c0_i32 = arith.constant 0 : i32
    %c0_i32_0 = arith.constant 0 : i32
    %c0_i32_1 = arith.constant 0 : i32
    return %arg0, %c0_i32, %c0_i32_0 : i32, i32, i32
  }
}

</mosaic_0001>

<llo_original>
// kernel: encoder_rnn_forward.1
$region0: #{encoder_rnn_forward.1}
  #allocation0 [shape = 'u32[]', space=smem, size = 0x4, offset = 0x4, fixed_abs, tag = 'smem constant byte address 0x4 - core index']
  #allocation1 [shape = 'u32[144,128]{1,0:T(1,128)}', space=vmem, size = 0x12000, scoped, tag = 'internal scratch']
  #allocation2 [shape = 'f32[128,384]{1,0:T(8,128)}', space=vmem, size = 0x30000, scoped, tag = 'scratch operand']
  %s0 = inlined_call_operand.vmem [shape: s32[8,1], index: 0, kind: input, shape index: {}]
  %s1 = inlined_call_operand.vmem [shape: f32[128,128], index: 1, kind: input, shape index: {}]
  %s2 = inlined_call_operand.vmem [shape: f32[2,128,384], index: 2, kind: input, shape index: {}]
  %s3 = inlined_call_operand.vmem [shape: f32[2,128,384], index: 3, kind: input, shape index: {}]
  %s4 = inlined_call_operand.vmem [shape: f32[2,1,384], index: 4, kind: input, shape index: {}]
  %s5 = inlined_call_operand.vmem [shape: f32[2,1,384], index: 5, kind: input, shape index: {}]
  %s6 = inlined_call_operand.vmem [shape: f32[2,128,128], index: 6, kind: output, shape index: {0}]
  %s7 = inlined_call_operand.vmem [shape: f32[2,8,128], index: 7, kind: output, shape index: {1}]
  %8 = xla_tuple %s6, %s7
  %s9 = sld [smem:[#allocation0]]
  $region69: #{encoder_rnn_forward.1} parent=0
    _
  %s11 = ssub.s32 1, %s9
  %s12 = scalar_select 0, %s11, %s9
  loop: start=0, step=1, limit=4
  $region2: #{encoder_rnn_forward.1} parent=0 // loop_pre_header
    _
  $region3: #{encoder_rnn_forward.1} parent=0 // loop_header
    %s14 = sphi 0, %s18
    %p15 = scmp.ge.s32.totalorder %s14, 4
    %s21 = sphi 0, %s33
    %s22 = sphi 0, %s29
    %s23 = sphi 0, %s21
    %s24 = sphi 0, %s22
    %s25 = sphi 0, %s23
    %s26 = sphi 0, %s24
    %s34 = sphi 0, %s34
    %s36 = sphi 0, %s34
    %s37 = sphi 0, %s36
    %s51 = sphi 0, %s37
    %s65 = sphi 0, %s67
    %s68 = sphi 0, %s65
    %s69 = sphi 0, %s68
    %s85 = sphi 0, %s69
    %s91 = sphi 0, %s93
    %s94 = sphi 0, %s91
    %s95 = sphi 0, %s94
    %s111 = sphi 0, %s95
    %s117 = sphi 0, %s119
    %s120 = sphi 0, %s117
    %s121 = sphi 0, %s120
    %s137 = sphi 0, %s121
    %s143 = sphi 0, %s145
    %s146 = sphi 0, %s143
    %s147 = sphi 0, %s146
    %s163 = sphi 0, %s147
    %s169 = sphi 0, %s171
    %s172 = sphi 0, %s169
    %s173 = sphi 0, %s172
    %s189 = sphi 0, %s173
    %s205 = sphi 0, %s207
    %s208 = sphi 0, %s205
    %s209 = sphi 0, %s208
    %s225 = sphi 0, %s209
    %s231 = sphi 0, %s233
    %s234 = sphi 0, %s231
    %s235 = sphi 0, %s234
    %s251 = sphi 0, %s235
  $region4: #{encoder_rnn_forward.1} parent=0 // loop_header_branch
    %17 = sbr.rel (%p15) target = $region8
  $region5: #{encoder_rnn_forward.1} parent=0 // loop_body
    %s19 = ssub.s32 %s14, 1
    %s20 = ssub.s32 %s14, 2
    %s27 = sadd.s32 1, %s22
    %p28 = scmp.ge.s32.totalorder %s27, 1
    %s29 = scalar_select %p28, 0, %s27
    %s30 = sadd.s32 1, %s21
    %s31 = scalar_select %p28, %s30, %s21
    %p32 = scmp.ge.s32.totalorder %s31, 2
    %s33 = scalar_select %p32, 0, %s31
    %s35 = sadd.s32 %s34, 1
    %p38 = scmp.eq.s32.totalorder %s14, 1
    %p39 = scmp.ne.s32.totalorder %s34, %s36
    %p40 = scmp.eq.s32.totalorder %s14, 0
    %p41 = por %p39, %p40
    %p42 = scmp.ne.s32.totalorder %s34, %s36
    %p43 = scmp.eq.s32.totalorder %s19, 1
    %p44 = por %p42, %p43
    %p45 = scmp.ne.s32.totalorder %s36, %s37
    %p46 = scmp.eq.s32.totalorder %s19, 0
    %p47 = por %p45, %p46
    %p48 = scmp.ne.s32.totalorder %s36, %s37
    %p49 = scmp.eq.s32.totalorder %s20, 1
    %p50 = por %p48, %p49
    %p52 = scmp.ne.s32.totalorder %s37, %s51
    %p53 = scmp.eq.s32.totalorder %s20, 0
    %p54 = por %p52, %p53
    %s55 = smul.u32 %s22, 2
    %s56 = ssub.s32 0, %s55
    %s57 = smul.u32 %s21, %s56
    %s58 = sadd.s32 %s22, %s57
    %s59 = smul.u32 %s29, 2
    %s60 = ssub.s32 0, %s59
    %s61 = smul.u32 %s33, %s60
    %s62 = sadd.s32 %s29, %s61
    %s63 = ssub.s32 %s58, %s62
    %p64 = scmp.eq.s32.totalorder %s63, 0
    %s66 = sadd.s32 %s65, 1
    %s67 = scalar_select %p64, %s65, %s66
    %p70 = pneg %p64
    %p71 = scmp.eq.s32.totalorder %s14, 1
    %p72 = por %p70, %p71
    %p73 = scmp.ne.s32.totalorder %s65, %s68
    %p74 = scmp.eq.s32.totalorder %s14, 0
    %p75 = por %p73, %p74
    %p76 = scmp.ne.s32.totalorder %s65, %s68
    %p77 = scmp.eq.s32.totalorder %s19, 1
    %p78 = por %p76, %p77
    %p79 = scmp.ne.s32.totalorder %s68, %s69
    %p80 = scmp.eq.s32.totalorder %s19, 0
    %p81 = por %p79, %p80
    %p82 = scmp.ne.s32.totalorder %s68, %s69
    %p83 = scmp.eq.s32.totalorder %s20, 1
    %p84 = por %p82, %p83
    %p86 = scmp.ne.s32.totalorder %s69, %s85
    %p87 = scmp.eq.s32.totalorder %s20, 0
    %p88 = por %p86, %p87
    %s89 = ssub.s32 %s21, %s33
    %p90 = scmp.eq.s32.totalorder %s89, 0
    %s92 = sadd.s32 %s91, 1
    %s93 = scalar_select %p90, %s91, %s92
    %p96 = pneg %p90
    %p97 = scmp.eq.s32.totalorder %s14, 1
    %p98 = por %p96, %p97
    %p99 = scmp.ne.s32.totalorder %s91, %s94
    %p100 = scmp.eq.s32.totalorder %s14, 0
    %p101 = por %p99, %p100
    %p102 = scmp.ne.s32.totalorder %s91, %s94
    %p103 = scmp.eq.s32.totalorder %s19, 1
    %p104 = por %p102, %p103
    %p105 = scmp.ne.s32.totalorder %s94, %s95
    %p106 = scmp.eq.s32.totalorder %s19, 0
    %p107 = por %p105, %p106
    %p108 = scmp.ne.s32.totalorder %s94, %s95
    %p109 = scmp.eq.s32.totalorder %s20, 1
    %p110 = por %p108, %p109
    %p112 = scmp.ne.s32.totalorder %s95, %s111
    %p113 = scmp.eq.s32.totalorder %s20, 0
    %p114 = por %p112, %p113
    %s115 = ssub.s32 %s21, %s33
    %p116 = scmp.eq.s32.totalorder %s115, 0
    %s118 = sadd.s32 %s117, 1
    %s119 = scalar_select %p116, %s117, %s118
    %p122 = pneg %p116
    %p123 = scmp.eq.s32.totalorder %s14, 1
    %p124 = por %p122, %p123
    %p125 = scmp.ne.s32.totalorder %s117, %s120
    %p126 = scmp.eq.s32.totalorder %s14, 0
    %p127 = por %p125, %p126
    %p128 = scmp.ne.s32.totalorder %s117, %s120
    %p129 = scmp.eq.s32.totalorder %s19, 1
    %p130 = por %p128, %p129
    %p131 = scmp.ne.s32.totalorder %s120, %s121
    %p132 = scmp.eq.s32.totalorder %s19, 0
    %p133 = por %p131, %p132
    %p134 = scmp.ne.s32.totalorder %s120, %s121
    %p135 = scmp.eq.s32.totalorder %s20, 1
    %p136 = por %p134, %p135
    %p138 = scmp.ne.s32.totalorder %s121, %s137
    %p139 = scmp.eq.s32.totalorder %s20, 0
    %p140 = por %p138, %p139
    %s141 = ssub.s32 %s21, %s33
    %p142 = scmp.eq.s32.totalorder %s141, 0
    %s144 = sadd.s32 %s143, 1
    %s145 = scalar_select %p142, %s143, %s144
    %p148 = pneg %p142
    %p149 = scmp.eq.s32.totalorder %s14, 1
    %p150 = por %p148, %p149
    %p151 = scmp.ne.s32.totalorder %s143, %s146
    %p152 = scmp.eq.s32.totalorder %s14, 0
    %p153 = por %p151, %p152
    %p154 = scmp.ne.s32.totalorder %s143, %s146
    %p155 = scmp.eq.s32.totalorder %s19, 1
    %p156 = por %p154, %p155
    %p157 = scmp.ne.s32.totalorder %s146, %s147
    %p158 = scmp.eq.s32.totalorder %s19, 0
    %p159 = por %p157, %p158
    %p160 = scmp.ne.s32.totalorder %s146, %s147
    %p161 = scmp.eq.s32.totalorder %s20, 1
    %p162 = por %p160, %p161
    %p164 = scmp.ne.s32.totalorder %s147, %s163
    %p165 = scmp.eq.s32.totalorder %s20, 0
    %p166 = por %p164, %p165
    %s167 = ssub.s32 %s21, %s33
    %p168 = scmp.eq.s32.totalorder %s167, 0
    %s170 = sadd.s32 %s169, 1
    %s171 = scalar_select %p168, %s169, %s170
    %p174 = pneg %p168
    %p175 = scmp.eq.s32.totalorder %s14, 1
    %p176 = por %p174, %p175
    %p177 = scmp.ne.s32.totalorder %s169, %s172
    %p178 = scmp.eq.s32.totalorder %s14, 0
    %p179 = por %p177, %p178
    %p180 = scmp.ne.s32.totalorder %s169, %s172
    %p181 = scmp.eq.s32.totalorder %s19, 1
    %p182 = por %p180, %p181
    %p183 = scmp.ne.s32.totalorder %s172, %s173
    %p184 = scmp.eq.s32.totalorder %s19, 0
    %p185 = por %p183, %p184
    %p186 = scmp.ne.s32.totalorder %s172, %s173
    %p187 = scmp.eq.s32.totalorder %s20, 1
    %p188 = por %p186, %p187
    %p190 = scmp.ne.s32.totalorder %s173, %s189
    %p191 = scmp.eq.s32.totalorder %s20, 0
    %p192 = por %p190, %p191
    %s193 = smul.u32 %s22, 2
    %s194 = ssub.s32 0, %s193
    %s195 = smul.u32 %s21, %s194
    %s196 = sadd.s32 %s22, %s195
    %s197 = smul.u32 %s29, 2
    %s198 = ssub.s32 0, %s197
    %s199 = smul.u32 %s33, %s198
    %s200 = sadd.s32 %s29, %s199
    %s201 = ssub.s32 %s21, %s33
    %s202 = ssub.s32 %s196, %s200
    %s203 = sor.u32 %s201, %s202
    %p204 = scmp.eq.s32.totalorder %s203, 0
    %s206 = sadd.s32 %s205, 1
    %s207 = scalar_select %p204, %s205, %s206
    %p210 = pneg %p204
    %p211 = scmp.eq.s32.totalorder %s14, 1
    %p212 = por %p210, %p211
    %p213 = scmp.ne.s32.totalorder %s205, %s208
    %p214 = scmp.eq.s32.totalorder %s14, 0
    %p215 = por %p213, %p214
    %p216 = scmp.ne.s32.totalorder %s205, %s208
    %p217 = scmp.eq.s32.totalorder %s19, 1
    %p218 = por %p216, %p217
    %p219 = scmp.ne.s32.totalorder %s208, %s209
    %p220 = scmp.eq.s32.totalorder %s19, 0
    %p221 = por %p219, %p220
    %p222 = scmp.ne.s32.totalorder %s208, %s209
    %p223 = scmp.eq.s32.totalorder %s20, 1
    %p224 = por %p222, %p223
    %p226 = scmp.ne.s32.totalorder %s209, %s225
    %p227 = scmp.eq.s32.totalorder %s20, 0
    %p228 = por %p226, %p227
    %s229 = ssub.s32 %s21, %s33
    %p230 = scmp.eq.s32.totalorder %s229, 0
    %s232 = sadd.s32 %s231, 1
    %s233 = scalar_select %p230, %s231, %s232
    %p236 = pneg %p230
    %p237 = scmp.eq.s32.totalorder %s14, 1
    %p238 = por %p236, %p237
    %p239 = scmp.ne.s32.totalorder %s231, %s234
    %p240 = scmp.eq.s32.totalorder %s14, 0
    %p241 = por %p239, %p240
    %p242 = scmp.ne.s32.totalorder %s231, %s234
    %p243 = scmp.eq.s32.totalorder %s19, 1
    %p244 = por %p242, %p243
    %p245 = scmp.ne.s32.totalorder %s234, %s235
    %p246 = scmp.eq.s32.totalorder %s19, 0
    %p247 = por %p245, %p246
    %p248 = scmp.ne.s32.totalorder %s234, %s235
    %p249 = scmp.eq.s32.totalorder %s20, 1
    %p250 = por %p248, %p249
    %p252 = scmp.ne.s32.totalorder %s235, %s251
    %p253 = scmp.eq.s32.totalorder %s20, 0
    %p254 = por %p252, %p253
    %p255 = scmp.le.s32.totalorder 1, %s14
    %p256 = scmp.lt.s32.totalorder %s14, 3
    %p257 = pnand %p255, %p256
    %p258 = pneg %p257
    // Predicated region
    $region9: #{encoder_rnn_forward.1} parent=5 // pred_check
      _
    $region10: #{encoder_rnn_forward.1} parent=5 // pred_check_branch
      %260 = sbr.rel (%p257) target = $region12
    $region11: #{encoder_rnn_forward.1} parent=5 // pred_region
      %s261 = ssub.s32 %s14, 1
      // Predicated region
      $region13: #{encoder_rnn_forward.1} parent=11 // pred_check
        %p262 = pneg %p47
      $region14: #{encoder_rnn_forward.1} parent=11 // pred_check_branch
        %264 = sbr.rel (%p262) target = $region16
      $region15: #{encoder_rnn_forward.1} parent=11 // pred_region
        _
      $region16: #{encoder_rnn_forward.1} parent=11 // pred_fallthru
        _
      // Predicated region
      $region17: #{encoder_rnn_forward.1} parent=11 // pred_check
        %p265 = pneg %p107
      $region18: #{encoder_rnn_forward.1} parent=11 // pred_check_branch
        %267 = sbr.rel (%p265) target = $region20
      $region19: #{encoder_rnn_forward.1} parent=11 // pred_region
        %p268 = scmp.lt.s32.totalorder %s23, 1
        %s269 = scalar_select %p268, %s23, 1
        %s270 = smul.addr %s269, 48
        %s271 = smul.addr %s270, 8
        %s272 = scalar_lea.vmem %s2, %s271
      $region20: #{encoder_rnn_forward.1} parent=11 // pred_fallthru
        _
      // Predicated region
      $region21: #{encoder_rnn_forward.1} parent=11 // pred_check
        %p273 = pneg %p133
      $region22: #{encoder_rnn_forward.1} parent=11 // pred_check_branch
        %275 = sbr.rel (%p273) target = $region24
      $region23: #{encoder_rnn_forward.1} parent=11 // pred_region
        %p276 = scmp.lt.s32.totalorder %s23, 1
        %s277 = scalar_select %p276, %s23, 1
        %s278 = smul.addr %s277, 48
        %s279 = smul.addr %s278, 8
        %s280 = scalar_lea.vmem %s3, %s279
      $region24: #{encoder_rnn_forward.1} parent=11 // pred_fallthru
        _
      // Predicated region
      $region25: #{encoder_rnn_forward.1} parent=11 // pred_check
        %p281 = pneg %p159
      $region26: #{encoder_rnn_forward.1} parent=11 // pred_check_branch
        %283 = sbr.rel (%p281) target = $region28
      $region27: #{encoder_rnn_forward.1} parent=11 // pred_region
        %p284 = scmp.lt.s32.totalorder %s23, 1
        %s285 = scalar_select %p284, %s23, 1
        %s286 = smul.addr %s285, 3
        %s287 = scalar_lea.vmem %s4, %s286
      $region28: #{encoder_rnn_forward.1} parent=11 // pred_fallthru
        _
      // Predicated region
      $region29: #{encoder_rnn_forward.1} parent=11 // pred_check
        %p288 = pneg %p185
      $region30: #{encoder_rnn_forward.1} parent=11 // pred_check_branch
        %290 = sbr.rel (%p288) target = $region32
      $region31: #{encoder_rnn_forward.1} parent=11 // pred_region
        %p291 = scmp.lt.s32.totalorder %s23, 1
        %s292 = scalar_select %p291, %s23, 1
        %s293 = smul.addr %s292, 3
        %s294 = scalar_lea.vmem %s5, %s293
      $region32: #{encoder_rnn_forward.1} parent=11 // pred_fallthru
        _
    $region12: #{encoder_rnn_forward.1} parent=5 // pred_fallthru
      _
    %p295 = scmp.lt.s32.totalorder %s14, 2
    // Predicated region
    $region33: #{encoder_rnn_forward.1} parent=5 // pred_check
      %p296 = pneg %p295
    $region34: #{encoder_rnn_forward.1} parent=5 // pred_check_branch
      %298 = sbr.rel (%p296) target = $region36
    $region35: #{encoder_rnn_forward.1} parent=5 // pred_region
      // Predicated region
      $region37: #{encoder_rnn_forward.1} parent=35 // pred_check
        %p299 = pneg %p75
      $region38: #{encoder_rnn_forward.1} parent=35 // pred_check_branch
        %301 = sbr.rel (%p299) target = $region40
      $region39: #{encoder_rnn_forward.1} parent=35 // pred_region
        %s302 = smul.u32 %s22, 2
        %s303 = ssub.s32 0, %s302
        %s304 = smul.u32 %s21, %s303
        %s305 = sadd.s32 %s22, %s304
        %s306 = smul.u32 16, %s305
        %p307 = scmp.lt.s32.totalorder %s306, 15
        %s308 = scalar_select %p307, %s306, 15
        %s309 = smul.addr %s308, 8
        %s310 = scalar_lea.vmem %s1, %s309
        %s311 = smul.u32 %s22, 2
        %s312 = ssub.s32 0, %s311
        %s313 = smul.u32 %s21, %s312
        %s314 = sadd.s32 %s22, %s313
        %s315 = smul.u32 16, %s314
      $region40: #{encoder_rnn_forward.1} parent=35 // pred_fallthru
        _
    $region36: #{encoder_rnn_forward.1} parent=5 // pred_fallthru
      _
    %p316 = scmp.le.s32.totalorder 1, %s14
    %p317 = scmp.lt.s32.totalorder %s14, 3
    %p318 = pnand %p316, %p317
    %p319 = pneg %p318
    // Predicated region
    $region41: #{encoder_rnn_forward.1} parent=5 // pred_check
      _
    $region42: #{encoder_rnn_forward.1} parent=5 // pred_check_branch
      %321 = sbr.rel (%p318) target = $region44
    $region43: #{encoder_rnn_forward.1} parent=5 // pred_region
      %s322 = ssub.s32 %s14, 1
      %p323 = pneg %p47
      %p324 = pneg %p44
      %s325 = smul.u32 %s24, 2
      %s326 = ssub.s32 0, %s325
      %s327 = smul.u32 %s23, %s326
      %s328 = sadd.s32 %s24, %s327
      %s329 = smul.u32 16, %s328
      %p330 = scmp.lt.s32.totalorder %s329, 15
      %s331 = scalar_select %p330, %s329, 15
      %s332 = smul.addr %s331, 8
      %s333 = scalar_lea.vmem %s1, %s332
      %p334 = pneg %p81
      %p335 = pneg %p78
      %p336 = scmp.lt.s32.totalorder %s23, 1
      %s337 = scalar_select %p336, %s23, 1
      %s338 = smul.addr %s337, 48
      %s339 = smul.addr %s338, 8
      %s340 = scalar_lea.vmem %s2, %s339
      %p341 = pneg %p107
      %p342 = pneg %p104
      %p343 = scmp.lt.s32.totalorder %s23, 1
      %s344 = scalar_select %p343, %s23, 1
      %s345 = smul.addr %s344, 48
      %s346 = smul.addr %s345, 8
      %s347 = scalar_lea.vmem %s3, %s346
      %p348 = pneg %p133
      %p349 = pneg %p130
      %p350 = scmp.lt.s32.totalorder %s23, 1
      %s351 = scalar_select %p350, %s23, 1
      %s352 = smul.addr %s351, 3
      %s353 = scalar_lea.vmem %s4, %s352
      %p354 = pneg %p159
      %p355 = pneg %p156
      %p356 = scmp.lt.s32.totalorder %s23, 1
      %s357 = scalar_select %p356, %s23, 1
      %s358 = smul.addr %s357, 3
      %s359 = scalar_lea.vmem %s5, %s358
      %p360 = pneg %p185
      %p361 = pneg %p182
      %p362 = pneg %p221
      %p363 = pneg %p218
      %s364 = smul.u32 %s24, 2
      %s365 = ssub.s32 0, %s364
      %s366 = smul.u32 %s23, %s365
      %s367 = sadd.s32 %s24, %s366
      %s368 = smul.u32 16, %s367
      %p369 = scmp.lt.s32.totalorder %s23, 1
      %s370 = scalar_select %p369, %s23, 1
      %p371 = scmp.lt.s32.totalorder %s368, 15
      %s372 = scalar_select %p371, %s368, 15
      %s373 = smul.addr %s370, 16
      %s374 = sadd.s32 %s372, %s373
      %s375 = smul.addr %s374, 8
      %s376 = scalar_lea.vmem %s6, %s375
      %p377 = pneg %p247
      %p378 = pneg %p244
      %p379 = scmp.lt.s32.totalorder %s23, 1
      %s380 = scalar_select %p379, %s23, 1
      %s381 = smul.addr %s380, 8
      %s382 = scalar_lea.vmem %s7, %s381
      %s383 = smul.u32 %s24, 2
      %s384 = ssub.s32 0, %s383
      %s385 = smul.u32 %s23, %s384
      %s386 = sadd.s32 %s24, %s385
      %s387 = smul.u32 16, %s386
      %p388 = scmp.lt.s32.totalorder %s387, 15
      %s389 = scalar_select %p388, %s387, 15
      %s390 = smul.addr %s389, 8
      %s391 = scalar_lea.vmem %s1, %s390
      %s392 = smul.u32 %s24, 2
      %s393 = ssub.s32 0, %s392
      %s394 = smul.u32 %s23, %s393
      %s395 = sadd.s32 %s24, %s394
      %s396 = smul.u32 16, %s395
      %p397 = scmp.lt.s32.totalorder %s23, 1
      %s398 = scalar_select %p397, %s23, 1
      %s399 = smul.addr %s398, 48
      %s400 = smul.addr %s399, 8
      %s401 = scalar_lea.vmem %s2, %s400
      %p402 = scmp.lt.s32.totalorder %s23, 1
      %s403 = scalar_select %p402, %s23, 1
      %s404 = smul.addr %s403, 48
      %s405 = smul.addr %s404, 8
      %s406 = scalar_lea.vmem %s3, %s405
      %p407 = scmp.lt.s32.totalorder %s23, 1
      %s408 = scalar_select %p407, %s23, 1
      %s409 = smul.addr %s408, 3
      %s410 = scalar_lea.vmem %s4, %s409
      %p411 = scmp.lt.s32.totalorder %s23, 1
      %s412 = scalar_select %p411, %s23, 1
      %s413 = smul.addr %s412, 3
      %s414 = scalar_lea.vmem %s5, %s413
      %s415 = smul.u32 %s24, 2
      %s416 = ssub.s32 0, %s415
      %s417 = smul.u32 %s23, %s416
      %s418 = sadd.s32 %s24, %s417
      %s419 = smul.u32 16, %s418
      %p420 = scmp.lt.s32.totalorder %s23, 1
      %s421 = scalar_select %p420, %s23, 1
      %p422 = scmp.lt.s32.totalorder %s419, 15
      %s423 = scalar_select %p422, %s419, 15
      %s424 = smul.addr %s421, 16
      %s425 = sadd.s32 %s423, %s424
      %s426 = smul.addr %s425, 8
      %s427 = scalar_lea.vmem %s6, %s426
      %s428 = smul.u32 %s24, 2
      %s429 = ssub.s32 0, %s428
      %s430 = smul.u32 %s23, %s429
      %s431 = sadd.s32 %s24, %s430
      %s432 = smul.u32 16, %s431
      %p433 = scmp.lt.s32.totalorder %s23, 1
      %s434 = scalar_select %p433, %s23, 1
      %s435 = smul.addr %s434, 8
      %s436 = scalar_lea.vmem %s7, %s435
      %p437 = scmp.eq.s32.totalorder %s24, 0
      // Predicated region
      $region45: #{encoder_rnn_forward.1} parent=43 // pred_check
        %p438 = pneg %p437
      $region46: #{encoder_rnn_forward.1} parent=43 // pred_check_branch
        %440 = sbr.rel (%p438) target = $region48
      $region47: #{encoder_rnn_forward.1} parent=43 // pred_region
        %441 = vst [vmem:[%s436] sm:$0xff] 0.0
      $region48: #{encoder_rnn_forward.1} parent=43 // pred_fallthru
        _
      %v442 = vld [vmem:[%s391] sm:$0xff]
      %v443 = vld [vmem:[%s391 + $0x8] sm:$0xff]
      %v444 = vld [vmem:[%s391 + $0x10] sm:$0xff]
      %v445 = vld [vmem:[%s391 + $0x18] sm:$0xff]
      %v446 = vld [vmem:[%s391 + $0x20] sm:$0xff]
      %v447 = vld [vmem:[%s391 + $0x28] sm:$0xff]
      %v448 = vld [vmem:[%s391 + $0x30] sm:$0xff]
      %v449 = vld [vmem:[%s391 + $0x38] sm:$0xff]
      %v450 = vld [vmem:[%s391 + $0x40] sm:$0xff]
      %v451 = vld [vmem:[%s391 + $0x48] sm:$0xff]
      %v452 = vld [vmem:[%s391 + $0x50] sm:$0xff]
      %v453 = vld [vmem:[%s391 + $0x58] sm:$0xff]
      %v454 = vld [vmem:[%s391 + $0x60] sm:$0xff]
      %v455 = vld [vmem:[%s391 + $0x68] sm:$0xff]
      %v456 = vld [vmem:[%s391 + $0x70] sm:$0xff]
      %v457 = vld [vmem:[%s391 + $0x78] sm:$0xff]
      %v458 = vld [vmem:[%s401] sm:$0xff]
      %v459 = vld [vmem:[%s401 + $0x8] sm:$0xff]
      %v460 = vld [vmem:[%s401 + $0x10] sm:$0xff]
      %v461 = vld [vmem:[%s401 + $0x18] sm:$0xff]
      %v462 = vld [vmem:[%s401 + $0x20] sm:$0xff]
      %v463 = vld [vmem:[%s401 + $0x28] sm:$0xff]
      %v464 = vld [vmem:[%s401 + $0x30] sm:$0xff]
      %v465 = vld [vmem:[%s401 + $0x38] sm:$0xff]
      %v466 = vld [vmem:[%s401 + $0x40] sm:$0xff]
      %v467 = vld [vmem:[%s401 + $0x48] sm:$0xff]
      %v468 = vld [vmem:[%s401 + $0x50] sm:$0xff]
      %v469 = vld [vmem:[%s401 + $0x58] sm:$0xff]
      %v470 = vld [vmem:[%s401 + $0x60] sm:$0xff]
      %v471 = vld [vmem:[%s401 + $0x68] sm:$0xff]
      %v472 = vld [vmem:[%s401 + $0x70] sm:$0xff]
      %v473 = vld [vmem:[%s401 + $0x78] sm:$0xff]
      %v474 = vld [vmem:[%s401 + $0x80] sm:$0xff]
      %v475 = vld [vmem:[%s401 + $0x88] sm:$0xff]
      %v476 = vld [vmem:[%s401 + $0x90] sm:$0xff]
      %v477 = vld [vmem:[%s401 + $0x98] sm:$0xff]
      %v478 = vld [vmem:[%s401 + $0xa0] sm:$0xff]
      %v479 = vld [vmem:[%s401 + $0xa8] sm:$0xff]
      %v480 = vld [vmem:[%s401 + $0xb0] sm:$0xff]
      %v481 = vld [vmem:[%s401 + $0xb8] sm:$0xff]
      %v482 = vld [vmem:[%s401 + $0xc0] sm:$0xff]
      %v483 = vld [vmem:[%s401 + $0xc8] sm:$0xff]
      %v484 = vld [vmem:[%s401 + $0xd0] sm:$0xff]
      %v485 = vld [vmem:[%s401 + $0xd8] sm:$0xff]
      %v486 = vld [vmem:[%s401 + $0xe0] sm:$0xff]
      %v487 = vld [vmem:[%s401 + $0xe8] sm:$0xff]
      %v488 = vld [vmem:[%s401 + $0xf0] sm:$0xff]
      %v489 = vld [vmem:[%s401 + $0xf8] sm:$0xff]
      %v490 = vld [vmem:[%s401 + $0x100] sm:$0xff]
      %v491 = vld [vmem:[%s401 + $0x108] sm:$0xff]
      %v492 = vld [vmem:[%s401 + $0x110] sm:$0xff]
      %v493 = vld [vmem:[%s401 + $0x118] sm:$0xff]
      %v494 = vld [vmem:[%s401 + $0x120] sm:$0xff]
      %v495 = vld [vmem:[%s401 + $0x128] sm:$0xff]
      %v496 = vld [vmem:[%s401 + $0x130] sm:$0xff]
      %v497 = vld [vmem:[%s401 + $0x138] sm:$0xff]
      %v498 = vld [vmem:[%s401 + $0x140] sm:$0xff]
      %v499 = vld [vmem:[%s401 + $0x148] sm:$0xff]
      %v500 = vld [vmem:[%s401 + $0x150] sm:$0xff]
      %v501 = vld [vmem:[%s401 + $0x158] sm:$0xff]
      %v502 = vld [vmem:[%s401 + $0x160] sm:$0xff]
      %v503 = vld [vmem:[%s401 + $0x168] sm:$0xff]
      %v504 = vld [vmem:[%s401 + $0x170] sm:$0xff]
      %v505 = vld [vmem:[%s401 + $0x178] sm:$0xff]
      %v506 = vld [vmem:[%s410] sm:$0x7]
      %v508 = vlaneseq
      %v509 = vshrl.u32 %v508, 7
      %v510 = vsub.s32 0, %v509
      %v511 = vrot.slane %v506, %v510
      %v512 = vlaneseq
      %v513 = vshrl.u32 %v512, 7
      %v514 = vsub.s32 1, %v513
      %v515 = vrot.slane %v506, %v514
      %v516 = vlaneseq
      %v517 = vshrl.u32 %v516, 7
      %v518 = vsub.s32 2, %v517
      %v519 = vrot.slane %v506, %v518
      %523 = vmatprep.subr.mxu0 %v459
      %524 = vmatpush1.msra.mxu0 %v458
      %525 = vmatprep.subr.mxu0 %v462
      %526 = vmatpush1.msra.mxu0 %v461
      %527 = vmatprep.subr.mxu0 %v465
      %528 = vmatpush1.msra.mxu0 %v464
      %529 = vmatprep.subr.mxu0 %v468
      %530 = vmatpush1.msra.mxu0 %v467
      %531 = vmatprep.subr.mxu0 %v471
      %532 = vmatpush1.msra.mxu0 %v470
      %533 = vmatprep.subr.mxu0 %v474
      %534 = vmatpush1.msra.mxu0 %v473
      %535 = vmatprep.subr.mxu0 %v477
      %536 = vmatpush1.msra.mxu0 %v476
      %537 = vmatprep.subr.mxu0 %v480
      %538 = vmatpush1.msra.mxu0 %v479
      %539 = vmatprep.subr.mxu0 %v483
      %540 = vmatpush1.msra.mxu0 %v482
      %541 = vmatprep.subr.mxu0 %v486
      %542 = vmatpush1.msra.mxu0 %v485
      %543 = vmatprep.subr.mxu0 %v489
      %544 = vmatpush1.msra.mxu0 %v488
      %545 = vmatprep.subr.mxu0 %v492
      %546 = vmatpush1.msra.mxu0 %v491
      %547 = vmatprep.subr.mxu0 %v495
      %548 = vmatpush1.msra.mxu0 %v494
      %549 = vmatprep.subr.mxu0 %v498
      %550 = vmatpush1.msra.mxu0 %v497
      %551 = vmatprep.subr.mxu0 %v501
      %552 = vmatpush1.msra.mxu0 %v500
      %553 = vmatprep.subr.mxu0 %v504
      %554 = vmatpush1.msra.mxu0 %v503
      %555 = vmatprep.subr.mxu0 0.0
      %556 = vmatpush1.msra.mxu0 0.0
      %557 = vmatprep.subr.mxu0 0.0
      %558 = vmatpush1.msra.mxu0 0.0
      %559 = vmatprep.subr.mxu0 0.0
      %560 = vmatpush1.msra.mxu0 0.0
      %561 = vmatprep.subr.mxu0 0.0
      %562 = vmatpush1.msra.mxu0 0.0
      %563 = vmatprep.subr.mxu0 0.0
      %564 = vmatpush1.msra.mxu0 0.0
      %565 = vmatprep.subr.mxu0 0.0
      %566 = vmatpush1.msra.mxu0 0.0
      %567 = vmatprep.subr.mxu0 0.0
      %568 = vmatpush1.msra.mxu0 0.0
      %569 = vmatprep.subr.mxu0 0.0
      %570 = vmatpush1.msra.mxu0 0.0
      %571 = vmatprep.subr.mxu0 0.0
      %572 = vmatpush1.msra.mxu0 0.0
      %573 = vmatprep.subr.mxu0 0.0
      %574 = vmatpush1.msra.mxu0 0.0
      %575 = vmatprep.subr.mxu0 0.0
      %576 = vmatpush1.msra.mxu0 0.0
      %577 = vmatprep.subr.mxu0 0.0
      %578 = vmatpush1.msra.mxu0 0.0
      %579 = vmatprep.subr.mxu0 0.0
      %580 = vmatpush1.msra.mxu0 0.0
      %581 = vmatprep.subr.mxu0 0.0
      %582 = vmatpush1.msra.mxu0 0.0
      %583 = vmatprep.subr.mxu0 0.0
      %584 = vmatpush1.msra.mxu0 0.0
      %585 = vmatprep.subr.mxu0 0.0
      %586 = vmatpush1.msra.mxu0 0.0
      %587 = vmatprep.mubr.f32.mxu0 0.0
      %588 = vmatmul.mubr.f32.gmra.mrb[0].mxu0 %v442
      %v589 = vpop.f32.mrb[0].mxu0
      %v590 = vadd.f32 %v511, %v589
      %v591 = vpop.f32.mrb[0].mxu0
      %v592 = vadd.f32 %v515, %v591
      %593 = vmatprep.mubr.f32.mxu0 0.0
      %594 = vmatmul.mubr.f32.gmra.mrb[0].mxu0 %v443
      %v595 = vpop.f32.mrb[0].mxu0
      %v596 = vadd.f32 %v511, %v595
      %v597 = vpop.f32.mrb[0].mxu0
      %v598 = vadd.f32 %v515, %v597
      %599 = vmatprep.mubr.f32.mxu0 0.0
      %600 = vmatmul.mubr.f32.gmra.mrb[0].mxu0 %v444
      %v601 = vpop.f32.mrb[0].mxu0
      %v602 = vadd.f32 %v511, %v601
      %v603 = vpop.f32.mrb[0].mxu0
      %v604 = vadd.f32 %v515, %v603
      %605 = vmatprep.mubr.f32.mxu0 0.0
      %606 = vmatmul.mubr.f32.gmra.mrb[0].mxu0 %v445
      %v607 = vpop.f32.mrb[0].mxu0
      %v608 = vadd.f32 %v511, %v607
      %v609 = vpop.f32.mrb[0].mxu0
      %v610 = vadd.f32 %v515, %v609
      %611 = vmatprep.mubr.f32.mxu0 0.0
      %612 = vmatmul.mubr.f32.gmra.mrb[0].mxu0 %v446
      %v613 = vpop.f32.mrb[0].mxu0
      %v614 = vadd.f32 %v511, %v613
      %v615 = vpop.f32.mrb[0].mxu0
      %v616 = vadd.f32 %v515, %v615
      %617 = vmatprep.mubr.f32.mxu0 0.0
      %618 = vmatmul.mubr.f32.gmra.mrb[0].mxu0 %v447
      %v619 = vpop.f32.mrb[0].mxu0
      %v620 = vadd.f32 %v511, %v619
      %v621 = vpop.f32.mrb[0].mxu0
      %v622 = vadd.f32 %v515, %v621
      %623 = vmatprep.mubr.f32.mxu0 0.0
      %624 = vmatmul.mubr.f32.gmra.mrb[0].mxu0 %v448
      %v625 = vpop.f32.mrb[0].mxu0
      %v626 = vadd.f32 %v511, %v625
      %v627 = vpop.f32.mrb[0].mxu0
      %v628 = vadd.f32 %v515, %v627
      %629 = vmatprep.mubr.f32.mxu0 0.0
      %630 = vmatmul.mubr.f32.gmra.mrb[0].mxu0 %v449
      %v631 = vpop.f32.mrb[0].mxu0
      %v632 = vadd.f32 %v511, %v631
      %v633 = vpop.f32.mrb[0].mxu0
      %v634 = vadd.f32 %v515, %v633
      %635 = vmatprep.mubr.f32.mxu0 0.0
      %636 = vmatmul.mubr.f32.gmra.mrb[0].mxu0 %v450
      %v637 = vpop.f32.mrb[0].mxu0
      %v638 = vadd.f32 %v511, %v637
      %v639 = vpop.f32.mrb[0].mxu0
      %v640 = vadd.f32 %v515, %v639
      %641 = vmatprep.mubr.f32.mxu0 0.0
      %642 = vmatmul.mubr.f32.gmra.mrb[0].mxu0 %v451
      %v643 = vpop.f32.mrb[0].mxu0
      %v644 = vadd.f32 %v511, %v643
      %v645 = vpop.f32.mrb[0].mxu0
      %v646 = vadd.f32 %v515, %v645
      %647 = vmatprep.mubr.f32.mxu0 0.0
      %648 = vmatmul.mubr.f32.gmra.mrb[0].mxu0 %v452
      %v649 = vpop.f32.mrb[0].mxu0
      %v650 = vadd.f32 %v511, %v649
      %v651 = vpop.f32.mrb[0].mxu0
      %v652 = vadd.f32 %v515, %v651
      %653 = vmatprep.mubr.f32.mxu0 0.0
      %654 = vmatmul.mubr.f32.gmra.mrb[0].mxu0 %v453
      %v655 = vpop.f32.mrb[0].mxu0
      %v656 = vadd.f32 %v511, %v655
      %v657 = vpop.f32.mrb[0].mxu0
      %v658 = vadd.f32 %v515, %v657
      %659 = vmatprep.mubr.f32.mxu0 0.0
      %660 = vmatmul.mubr.f32.gmra.mrb[0].mxu0 %v454
      %v661 = vpop.f32.mrb[0].mxu0
      %v662 = vadd.f32 %v511, %v661
      %v663 = vpop.f32.mrb[0].mxu0
      %v664 = vadd.f32 %v515, %v663
      %665 = vmatprep.mubr.f32.mxu0 0.0
      %666 = vmatmul.mubr.f32.gmra.mrb[0].mxu0 %v455
      %v667 = vpop.f32.mrb[0].mxu0
      %v668 = vadd.f32 %v511, %v667
      %v669 = vpop.f32.mrb[0].mxu0
      %v670 = vadd.f32 %v515, %v669
      %671 = vmatprep.mubr.f32.mxu0 0.0
      %672 = vmatmul.mubr.f32.gmra.mrb[0].mxu0 %v456
      %v673 = vpop.f32.mrb[0].mxu0
      %v674 = vadd.f32 %v511, %v673
      %v675 = vpop.f32.mrb[0].mxu0
      %v676 = vadd.f32 %v515, %v675
      %677 = vmatprep.mubr.f32.mxu0 0.0
      %678 = vmatmul.mubr.f32.gmra.mrb[0].mxu0 %v457
      %v679 = vpop.f32.mrb[0].mxu0
      %v680 = vadd.f32 %v511, %v679
      %v681 = vpop.f32.mrb[0].mxu0
      %v682 = vadd.f32 %v515, %v681
      %683 = vdwg.mxu0
      %684 = vmatprep.subr.mxu0 0.0
      %685 = vmatpush1.msra.mxu0 %v460
      %686 = vmatprep.subr.mxu0 0.0
      %687 = vmatpush1.msra.mxu0 %v463
      %688 = vmatprep.subr.mxu0 0.0
      %689 = vmatpush1.msra.mxu0 %v466
      %690 = vmatprep.subr.mxu0 0.0
      %691 = vmatpush1.msra.mxu0 %v469
      %692 = vmatprep.subr.mxu0 0.0
      %693 = vmatpush1.msra.mxu0 %v472
      %694 = vmatprep.subr.mxu0 0.0
      %695 = vmatpush1.msra.mxu0 %v475
      %696 = vmatprep.subr.mxu0 0.0
      %697 = vmatpush1.msra.mxu0 %v478
      %698 = vmatprep.subr.mxu0 0.0
      %699 = vmatpush1.msra.mxu0 %v481
      %700 = vmatprep.subr.mxu0 0.0
      %701 = vmatpush1.msra.mxu0 %v484
      %702 = vmatprep.subr.mxu0 0.0
      %703 = vmatpush1.msra.mxu0 %v487
      %704 = vmatprep.subr.mxu0 0.0
      %705 = vmatpush1.msra.mxu0 %v490
      %706 = vmatprep.subr.mxu0 0.0
      %707 = vmatpush1.msra.mxu0 %v493
      %708 = vmatprep.subr.mxu0 0.0
      %709 = vmatpush1.msra.mxu0 %v496
      %710 = vmatprep.subr.mxu0 0.0
      %711 = vmatpush1.msra.mxu0 %v499
      %712 = vmatprep.subr.mxu0 0.0
      %713 = vmatpush1.msra.mxu0 %v502
      %714 = vmatprep.subr.mxu0 0.0
      %715 = vmatpush1.msra.mxu0 %v505
      %716 = vmatprep.subr.mxu0 0.0
      %717 = vmatpush1.msra.mxu0 0.0
      %718 = vmatprep.subr.mxu0 0.0
      %719 = vmatpush1.msra.mxu0 0.0
      %720 = vmatprep.subr.mxu0 0.0
      %721 = vmatpush1.msra.mxu0 0.0
      %722 = vmatprep.subr.mxu0 0.0
      %723 = vmatpush1.msra.mxu0 0.0
      %724 = vmatprep.subr.mxu0 0.0
      %725 = vmatpush1.msra.mxu0 0.0
      %726 = vmatprep.subr.mxu0 0.0
      %727 = vmatpush1.msra.mxu0 0.0
      %728 = vmatprep.subr.mxu0 0.0
      %729 = vmatpush1.msra.mxu0 0.0
      %730 = vmatprep.subr.mxu0 0.0
      %731 = vmatpush1.msra.mxu0 0.0
      %732 = vmatprep.subr.mxu0 0.0
      %733 = vmatpush1.msra.mxu0 0.0
      %734 = vmatprep.subr.mxu0 0.0
      %735 = vmatpush1.msra.mxu0 0.0
      %736 = vmatprep.subr.mxu0 0.0
      %737 = vmatpush1.msra.mxu0 0.0
      %738 = vmatprep.subr.mxu0 0.0
      %739 = vmatpush1.msra.mxu0 0.0
      %740 = vmatprep.subr.mxu0 0.0
      %741 = vmatpush1.msra.mxu0 0.0
      %742 = vmatprep.subr.mxu0 0.0
      %743 = vmatpush1.msra.mxu0 0.0
      %744 = vmatprep.subr.mxu0 0.0
      %745 = vmatpush1.msra.mxu0 0.0
      %746 = vmatprep.subr.mxu0 0.0
      %747 = vmatpush1.msra.mxu0 0.0
      %748 = vmatprep.mubr.f32.mxu0 0.0
      %749 = vmatmul.mubr.f32.gmra.mrb[0].mxu0 %v442
      %v750 = vpop.f32.mrb[0].mxu0
      %v751 = vadd.f32 %v519, %v750
      %v752 = vpop.f32.mrb[0].mxu0
      %753 = vmatprep.mubr.f32.mxu0 0.0
      %754 = vmatmul.mubr.f32.gmra.mrb[0].mxu0 %v443
      %v755 = vpop.f32.mrb[0].mxu0
      %v756 = vadd.f32 %v519, %v755
      %v757 = vpop.f32.mrb[0].mxu0
      %758 = vmatprep.mubr.f32.mxu0 0.0
      %759 = vmatmul.mubr.f32.gmra.mrb[0].mxu0 %v444
      %v760 = vpop.f32.mrb[0].mxu0
      %v761 = vadd.f32 %v519, %v760
      %v762 = vpop.f32.mrb[0].mxu0
      %763 = vmatprep.mubr.f32.mxu0 0.0
      %764 = vmatmul.mubr.f32.gmra.mrb[0].mxu0 %v445
      %v765 = vpop.f32.mrb[0].mxu0
      %v766 = vadd.f32 %v519, %v765
      %v767 = vpop.f32.mrb[0].mxu0
      %768 = vmatprep.mubr.f32.mxu0 0.0
      %769 = vmatmul.mubr.f32.gmra.mrb[0].mxu0 %v446
      %v770 = vpop.f32.mrb[0].mxu0
      %v771 = vadd.f32 %v519, %v770
      %v772 = vpop.f32.mrb[0].mxu0
      %773 = vmatprep.mubr.f32.mxu0 0.0
      %774 = vmatmul.mubr.f32.gmra.mrb[0].mxu0 %v447
      %v775 = vpop.f32.mrb[0].mxu0
      %v776 = vadd.f32 %v519, %v775
      %v777 = vpop.f32.mrb[0].mxu0
      %778 = vmatprep.mubr.f32.mxu0 0.0
      %779 = vmatmul.mubr.f32.gmra.mrb[0].mxu0 %v448
      %v780 = vpop.f32.mrb[0].mxu0
      %v781 = vadd.f32 %v519, %v780
      %v782 = vpop.f32.mrb[0].mxu0
      %783 = vmatprep.mubr.f32.mxu0 0.0
      %784 = vmatmul.mubr.f32.gmra.mrb[0].mxu0 %v449
      %v785 = vpop.f32.mrb[0].mxu0
      %v786 = vadd.f32 %v519, %v785
      %v787 = vpop.f32.mrb[0].mxu0
      %788 = vmatprep.mubr.f32.mxu0 0.0
      %789 = vmatmul.mubr.f32.gmra.mrb[0].mxu0 %v450
      %v790 = vpop.f32.mrb[0].mxu0
      %v791 = vadd.f32 %v519, %v790
      %v792 = vpop.f32.mrb[0].mxu0
      %793 = vmatprep.mubr.f32.mxu0 0.0
      %794 = vmatmul.mubr.f32.gmra.mrb[0].mxu0 %v451
      %v795 = vpop.f32.mrb[0].mxu0
      %v796 = vadd.f32 %v519, %v795
      %v797 = vpop.f32.mrb[0].mxu0
      %798 = vmatprep.mubr.f32.mxu0 0.0
      %799 = vmatmul.mubr.f32.gmra.mrb[0].mxu0 %v452
      %v800 = vpop.f32.mrb[0].mxu0
      %v801 = vadd.f32 %v519, %v800
      %v802 = vpop.f32.mrb[0].mxu0
      %803 = vmatprep.mubr.f32.mxu0 0.0
      %804 = vmatmul.mubr.f32.gmra.mrb[0].mxu0 %v453
      %v805 = vpop.f32.mrb[0].mxu0
      %v806 = vadd.f32 %v519, %v805
      %v807 = vpop.f32.mrb[0].mxu0
      %808 = vmatprep.mubr.f32.mxu0 0.0
      %809 = vmatmul.mubr.f32.gmra.mrb[0].mxu0 %v454
      %v810 = vpop.f32.mrb[0].mxu0
      %v811 = vadd.f32 %v519, %v810
      %v812 = vpop.f32.mrb[0].mxu0
      %813 = vmatprep.mubr.f32.mxu0 0.0
      %814 = vmatmul.mubr.f32.gmra.mrb[0].mxu0 %v455
      %v815 = vpop.f32.mrb[0].mxu0
      %v816 = vadd.f32 %v519, %v815
      %v817 = vpop.f32.mrb[0].mxu0
      %818 = vmatprep.mubr.f32.mxu0 0.0
      %819 = vmatmul.mubr.f32.gmra.mrb[0].mxu0 %v456
      %v820 = vpop.f32.mrb[0].mxu0
      %v821 = vadd.f32 %v519, %v820
      %v822 = vpop.f32.mrb[0].mxu0
      %823 = vmatprep.mubr.f32.mxu0 0.0
      %824 = vmatmul.mubr.f32.gmra.mrb[0].mxu0 %v457
      %v825 = vpop.f32.mrb[0].mxu0
      %v826 = vadd.f32 %v519, %v825
      %v827 = vpop.f32.mrb[0].mxu0
      %828 = vdwg.mxu0
      %829 = vst [vmem:[#allocation2] sm:$0xff] %v590
      %830 = vst [vmem:[#allocation2 + $0x8] sm:$0xff] %v592
      %831 = vst [vmem:[#allocation2 + $0x10] sm:$0xff] %v751
      %832 = vst [vmem:[#allocation2 + $0x18] sm:$0xff] %v596
      %833 = vst [vmem:[#allocation2 + $0x20] sm:$0xff] %v598
      %834 = vst [vmem:[#allocation2 + $0x28] sm:$0xff] %v756
      %835 = vst [vmem:[#allocation2 + $0x30] sm:$0xff] %v602
      %836 = vst [vmem:[#allocation2 + $0x38] sm:$0xff] %v604
      %837 = vst [vmem:[#allocation2 + $0x40] sm:$0xff] %v761
      %838 = vst [vmem:[#allocation2 + $0x48] sm:$0xff] %v608
      %839 = vst [vmem:[#allocation2 + $0x50] sm:$0xff] %v610
      %840 = vst [vmem:[#allocation2 + $0x58] sm:$0xff] %v766
      %841 = vst [vmem:[#allocation2 + $0x60] sm:$0xff] %v614
      %842 = vst [vmem:[#allocation2 + $0x68] sm:$0xff] %v616
      %843 = vst [vmem:[#allocation2 + $0x70] sm:$0xff] %v771
      %844 = vst [vmem:[#allocation2 + $0x78] sm:$0xff] %v620
      %845 = vst [vmem:[#allocation2 + $0x80] sm:$0xff] %v622
      %846 = vst [vmem:[#allocation2 + $0x88] sm:$0xff] %v776
      %847 = vst [vmem:[#allocation2 + $0x90] sm:$0xff] %v626
      %848 = vst [vmem:[#allocation2 + $0x98] sm:$0xff] %v628
      %849 = vst [vmem:[#allocation2 + $0xa0] sm:$0xff] %v781
      %850 = vst [vmem:[#allocation2 + $0xa8] sm:$0xff] %v632
      %851 = vst [vmem:[#allocation2 + $0xb0] sm:$0xff] %v634
      %852 = vst [vmem:[#allocation2 + $0xb8] sm:$0xff] %v786
      %853 = vst [vmem:[#allocation2 + $0xc0] sm:$0xff] %v638
      %854 = vst [vmem:[#allocation2 + $0xc8] sm:$0xff] %v640
      %855 = vst [vmem:[#allocation2 + $0xd0] sm:$0xff] %v791
      %856 = vst [vmem:[#allocation2 + $0xd8] sm:$0xff] %v644
      %857 = vst [vmem:[#allocation2 + $0xe0] sm:$0xff] %v646
      %858 = vst [vmem:[#allocation2 + $0xe8] sm:$0xff] %v796
      %859 = vst [vmem:[#allocation2 + $0xf0] sm:$0xff] %v650
      %860 = vst [vmem:[#allocation2 + $0xf8] sm:$0xff] %v652
      %861 = vst [vmem:[#allocation2 + $0x100] sm:$0xff] %v801
      %862 = vst [vmem:[#allocation2 + $0x108] sm:$0xff] %v656
      %863 = vst [vmem:[#allocation2 + $0x110] sm:$0xff] %v658
      %864 = vst [vmem:[#allocation2 + $0x118] sm:$0xff] %v806
      %865 = vst [vmem:[#allocation2 + $0x120] sm:$0xff] %v662
      %866 = vst [vmem:[#allocation2 + $0x128] sm:$0xff] %v664
      %867 = vst [vmem:[#allocation2 + $0x130] sm:$0xff] %v811
      %868 = vst [vmem:[#allocation2 + $0x138] sm:$0xff] %v668
      %869 = vst [vmem:[#allocation2 + $0x140] sm:$0xff] %v670
      %870 = vst [vmem:[#allocation2 + $0x148] sm:$0xff] %v816
      %871 = vst [vmem:[#allocation2 + $0x150] sm:$0xff] %v674
      %872 = vst [vmem:[#allocation2 + $0x158] sm:$0xff] %v676
      %873 = vst [vmem:[#allocation2 + $0x160] sm:$0xff] %v821
      %874 = vst [vmem:[#allocation2 + $0x168] sm:$0xff] %v680
      %875 = vst [vmem:[#allocation2 + $0x170] sm:$0xff] %v682
      %876 = vst [vmem:[#allocation2 + $0x178] sm:$0xff] %v826
      %v877 = vld [vmem:[%s0] sm:$0xff]
      %v878 = vld [vmem:[%s406] sm:$0xff]
      %v879 = vld [vmem:[%s406 + $0x8] sm:$0xff]
      %v880 = vld [vmem:[%s406 + $0x10] sm:$0xff]
      %v881 = vld [vmem:[%s406 + $0x18] sm:$0xff]
      %v882 = vld [vmem:[%s406 + $0x20] sm:$0xff]
      %v883 = vld [vmem:[%s406 + $0x28] sm:$0xff]
      %v884 = vld [vmem:[%s406 + $0x30] sm:$0xff]
      %v885 = vld [vmem:[%s406 + $0x38] sm:$0xff]
      %v886 = vld [vmem:[%s406 + $0x40] sm:$0xff]
      %v887 = vld [vmem:[%s406 + $0x48] sm:$0xff]
      %v888 = vld [vmem:[%s406 + $0x50] sm:$0xff]
      %v889 = vld [vmem:[%s406 + $0x58] sm:$0xff]
      %v890 = vld [vmem:[%s406 + $0x60] sm:$0xff]
      %v891 = vld [vmem:[%s406 + $0x68] sm:$0xff]
      %v892 = vld [vmem:[%s406 + $0x70] sm:$0xff]
      %v893 = vld [vmem:[%s406 + $0x78] sm:$0xff]
      %v894 = vld [vmem:[%s406 + $0x80] sm:$0xff]
      %v895 = vld [vmem:[%s406 + $0x88] sm:$0xff]
      %v896 = vld [vmem:[%s406 + $0x90] sm:$0xff]
      %v897 = vld [vmem:[%s406 + $0x98] sm:$0xff]
      %v898 = vld [vmem:[%s406 + $0xa0] sm:$0xff]
      %v899 = vld [vmem:[%s406 + $0xa8] sm:$0xff]
      %v900 = vld [vmem:[%s406 + $0xb0] sm:$0xff]
      %v901 = vld [vmem:[%s406 + $0xb8] sm:$0xff]
      %v902 = vld [vmem:[%s406 + $0xc0] sm:$0xff]
      %v903 = vld [vmem:[%s406 + $0xc8] sm:$0xff]
      %v904 = vld [vmem:[%s406 + $0xd0] sm:$0xff]
      %v905 = vld [vmem:[%s406 + $0xd8] sm:$0xff]
      %v906 = vld [vmem:[%s406 + $0xe0] sm:$0xff]
      %v907 = vld [vmem:[%s406 + $0xe8] sm:$0xff]
      %v908 = vld [vmem:[%s406 + $0xf0] sm:$0xff]
      %v909 = vld [vmem:[%s406 + $0xf8] sm:$0xff]
      %v910 = vld [vmem:[%s406 + $0x100] sm:$0xff]
      %v911 = vld [vmem:[%s406 + $0x108] sm:$0xff]
      %v912 = vld [vmem:[%s406 + $0x110] sm:$0xff]
      %v913 = vld [vmem:[%s406 + $0x118] sm:$0xff]
      %v914 = vld [vmem:[%s406 + $0x120] sm:$0xff]
      %v915 = vld [vmem:[%s406 + $0x128] sm:$0xff]
      %v916 = vld [vmem:[%s406 + $0x130] sm:$0xff]
      %v917 = vld [vmem:[%s406 + $0x138] sm:$0xff]
      %v918 = vld [vmem:[%s406 + $0x140] sm:$0xff]
      %v919 = vld [vmem:[%s406 + $0x148] sm:$0xff]
      %v920 = vld [vmem:[%s406 + $0x150] sm:$0xff]
      %v921 = vld [vmem:[%s406 + $0x158] sm:$0xff]
      %v922 = vld [vmem:[%s406 + $0x160] sm:$0xff]
      %v923 = vld [vmem:[%s406 + $0x168] sm:$0xff]
      %v924 = vld [vmem:[%s406 + $0x170] sm:$0xff]
      %v925 = vld [vmem:[%s406 + $0x178] sm:$0xff]
      %v926 = vld [vmem:[%s414] sm:$0x7]
      %v927 = vld [vmem:[%s436] sm:$0xff]
      %s928 = smul.u32 %s24, 16
      %s929 = smul.u32 %s24, 32
      %s930 = ssub.s32 15, %s929
      %s931 = smul.u32 %s23, %s930
      %s932 = sadd.s32 %s928, %s931
      %s933 = smul.u32 %s23, 120
      %s934 = sshra.s32 %s933, 3
      %s935 = sand.u32 %s933, 7
      %s936 = smul.u32 %s934, 3
      %s937 = smul.addr %s936, 8
      %s938 = scalar_lea.vmem [#allocation2], %s937
      %v939 = vld [vmem:[%s938] sm:$0xff]
      %v940 = vld [vmem:[%s938 + $0x8] sm:$0xff]
      %v941 = vld [vmem:[%s938 + $0x10] sm:$0xff]
      %v943 = vlaneseq
      %v944 = vshrl.u32 %v943, 7
      %v945 = vsub.s32 0, %v944
      %v946 = vrot.slane %v926, %v945
      %v947 = vlaneseq
      %v948 = vshrl.u32 %v947, 7
      %v949 = vsub.s32 1, %v948
      %v950 = vrot.slane %v926, %v949
      %v951 = vlaneseq
      %v952 = vshrl.u32 %v951, 7
      %v953 = vsub.s32 2, %v952
      %v954 = vrot.slane %v926, %v953
      %958 = vmatprep.subr.mxu0 %v879
      %959 = vmatpush1.msra.mxu0 %v878
      %960 = vmatprep.subr.mxu0 %v882
      %961 = vmatpush1.msra.mxu0 %v881
      %962 = vmatprep.subr.mxu0 %v885
      %963 = vmatpush1.msra.mxu0 %v884
      %964 = vmatprep.subr.mxu0 %v888
      %965 = vmatpush1.msra.mxu0 %v887
      %966 = vmatprep.subr.mxu0 %v891
      %967 = vmatpush1.msra.mxu0 %v890
      %968 = vmatprep.subr.mxu0 %v894
      %969 = vmatpush1.msra.mxu0 %v893
      %970 = vmatprep.subr.mxu0 %v897
      %971 = vmatpush1.msra.mxu0 %v896
      %972 = vmatprep.subr.mxu0 %v900
      %973 = vmatpush1.msra.mxu0 %v899
      %974 = vmatprep.subr.mxu0 %v903
      %975 = vmatpush1.msra.mxu0 %v902
      %976 = vmatprep.subr.mxu0 %v906
      %977 = vmatpush1.msra.mxu0 %v905
      %978 = vmatprep.subr.mxu0 %v909
      %979 = vmatpush1.msra.mxu0 %v908
      %980 = vmatprep.subr.mxu0 %v912
      %981 = vmatpush1.msra.mxu0 %v911
      %982 = vmatprep.subr.mxu0 %v915
      %983 = vmatpush1.msra.mxu0 %v914
      %984 = vmatprep.subr.mxu0 %v918
      %985 = vmatpush1.msra.mxu0 %v917
      %986 = vmatprep.subr.mxu0 %v921
      %987 = vmatpush1.msra.mxu0 %v920
      %988 = vmatprep.subr.mxu0 %v924
      %989 = vmatpush1.msra.mxu0 %v923
      %990 = vmatprep.subr.mxu0 0.0
      %991 = vmatpush1.msra.mxu0 0.0
      %992 = vmatprep.subr.mxu0 0.0
      %993 = vmatpush1.msra.mxu0 0.0
      %994 = vmatprep.subr.mxu0 0.0
      %995 = vmatpush1.msra.mxu0 0.0
      %996 = vmatprep.subr.mxu0 0.0
      %997 = vmatpush1.msra.mxu0 0.0
      %998 = vmatprep.subr.mxu0 0.0
      %999 = vmatpush1.msra.mxu0 0.0
      %1000 = vmatprep.subr.mxu0 0.0
      %1001 = vmatpush1.msra.mxu0 0.0
      %1002 = vmatprep.subr.mxu0 0.0
      %1003 = vmatpush1.msra.mxu0 0.0
      %1004 = vmatprep.subr.mxu0 0.0
      %1005 = vmatpush1.msra.mxu0 0.0
      %1006 = vmatprep.subr.mxu0 0.0
      %1007 = vmatpush1.msra.mxu0 0.0
      %1008 = vmatprep.subr.mxu0 0.0
      %1009 = vmatpush1.msra.mxu0 0.0
      %1010 = vmatprep.subr.mxu0 0.0
      %1011 = vmatpush1.msra.mxu0 0.0
      %1012 = vmatprep.subr.mxu0 0.0
      %1013 = vmatpush1.msra.mxu0 0.0
      %1014 = vmatprep.subr.mxu0 0.0
      %1015 = vmatpush1.msra.mxu0 0.0
      %1016 = vmatprep.subr.mxu0 0.0
      %1017 = vmatpush1.msra.mxu0 0.0
      %1018 = vmatprep.subr.mxu0 0.0
      %1019 = vmatpush1.msra.mxu0 0.0
      %1020 = vmatprep.subr.mxu0 0.0
      %1021 = vmatpush1.msra.mxu0 0.0
      %1022 = vmatprep.mubr.f32.mxu0 0.0
      %1023 = vmatmul.mubr.f32.gmra.mrb[0].mxu0 %v927
      %v1024 = vpop.f32.mrb[0].mxu0
      %v1025 = vadd.f32 %v946, %v1024
      %v1026 = vpop.f32.mrb[0].mxu0
      %v1027 = vadd.f32 %v950, %v1026
      %1028 = vdwg.mxu0
      %1029 = vmatprep.subr.mxu0 0.0
      %1030 = vmatpush1.msra.mxu0 %v880
      %1031 = vmatprep.subr.mxu0 0.0
      %1032 = vmatpush1.msra.mxu0 %v883
      %1033 = vmatprep.subr.mxu0 0.0
      %1034 = vmatpush1.msra.mxu0 %v886
      %1035 = vmatprep.subr.mxu0 0.0
      %1036 = vmatpush1.msra.mxu0 %v889
      %1037 = vmatprep.subr.mxu0 0.0
      %1038 = vmatpush1.msra.mxu0 %v892
      %1039 = vmatprep.subr.mxu0 0.0
      %1040 = vmatpush1.msra.mxu0 %v895
      %1041 = vmatprep.subr.mxu0 0.0
      %1042 = vmatpush1.msra.mxu0 %v898
      %1043 = vmatprep.subr.mxu0 0.0
      %1044 = vmatpush1.msra.mxu0 %v901
      %1045 = vmatprep.subr.mxu0 0.0
      %1046 = vmatpush1.msra.mxu0 %v904
      %1047 = vmatprep.subr.mxu0 0.0
      %1048 = vmatpush1.msra.mxu0 %v907
      %1049 = vmatprep.subr.mxu0 0.0
      %1050 = vmatpush1.msra.mxu0 %v910
      %1051 = vmatprep.subr.mxu0 0.0
      %1052 = vmatpush1.msra.mxu0 %v913
      %1053 = vmatprep.subr.mxu0 0.0
      %1054 = vmatpush1.msra.mxu0 %v916
      %1055 = vmatprep.subr.mxu0 0.0
      %1056 = vmatpush1.msra.mxu0 %v919
      %1057 = vmatprep.subr.mxu0 0.0
      %1058 = vmatpush1.msra.mxu0 %v922
      %1059 = vmatprep.subr.mxu0 0.0
      %1060 = vmatpush1.msra.mxu0 %v925
      %1061 = vmatprep.subr.mxu0 0.0
      %1062 = vmatpush1.msra.mxu0 0.0
      %1063 = vmatprep.subr.mxu0 0.0
      %1064 = vmatpush1.msra.mxu0 0.0
      %1065 = vmatprep.subr.mxu0 0.0
      %1066 = vmatpush1.msra.mxu0 0.0
      %1067 = vmatprep.subr.mxu0 0.0
      %1068 = vmatpush1.msra.mxu0 0.0
      %1069 = vmatprep.subr.mxu0 0.0
      %1070 = vmatpush1.msra.mxu0 0.0
      %1071 = vmatprep.subr.mxu0 0.0
      %1072 = vmatpush1.msra.mxu0 0.0
      %1073 = vmatprep.subr.mxu0 0.0
      %1074 = vmatpush1.msra.mxu0 0.0
      %1075 = vmatprep.subr.mxu0 0.0
      %1076 = vmatpush1.msra.mxu0 0.0
      %1077 = vmatprep.subr.mxu0 0.0
      %1078 = vmatpush1.msra.mxu0 0.0
      %1079 = vmatprep.subr.mxu0 0.0
      %1080 = vmatpush1.msra.mxu0 0.0
      %1081 = vmatprep.subr.mxu0 0.0
      %1082 = vmatpush1.msra.mxu0 0.0
      %1083 = vmatprep.subr.mxu0 0.0
      %1084 = vmatpush1.msra.mxu0 0.0
      %1085 = vmatprep.subr.mxu0 0.0
      %1086 = vmatpush1.msra.mxu0 0.0
      %1087 = vmatprep.subr.mxu0 0.0
      %1088 = vmatpush1.msra.mxu0 0.0
      %1089 = vmatprep.subr.mxu0 0.0
      %1090 = vmatpush1.msra.mxu0 0.0
      %1091 = vmatprep.subr.mxu0 0.0
      %1092 = vmatpush1.msra.mxu0 0.0
      %1093 = vmatprep.mubr.f32.mxu0 0.0
      %1094 = vmatmul.mubr.f32.gmra.mrb[0].mxu0 %v927
      %v1095 = vpop.f32.mrb[0].mxu0
      %v1096 = vadd.f32 %v954, %v1095
      %v1097 = vpop.f32.mrb[0].mxu0
      %1098 = vdwg.mxu0
      %v1099 = vadd.f32 %v939, %v1025
      %v1100 = vxor.u32 %v1099, 2147483648
      %v1101 = vmul.f32 %v1100, 1.442695
      %v1102 = vpow.pop %v1101
      %v1103 = vadd.f32 %v1102, 1.0
      %v1104 = vrcp.pop %v1103
      %v1105 = vmul.f32 1.0, %v1104
      %v1106 = vadd.f32 %v940, %v1027
      %v1107 = vxor.u32 %v1106, 2147483648
      %v1108 = vmul.f32 %v1107, 1.442695
      %v1109 = vpow.pop %v1108
      %v1110 = vadd.f32 %v1109, 1.0
      %v1111 = vrcp.pop %v1110
      %v1112 = vmul.f32 1.0, %v1111
      %v1113 = vmul.f32 %v1105, %v1096
      %v1114 = vadd.f32 %v941, %v1113
      %v1115 = vtanh.pop %v1114
      %v1116 = vsub.f32 %v927, %v1115
      %v1117 = vmul.f32 %v1112, %v1116
      %v1118 = vadd.f32 %v1115, %v1117
      %v1119 = vstv %s932
      %vm1120 = vcmp.gt.s32.totalorder %v877, %v1119
      %v1121 = vsel %vm1120, 1, 0
      %v1122 = vcvt.s32.f32 %v1121
      %v1123 = vsub.f32 %v1118, %v927
      %1125 = vset.pattern.permute.xlu0 0
      %1126 = vperm.xlu0 %1125, %v1122
      %v1127 = vpop.permute.xlu0 %1126
      %v1129 = vmul.f32 %v1127, %v1123
      %v1130 = vadd.f32 %v927, %v1129
      %v1131 = vmul.f32 %v1127, %v1118
      %s1132 = scalar_lea.vmem %s427, %s933
      %1133 = vst [vmem:[%s1132] sm:$0xff] %v1131
      %s1134 = smul.u32 %s23, 13
      %s1135 = sadd.s32 %s1134, 1
      %s1136 = sadd.s32 %s928, 1
      %s1137 = smul.u32 %s1136, 2
      %s1138 = ssub.s32 15, %s1137
      %s1139 = smul.u32 %s23, %s1138
      %s1140 = sadd.s32 %s1136, %s1139
      %s1141 = smul.u32 %s1135, 8
      %s1142 = sshra.s32 %s1141, 3
      %s1143 = sand.u32 %s1141, 7
      %s1144 = smul.u32 %s1142, 3
      %s1145 = smul.addr %s1144, 8
      %s1146 = scalar_lea.vmem [#allocation2], %s1145
      %v1147 = vld [vmem:[%s1146] sm:$0xff]
      %v1148 = vld [vmem:[%s1146 + $0x8] sm:$0xff]
      %v1149 = vld [vmem:[%s1146 + $0x10] sm:$0xff]
      %1150 = vmatprep.subr.mxu0 %v879
      %1151 = vmatpush1.msra.mxu0 %v878
      %1152 = vmatprep.subr.mxu0 %v882
      %1153 = vmatpush1.msra.mxu0 %v881
      %1154 = vmatprep.subr.mxu0 %v885
      %1155 = vmatpush1.msra.mxu0 %v884
      %1156 = vmatprep.subr.mxu0 %v888
      %1157 = vmatpush1.msra.mxu0 %v887
      %1158 = vmatprep.subr.mxu0 %v891
      %1159 = vmatpush1.msra.mxu0 %v890
      %1160 = vmatprep.subr.mxu0 %v894
      %1161 = vmatpush1.msra.mxu0 %v893
      %1162 = vmatprep.subr.mxu0 %v897
      %1163 = vmatpush1.msra.mxu0 %v896
      %1164 = vmatprep.subr.mxu0 %v900
      %1165 = vmatpush1.msra.mxu0 %v899
      %1166 = vmatprep.subr.mxu0 %v903
      %1167 = vmatpush1.msra.mxu0 %v902
      %1168 = vmatprep.subr.mxu0 %v906
      %1169 = vmatpush1.msra.mxu0 %v905
      %1170 = vmatprep.subr.mxu0 %v909
      %1171 = vmatpush1.msra.mxu0 %v908
      %1172 = vmatprep.subr.mxu0 %v912
      %1173 = vmatpush1.msra.mxu0 %v911
      %1174 = vmatprep.subr.mxu0 %v915
      %1175 = vmatpush1.msra.mxu0 %v914
      %1176 = vmatprep.subr.mxu0 %v918
      %1177 = vmatpush1.msra.mxu0 %v917
      %1178 = vmatprep.subr.mxu0 %v921
      %1179 = vmatpush1.msra.mxu0 %v920
      %1180 = vmatprep.subr.mxu0 %v924
      %1181 = vmatpush1.msra.mxu0 %v923
      %1182 = vmatprep.subr.mxu0 0.0
      %1183 = vmatpush1.msra.mxu0 0.0
      %1184 = vmatprep.subr.mxu0 0.0
      %1185 = vmatpush1.msra.mxu0 0.0
      %1186 = vmatprep.subr.mxu0 0.0
      %1187 = vmatpush1.msra.mxu0 0.0
      %1188 = vmatprep.subr.mxu0 0.0
      %1189 = vmatpush1.msra.mxu0 0.0
      %1190 = vmatprep.subr.mxu0 0.0
      %1191 = vmatpush1.msra.mxu0 0.0
      %1192 = vmatprep.subr.mxu0 0.0
      %1193 = vmatpush1.msra.mxu0 0.0
      %1194 = vmatprep.subr.mxu0 0.0
      %1195 = vmatpush1.msra.mxu0 0.0
      %1196 = vmatprep.subr.mxu0 0.0
      %1197 = vmatpush1.msra.mxu0 0.0
      %1198 = vmatprep.subr.mxu0 0.0
      %1199 = vmatpush1.msra.mxu0 0.0
      %1200 = vmatprep.subr.mxu0 0.0
      %1201 = vmatpush1.msra.mxu0 0.0
      %1202 = vmatprep.subr.mxu0 0.0
      %1203 = vmatpush1.msra.mxu0 0.0
      %1204 = vmatprep.subr.mxu0 0.0
      %1205 = vmatpush1.msra.mxu0 0.0
      %1206 = vmatprep.subr.mxu0 0.0
      %1207 = vmatpush1.msra.mxu0 0.0
      %1208 = vmatprep.subr.mxu0 0.0
      %1209 = vmatpush1.msra.mxu0 0.0
      %1210 = vmatprep.subr.mxu0 0.0
      %1211 = vmatpush1.msra.mxu0 0.0
      %1212 = vmatprep.subr.mxu0 0.0
      %1213 = vmatpush1.msra.mxu0 0.0
      %1214 = vmatprep.mubr.f32.mxu0 0.0
      %1215 = vmatmul.mubr.f32.gmra.mrb[0].mxu0 %v1130
      %v1216 = vpop.f32.mrb[0].mxu0
      %v1217 = vadd.f32 %v946, %v1216
      %v1218 = vpop.f32.mrb[0].mxu0
      %v1219 = vadd.f32 %v950, %v1218
      %1220 = vdwg.mxu0
      %1221 = vmatprep.subr.mxu0 0.0
      %1222 = vmatpush1.msra.mxu0 %v880
      %1223 = vmatprep.subr.mxu0 0.0
      %1224 = vmatpush1.msra.mxu0 %v883
      %1225 = vmatprep.subr.mxu0 0.0
      %1226 = vmatpush1.msra.mxu0 %v886
      %1227 = vmatprep.subr.mxu0 0.0
      %1228 = vmatpush1.msra.mxu0 %v889
      %1229 = vmatprep.subr.mxu0 0.0
      %1230 = vmatpush1.msra.mxu0 %v892
      %1231 = vmatprep.subr.mxu0 0.0
      %1232 = vmatpush1.msra.mxu0 %v895
      %1233 = vmatprep.subr.mxu0 0.0
      %1234 = vmatpush1.msra.mxu0 %v898
      %1235 = vmatprep.subr.mxu0 0.0
      %1236 = vmatpush1.msra.mxu0 %v901
      %1237 = vmatprep.subr.mxu0 0.0
      %1238 = vmatpush1.msra.mxu0 %v904
      %1239 = vmatprep.subr.mxu0 0.0
      %1240 = vmatpush1.msra.mxu0 %v907
      %1241 = vmatprep.subr.mxu0 0.0
      %1242 = vmatpush1.msra.mxu0 %v910
      %1243 = vmatprep.subr.mxu0 0.0
      %1244 = vmatpush1.msra.mxu0 %v913
      %1245 = vmatprep.subr.mxu0 0.0
      %1246 = vmatpush1.msra.mxu0 %v916
      %1247 = vmatprep.subr.mxu0 0.0
      %1248 = vmatpush1.msra.mxu0 %v919
      %1249 = vmatprep.subr.mxu0 0.0
      %1250 = vmatpush1.msra.mxu0 %v922
      %1251 = vmatprep.subr.mxu0 0.0
      %1252 = vmatpush1.msra.mxu0 %v925
      %1253 = vmatprep.subr.mxu0 0.0
      %1254 = vmatpush1.msra.mxu0 0.0
      %1255 = vmatprep.subr.mxu0 0.0
      %1256 = vmatpush1.msra.mxu0 0.0
      %1257 = vmatprep.subr.mxu0 0.0
      %1258 = vmatpush1.msra.mxu0 0.0
      %1259 = vmatprep.subr.mxu0 0.0
      %1260 = vmatpush1.msra.mxu0 0.0
      %1261 = vmatprep.subr.mxu0 0.0
      %1262 = vmatpush1.msra.mxu0 0.0
      %1263 = vmatprep.subr.mxu0 0.0
      %1264 = vmatpush1.msra.mxu0 0.0
      %1265 = vmatprep.subr.mxu0 0.0
      %1266 = vmatpush1.msra.mxu0 0.0
      %1267 = vmatprep.subr.mxu0 0.0
      %1268 = vmatpush1.msra.mxu0 0.0
      %1269 = vmatprep.subr.mxu0 0.0
      %1270 = vmatpush1.msra.mxu0 0.0
      %1271 = vmatprep.subr.mxu0 0.0
      %1272 = vmatpush1.msra.mxu0 0.0
      %1273 = vmatprep.subr.mxu0 0.0
      %1274 = vmatpush1.msra.mxu0 0.0
      %1275 = vmatprep.subr.mxu0 0.0
      %1276 = vmatpush1.msra.mxu0 0.0
      %1277 = vmatprep.subr.mxu0 0.0
      %1278 = vmatpush1.msra.mxu0 0.0
      %1279 = vmatprep.subr.mxu0 0.0
      %1280 = vmatpush1.msra.mxu0 0.0
      %1281 = vmatprep.subr.mxu0 0.0
      %1282 = vmatpush1.msra.mxu0 0.0
      %1283 = vmatprep.subr.mxu0 0.0
      %1284 = vmatpush1.msra.mxu0 0.0
      %1285 = vmatprep.mubr.f32.mxu0 0.0
      %1286 = vmatmul.mubr.f32.gmra.mrb[0].mxu0 %v1130
      %v1287 = vpop.f32.mrb[0].mxu0
      %v1288 = vadd.f32 %v954, %v1287
      %v1289 = vpop.f32.mrb[0].mxu0
      %1290 = vdwg.mxu0
      %v1291 = vadd.f32 %v1147, %v1217
      %v1292 = vxor.u32 %v1291, 2147483648
      %v1293 = vmul.f32 %v1292, 1.442695
      %v1294 = vpow.pop %v1293
      %v1295 = vadd.f32 %v1294, 1.0
      %v1296 = vrcp.pop %v1295
      %v1297 = vmul.f32 1.0, %v1296
      %v1298 = vadd.f32 %v1148, %v1219
      %v1299 = vxor.u32 %v1298, 2147483648
      %v1300 = vmul.f32 %v1299, 1.442695
      %v1301 = vpow.pop %v1300
      %v1302 = vadd.f32 %v1301, 1.0
      %v1303 = vrcp.pop %v1302
      %v1304 = vmul.f32 1.0, %v1303
      %v1305 = vmul.f32 %v1297, %v1288
      %v1306 = vadd.f32 %v1149, %v1305
      %v1307 = vtanh.pop %v1306
      %v1308 = vsub.f32 %v1130, %v1307
      %v1309 = vmul.f32 %v1304, %v1308
      %v1310 = vadd.f32 %v1307, %v1309
      %v1311 = vstv %s1140
      %vm1312 = vcmp.gt.s32.totalorder %v877, %v1311
      %v1313 = vsel %vm1312, 1, 0
      %v1314 = vcvt.s32.f32 %v1313
      %v1315 = vsub.f32 %v1310, %v1130
      %1317 = vset.pattern.permute.xlu0 0
      %1318 = vperm.xlu0 %1317, %v1314
      %v1319 = vpop.permute.xlu0 %1318
      %v1321 = vmul.f32 %v1319, %v1315
      %v1322 = vadd.f32 %v1130, %v1321
      %v1323 = vmul.f32 %v1319, %v1310
      %s1324 = scalar_lea.vmem %s427, %s1141
      %1325 = vst [vmem:[%s1324] sm:$0xff] %v1323
      %s1326 = smul.u32 %s23, 11
      %s1327 = sadd.s32 %s1326, 2
      %s1328 = sadd.s32 %s928, 2
      %s1329 = smul.u32 %s1328, 2
      %s1330 = ssub.s32 15, %s1329
      %s1331 = smul.u32 %s23, %s1330
      %s1332 = sadd.s32 %s1328, %s1331
      %s1333 = smul.u32 %s1327, 8
      %s1334 = sshra.s32 %s1333, 3
      %s1335 = sand.u32 %s1333, 7
      %s1336 = smul.u32 %s1334, 3
      %s1337 = smul.addr %s1336, 8
      %s1338 = scalar_lea.vmem [#allocation2], %s1337
      %v1339 = vld [vmem:[%s1338] sm:$0xff]
      %v1340 = vld [vmem:[%s1338 + $0x8] sm:$0xff]
      %v1341 = vld [vmem:[%s1338 + $0x10] sm:$0xff]
      %1342 = vmatprep.subr.mxu0 %v879
      %1343 = vmatpush1.msra.mxu0 %v878
      %1344 = vmatprep.subr.mxu0 %v882
      %1345 = vmatpush1.msra.mxu0 %v881
      %1346 = vmatprep.subr.mxu0 %v885
      %1347 = vmatpush1.msra.mxu0 %v884
      %1348 = vmatprep.subr.mxu0 %v888
      %1349 = vmatpush1.msra.mxu0 %v887
      %1350 = vmatprep.subr.mxu0 %v891
      %1351 = vmatpush1.msra.mxu0 %v890
      %1352 = vmatprep.subr.mxu0 %v894
      %1353 = vmatpush1.msra.mxu0 %v893
      %1354 = vmatprep.subr.mxu0 %v897
      %1355 = vmatpush1.msra.mxu0 %v896
      %1356 = vmatprep.subr.mxu0 %v900
      %1357 = vmatpush1.msra.mxu0 %v899
      %1358 = vmatprep.subr.mxu0 %v903
      %1359 = vmatpush1.msra.mxu0 %v902
      %1360 = vmatprep.subr.mxu0 %v906
      %1361 = vmatpush1.msra.mxu0 %v905
      %1362 = vmatprep.subr.mxu0 %v909
      %1363 = vmatpush1.msra.mxu0 %v908
      %1364 = vmatprep.subr.mxu0 %v912
      %1365 = vmatpush1.msra.mxu0 %v911
      %1366 = vmatprep.subr.mxu0 %v915
      %1367 = vmatpush1.msra.mxu0 %v914
      %1368 = vmatprep.subr.mxu0 %v918
      %1369 = vmatpush1.msra.mxu0 %v917
      %1370 = vmatprep.subr.mxu0 %v921
      %1371 = vmatpush1.msra.mxu0 %v920
      %1372 = vmatprep.subr.mxu0 %v924
      %1373 = vmatpush1.msra.mxu0 %v923
      %1374 = vmatprep.subr.mxu0 0.0
      %1375 = vmatpush1.msra.mxu0 0.0
      %1376 = vmatprep.subr.mxu0 0.0
      %1377 = vmatpush1.msra.mxu0 0.0
      %1378 = vmatprep.subr.mxu0 0.0
      %1379 = vmatpush1.msra.mxu0 0.0
      %1380 = vmatprep.subr.mxu0 0.0
      %1381 = vmatpush1.msra.mxu0 0.0
      %1382 = vmatprep.subr.mxu0 0.0
      %1383 = vmatpush1.msra.mxu0 0.0
      %1384 = vmatprep.subr.mxu0 0.0
      %1385 = vmatpush1.msra.mxu0 0.0
      %1386 = vmatprep.subr.mxu0 0.0
      %1387 = vmatpush1.msra.mxu0 0.0
      %1388 = vmatprep.subr.mxu0 0.0
      %1389 = vmatpush1.msra.mxu0 0.0
      %1390 = vmatprep.subr.mxu0 0.0
      %1391 = vmatpush1.msra.mxu0 0.0
      %1392 = vmatprep.subr.mxu0 0.0
      %1393 = vmatpush1.msra.mxu0 0.0
      %1394 = vmatprep.subr.mxu0 0.0
      %1395 = vmatpush1.msra.mxu0 0.0
      %1396 = vmatprep.subr.mxu0 0.0
      %1397 = vmatpush1.msra.mxu0 0.0
      %1398 = vmatprep.subr.mxu0 0.0
      %1399 = vmatpush1.msra.mxu0 0.0
      %1400 = vmatprep.subr.mxu0 0.0
      %1401 = vmatpush1.msra.mxu0 0.0
      %1402 = vmatprep.subr.mxu0 0.0
      %1403 = vmatpush1.msra.mxu0 0.0
      %1404 = vmatprep.subr.mxu0 0.0
      %1405 = vmatpush1.msra.mxu0 0.0
      %1406 = vmatprep.mubr.f32.mxu0 0.0
      %1407 = vmatmul.mubr.f32.gmra.mrb[0].mxu0 %v1322
      %v1408 = vpop.f32.mrb[0].mxu0
      %v1409 = vadd.f32 %v946, %v1408
      %v1410 = vpop.f32.mrb[0].mxu0
      %v1411 = vadd.f32 %v950, %v1410
      %1412 = vdwg.mxu0
      %1413 = vmatprep.subr.mxu0 0.0
      %1414 = vmatpush1.msra.mxu0 %v880
      %1415 = vmatprep.subr.mxu0 0.0
      %1416 = vmatpush1.msra.mxu0 %v883
      %1417 = vmatprep.subr.mxu0 0.0
      %1418 = vmatpush1.msra.mxu0 %v886
      %1419 = vmatprep.subr.mxu0 0.0
      %1420 = vmatpush1.msra.mxu0 %v889
      %1421 = vmatprep.subr.mxu0 0.0
      %1422 = vmatpush1.msra.mxu0 %v892
      %1423 = vmatprep.subr.mxu0 0.0
      %1424 = vmatpush1.msra.mxu0 %v895
      %1425 = vmatprep.subr.mxu0 0.0
      %1426 = vmatpush1.msra.mxu0 %v898
      %1427 = vmatprep.subr.mxu0 0.0
      %1428 = vmatpush1.msra.mxu0 %v901
      %1429 = vmatprep.subr.mxu0 0.0
      %1430 = vmatpush1.msra.mxu0 %v904
      %1431 = vmatprep.subr.mxu0 0.0
      %1432 = vmatpush1.msra.mxu0 %v907
      %1433 = vmatprep.subr.mxu0 0.0
      %1434 = vmatpush1.msra.mxu0 %v910
      %1435 = vmatprep.subr.mxu0 0.0
      %1436 = vmatpush1.msra.mxu0 %v913
      %1437 = vmatprep.subr.mxu0 0.0
      %1438 = vmatpush1.msra.mxu0 %v916
      %1439 = vmatprep.subr.mxu0 0.0
      %1440 = vmatpush1.msra.mxu0 %v919
      %1441 = vmatprep.subr.mxu0 0.0
      %1442 = vmatpush1.msra.mxu0 %v922
      %1443 = vmatprep.subr.mxu0 0.0
      %1444 = vmatpush1.msra.mxu0 %v925
      %1445 = vmatprep.subr.mxu0 0.0
      %1446 = vmatpush1.msra.mxu0 0.0
      %1447 = vmatprep.subr.mxu0 0.0
      %1448 = vmatpush1.msra.mxu0 0.0
      %1449 = vmatprep.subr.mxu0 0.0
      %1450 = vmatpush1.msra.mxu0 0.0
      %1451 = vmatprep.subr.mxu0 0.0
      %1452 = vmatpush1.msra.mxu0 0.0
      %1453 = vmatprep.subr.mxu0 0.0
      %1454 = vmatpush1.msra.mxu0 0.0
      %1455 = vmatprep.subr.mxu0 0.0
      %1456 = vmatpush1.msra.mxu0 0.0
      %1457 = vmatprep.subr.mxu0 0.0
      %1458 = vmatpush1.msra.mxu0 0.0
      %1459 = vmatprep.subr.mxu0 0.0
      %1460 = vmatpush1.msra.mxu0 0.0
      %1461 = vmatprep.subr.mxu0 0.0
      %1462 = vmatpush1.msra.mxu0 0.0
      %1463 = vmatprep.subr.mxu0 0.0
      %1464 = vmatpush1.msra.mxu0 0.0
      %1465 = vmatprep.subr.mxu0 0.0
      %1466 = vmatpush1.msra.mxu0 0.0
      %1467 = vmatprep.subr.mxu0 0.0
      %1468 = vmatpush1.msra.mxu0 0.0
      %1469 = vmatprep.subr.mxu0 0.0
      %1470 = vmatpush1.msra.mxu0 0.0
      %1471 = vmatprep.subr.mxu0 0.0
      %1472 = vmatpush1.msra.mxu0 0.0
      %1473 = vmatprep.subr.mxu0 0.0
      %1474 = vmatpush1.msra.mxu0 0.0
      %1475 = vmatprep.subr.mxu0 0.0
      %1476 = vmatpush1.msra.mxu0 0.0
      %1477 = vmatprep.mubr.f32.mxu0 0.0
      %1478 = vmatmul.mubr.f32.gmra.mrb[0].mxu0 %v1322
      %v1479 = vpop.f32.mrb[0].mxu0
      %v1480 = vadd.f32 %v954, %v1479
      %v1481 = vpop.f32.mrb[0].mxu0
      %1482 = vdwg.mxu0
      %v1483 = vadd.f32 %v1339, %v1409
      %v1484 = vxor.u32 %v1483, 2147483648
      %v1485 = vmul.f32 %v1484, 1.442695
      %v1486 = vpow.pop %v1485
      %v1487 = vadd.f32 %v1486, 1.0
      %v1488 = vrcp.pop %v1487
      %v1489 = vmul.f32 1.0, %v1488
      %v1490 = vadd.f32 %v1340, %v1411
      %v1491 = vxor.u32 %v1490, 2147483648
      %v1492 = vmul.f32 %v1491, 1.442695
      %v1493 = vpow.pop %v1492
      %v1494 = vadd.f32 %v1493, 1.0
      %v1495 = vrcp.pop %v1494
      %v1496 = vmul.f32 1.0, %v1495
      %v1497 = vmul.f32 %v1489, %v1480
      %v1498 = vadd.f32 %v1341, %v1497
      %v1499 = vtanh.pop %v1498
      %v1500 = vsub.f32 %v1322, %v1499
      %v1501 = vmul.f32 %v1496, %v1500
      %v1502 = vadd.f32 %v1499, %v1501
      %v1503 = vstv %s1332
      %vm1504 = vcmp.gt.s32.totalorder %v877, %v1503
      %v1505 = vsel %vm1504, 1, 0
      %v1506 = vcvt.s32.f32 %v1505
      %v1507 = vsub.f32 %v1502, %v1322
      %1509 = vset.pattern.permute.xlu0 0
      %1510 = vperm.xlu0 %1509, %v1506
      %v1511 = vpop.permute.xlu0 %1510
      %v1513 = vmul.f32 %v1511, %v1507
      %v1514 = vadd.f32 %v1322, %v1513
      %v1515 = vmul.f32 %v1511, %v1502
      %s1516 = scalar_lea.vmem %s427, %s1333
      %1517 = vst [vmem:[%s1516] sm:$0xff] %v1515
      %s1518 = smul.u32 %s23, 9
      %s1519 = sadd.s32 %s1518, 3
      %s1520 = sadd.s32 %s928, 3
      %s1521 = smul.u32 %s1520, 2
      %s1522 = ssub.s32 15, %s1521
      %s1523 = smul.u32 %s23, %s1522
      %s1524 = sadd.s32 %s1520, %s1523
      %s1525 = smul.u32 %s1519, 8
      %s1526 = sshra.s32 %s1525, 3
      %s1527 = sand.u32 %s1525, 7
      %s1528 = smul.u32 %s1526, 3
      %s1529 = smul.addr %s1528, 8
      %s1530 = scalar_lea.vmem [#allocation2], %s1529
      %v1531 = vld [vmem:[%s1530] sm:$0xff]
      %v1532 = vld [vmem:[%s1530 + $0x8] sm:$0xff]
      %v1533 = vld [vmem:[%s1530 + $0x10] sm:$0xff]
      %1534 = vmatprep.subr.mxu0 %v879
      %1535 = vmatpush1.msra.mxu0 %v878
      %1536 = vmatprep.subr.mxu0 %v882
      %1537 = vmatpush1.msra.mxu0 %v881
      %1538 = vmatprep.subr.mxu0 %v885
      %1539 = vmatpush1.msra.mxu0 %v884
      %1540 = vmatprep.subr.mxu0 %v888
      %1541 = vmatpush1.msra.mxu0 %v887
      %1542 = vmatprep.subr.mxu0 %v891
      %1543 = vmatpush1.msra.mxu0 %v890
      %1544 = vmatprep.subr.mxu0 %v894
      %1545 = vmatpush1.msra.mxu0 %v893
      %1546 = vmatprep.subr.mxu0 %v897
      %1547 = vmatpush1.msra.mxu0 %v896
      %1548 = vmatprep.subr.mxu0 %v900
      %1549 = vmatpush1.msra.mxu0 %v899
      %1550 = vmatprep.subr.mxu0 %v903
      %1551 = vmatpush1.msra.mxu0 %v902
      %1552 = vmatprep.subr.mxu0 %v906
      %1553 = vmatpush1.msra.mxu0 %v905
      %1554 = vmatprep.subr.mxu0 %v909
      %1555 = vmatpush1.msra.mxu0 %v908
      %1556 = vmatprep.subr.mxu0 %v912
      %1557 = vmatpush1.msra.mxu0 %v911
      %1558 = vmatprep.subr.mxu0 %v915
      %1559 = vmatpush1.msra.mxu0 %v914
      %1560 = vmatprep.subr.mxu0 %v918
      %1561 = vmatpush1.msra.mxu0 %v917
      %1562 = vmatprep.subr.mxu0 %v921
      %1563 = vmatpush1.msra.mxu0 %v920
      %1564 = vmatprep.subr.mxu0 %v924
      %1565 = vmatpush1.msra.mxu0 %v923
      %1566 = vmatprep.subr.mxu0 0.0
      %1567 = vmatpush1.msra.mxu0 0.0
      %1568 = vmatprep.subr.mxu0 0.0
      %1569 = vmatpush1.msra.mxu0 0.0
      %1570 = vmatprep.subr.mxu0 0.0
      %1571 = vmatpush1.msra.mxu0 0.0
      %1572 = vmatprep.subr.mxu0 0.0
      %1573 = vmatpush1.msra.mxu0 0.0
      %1574 = vmatprep.subr.mxu0 0.0
      %1575 = vmatpush1.msra.mxu0 0.0
      %1576 = vmatprep.subr.mxu0 0.0
      %1577 = vmatpush1.msra.mxu0 0.0
      %1578 = vmatprep.subr.mxu0 0.0
      %1579 = vmatpush1.msra.mxu0 0.0
      %1580 = vmatprep.subr.mxu0 0.0
      %1581 = vmatpush1.msra.mxu0 0.0
      %1582 = vmatprep.subr.mxu0 0.0
      %1583 = vmatpush1.msra.mxu0 0.0
      %1584 = vmatprep.subr.mxu0 0.0
      %1585 = vmatpush1.msra.mxu0 0.0
      %1586 = vmatprep.subr.mxu0 0.0
      %1587 = vmatpush1.msra.mxu0 0.0
      %1588 = vmatprep.subr.mxu0 0.0
      %1589 = vmatpush1.msra.mxu0 0.0
      %1590 = vmatprep.subr.mxu0 0.0
      %1591 = vmatpush1.msra.mxu0 0.0
      %1592 = vmatprep.subr.mxu0 0.0
      %1593 = vmatpush1.msra.mxu0 0.0
      %1594 = vmatprep.subr.mxu0 0.0
      %1595 = vmatpush1.msra.mxu0 0.0
      %1596 = vmatprep.subr.mxu0 0.0
      %1597 = vmatpush1.msra.mxu0 0.0
      %1598 = vmatprep.mubr.f32.mxu0 0.0
      %1599 = vmatmul.mubr.f32.gmra.mrb[0].mxu0 %v1514
      %v1600 = vpop.f32.mrb[0].mxu0
      %v1601 = vadd.f32 %v946, %v1600
      %v1602 = vpop.f32.mrb[0].mxu0
      %v1603 = vadd.f32 %v950, %v1602
      %1604 = vdwg.mxu0
      %1605 = vmatprep.subr.mxu0 0.0
      %1606 = vmatpush1.msra.mxu0 %v880
      %1607 = vmatprep.subr.mxu0 0.0
      %1608 = vmatpush1.msra.mxu0 %v883
      %1609 = vmatprep.subr.mxu0 0.0
      %1610 = vmatpush1.msra.mxu0 %v886
      %1611 = vmatprep.subr.mxu0 0.0
      %1612 = vmatpush1.msra.mxu0 %v889
      %1613 = vmatprep.subr.mxu0 0.0
      %1614 = vmatpush1.msra.mxu0 %v892
      %1615 = vmatprep.subr.mxu0 0.0
      %1616 = vmatpush1.msra.mxu0 %v895
      %1617 = vmatprep.subr.mxu0 0.0
      %1618 = vmatpush1.msra.mxu0 %v898
      %1619 = vmatprep.subr.mxu0 0.0
      %1620 = vmatpush1.msra.mxu0 %v901
      %1621 = vmatprep.subr.mxu0 0.0
      %1622 = vmatpush1.msra.mxu0 %v904
      %1623 = vmatprep.subr.mxu0 0.0
      %1624 = vmatpush1.msra.mxu0 %v907
      %1625 = vmatprep.subr.mxu0 0.0
      %1626 = vmatpush1.msra.mxu0 %v910
      %1627 = vmatprep.subr.mxu0 0.0
      %1628 = vmatpush1.msra.mxu0 %v913
      %1629 = vmatprep.subr.mxu0 0.0
      %1630 = vmatpush1.msra.mxu0 %v916
      %1631 = vmatprep.subr.mxu0 0.0
      %1632 = vmatpush1.msra.mxu0 %v919
      %1633 = vmatprep.subr.mxu0 0.0
      %1634 = vmatpush1.msra.mxu0 %v922
      %1635 = vmatprep.subr.mxu0 0.0
      %1636 = vmatpush1.msra.mxu0 %v925
      %1637 = vmatprep.subr.mxu0 0.0
      %1638 = vmatpush1.msra.mxu0 0.0
      %1639 = vmatprep.subr.mxu0 0.0
      %1640 = vmatpush1.msra.mxu0 0.0
      %1641 = vmatprep.subr.mxu0 0.0
      %1642 = vmatpush1.msra.mxu0 0.0
      %1643 = vmatprep.subr.mxu0 0.0
      %1644 = vmatpush1.msra.mxu0 0.0
      %1645 = vmatprep.subr.mxu0 0.0
      %1646 = vmatpush1.msra.mxu0 0.0
      %1647 = vmatprep.subr.mxu0 0.0
      %1648 = vmatpush1.msra.mxu0 0.0
      %1649 = vmatprep.subr.mxu0 0.0
      %1650 = vmatpush1.msra.mxu0 0.0
      %1651 = vmatprep.subr.mxu0 0.0
      %1652 = vmatpush1.msra.mxu0 0.0
      %1653 = vmatprep.subr.mxu0 0.0
      %1654 = vmatpush1.msra.mxu0 0.0
      %1655 = vmatprep.subr.mxu0 0.0
      %1656 = vmatpush1.msra.mxu0 0.0
      %1657 = vmatprep.subr.mxu0 0.0
      %1658 = vmatpush1.msra.mxu0 0.0
      %1659 = vmatprep.subr.mxu0 0.0
      %1660 = vmatpush1.msra.mxu0 0.0
      %1661 = vmatprep.subr.mxu0 0.0
      %1662 = vmatpush1.msra.mxu0 0.0
      %1663 = vmatprep.subr.mxu0 0.0
      %1664 = vmatpush1.msra.mxu0 0.0
      %1665 = vmatprep.subr.mxu0 0.0
      %1666 = vmatpush1.msra.mxu0 0.0
      %1667 = vmatprep.subr.mxu0 0.0
      %1668 = vmatpush1.msra.mxu0 0.0
      %1669 = vmatprep.mubr.f32.mxu0 0.0
      %1670 = vmatmul.mubr.f32.gmra.mrb[0].mxu0 %v1514
      %v1671 = vpop.f32.mrb[0].mxu0
      %v1672 = vadd.f32 %v954, %v1671
      %v1673 = vpop.f32.mrb[0].mxu0
      %1674 = vdwg.mxu0
      %v1675 = vadd.f32 %v1531, %v1601
      %v1676 = vxor.u32 %v1675, 2147483648
      %v1677 = vmul.f32 %v1676, 1.442695
      %v1678 = vpow.pop %v1677
      %v1679 = vadd.f32 %v1678, 1.0
      %v1680 = vrcp.pop %v1679
      %v1681 = vmul.f32 1.0, %v1680
      %v1682 = vadd.f32 %v1532, %v1603
      %v1683 = vxor.u32 %v1682, 2147483648
      %v1684 = vmul.f32 %v1683, 1.442695
      %v1685 = vpow.pop %v1684
      %v1686 = vadd.f32 %v1685, 1.0
      %v1687 = vrcp.pop %v1686
      %v1688 = vmul.f32 1.0, %v1687
      %v1689 = vmul.f32 %v1681, %v1672
      %v1690 = vadd.f32 %v1533, %v1689
      %v1691 = vtanh.pop %v1690
      %v1692 = vsub.f32 %v1514, %v1691
      %v1693 = vmul.f32 %v1688, %v1692
      %v1694 = vadd.f32 %v1691, %v1693
      %v1695 = vstv %s1524
      %vm1696 = vcmp.gt.s32.totalorder %v877, %v1695
      %v1697 = vsel %vm1696, 1, 0
      %v1698 = vcvt.s32.f32 %v1697
      %v1699 = vsub.f32 %v1694, %v1514
      %1701 = vset.pattern.permute.xlu0 0
      %1702 = vperm.xlu0 %1701, %v1698
      %v1703 = vpop.permute.xlu0 %1702
      %v1705 = vmul.f32 %v1703, %v1699
      %v1706 = vadd.f32 %v1514, %v1705
      %v1707 = vmul.f32 %v1703, %v1694
      %s1708 = scalar_lea.vmem %s427, %s1525
      %1709 = vst [vmem:[%s1708] sm:$0xff] %v1707
      %s1710 = smul.u32 %s23, 7
      %s1711 = sadd.s32 %s1710, 4
      %s1712 = sadd.s32 %s928, 4
      %s1713 = smul.u32 %s1712, 2
      %s1714 = ssub.s32 15, %s1713
      %s1715 = smul.u32 %s23, %s1714
      %s1716 = sadd.s32 %s1712, %s1715
      %s1717 = smul.u32 %s1711, 8
      %s1718 = sshra.s32 %s1717, 3
      %s1719 = sand.u32 %s1717, 7
      %s1720 = smul.u32 %s1718, 3
      %s1721 = smul.addr %s1720, 8
      %s1722 = scalar_lea.vmem [#allocation2], %s1721
      %v1723 = vld [vmem:[%s1722] sm:$0xff]
      %v1724 = vld [vmem:[%s1722 + $0x8] sm:$0xff]
      %v1725 = vld [vmem:[%s1722 + $0x10] sm:$0xff]
      %1726 = vmatprep.subr.mxu0 %v879
      %1727 = vmatpush1.msra.mxu0 %v878
      %1728 = vmatprep.subr.mxu0 %v882
      %1729 = vmatpush1.msra.mxu0 %v881
      %1730 = vmatprep.subr.mxu0 %v885
      %1731 = vmatpush1.msra.mxu0 %v884
      %1732 = vmatprep.subr.mxu0 %v888
      %1733 = vmatpush1.msra.mxu0 %v887
      %1734 = vmatprep.subr.mxu0 %v891
      %1735 = vmatpush1.msra.mxu0 %v890
      %1736 = vmatprep.subr.mxu0 %v894
      %1737 = vmatpush1.msra.mxu0 %v893
      %1738 = vmatprep.subr.mxu0 %v897
      %1739 = vmatpush1.msra.mxu0 %v896
      %1740 = vmatprep.subr.mxu0 %v900
      %1741 = vmatpush1.msra.mxu0 %v899
      %1742 = vmatprep.subr.mxu0 %v903
      %1743 = vmatpush1.msra.mxu0 %v902
      %1744 = vmatprep.subr.mxu0 %v906
      %1745 = vmatpush1.msra.mxu0 %v905
      %1746 = vmatprep.subr.mxu0 %v909
      %1747 = vmatpush1.msra.mxu0 %v908
      %1748 = vmatprep.subr.mxu0 %v912
      %1749 = vmatpush1.msra.mxu0 %v911
      %1750 = vmatprep.subr.mxu0 %v915
      %1751 = vmatpush1.msra.mxu0 %v914
      %1752 = vmatprep.subr.mxu0 %v918
      %1753 = vmatpush1.msra.mxu0 %v917
      %1754 = vmatprep.subr.mxu0 %v921
      %1755 = vmatpush1.msra.mxu0 %v920
      %1756 = vmatprep.subr.mxu0 %v924
      %1757 = vmatpush1.msra.mxu0 %v923
      %1758 = vmatprep.subr.mxu0 0.0
      %1759 = vmatpush1.msra.mxu0 0.0
      %1760 = vmatprep.subr.mxu0 0.0
      %1761 = vmatpush1.msra.mxu0 0.0
      %1762 = vmatprep.subr.mxu0 0.0
      %1763 = vmatpush1.msra.mxu0 0.0
      %1764 = vmatprep.subr.mxu0 0.0
      %1765 = vmatpush1.msra.mxu0 0.0
      %1766 = vmatprep.subr.mxu0 0.0
      %1767 = vmatpush1.msra.mxu0 0.0
      %1768 = vmatprep.subr.mxu0 0.0
      %1769 = vmatpush1.msra.mxu0 0.0
      %1770 = vmatprep.subr.mxu0 0.0
      %1771 = vmatpush1.msra.mxu0 0.0
      %1772 = vmatprep.subr.mxu0 0.0
      %1773 = vmatpush1.msra.mxu0 0.0
      %1774 = vmatprep.subr.mxu0 0.0
      %1775 = vmatpush1.msra.mxu0 0.0
      %1776 = vmatprep.subr.mxu0 0.0
      %1777 = vmatpush1.msra.mxu0 0.0
      %1778 = vmatprep.subr.mxu0 0.0
      %1779 = vmatpush1.msra.mxu0 0.0
      %1780 = vmatprep.subr.mxu0 0.0
      %1781 = vmatpush1.msra.mxu0 0.0
      %1782 = vmatprep.subr.mxu0 0.0
      %1783 = vmatpush1.msra.mxu0 0.0
      %1784 = vmatprep.subr.mxu0 0.0
      %1785 = vmatpush1.msra.mxu0 0.0
      %1786 = vmatprep.subr.mxu0 0.0
      %1787 = vmatpush1.msra.mxu0 0.0
      %1788 = vmatprep.subr.mxu0 0.0
      %1789 = vmatpush1.msra.mxu0 0.0
      %1790 = vmatprep.mubr.f32.mxu0 0.0
      %1791 = vmatmul.mubr.f32.gmra.mrb[0].mxu0 %v1706
      %v1792 = vpop.f32.mrb[0].mxu0
      %v1793 = vadd.f32 %v946, %v1792
      %v1794 = vpop.f32.mrb[0].mxu0
      %v1795 = vadd.f32 %v950, %v1794
      %1796 = vdwg.mxu0
      %1797 = vmatprep.subr.mxu0 0.0
      %1798 = vmatpush1.msra.mxu0 %v880
      %1799 = vmatprep.subr.mxu0 0.0
      %1800 = vmatpush1.msra.mxu0 %v883
      %1801 = vmatprep.subr.mxu0 0.0
      %1802 = vmatpush1.msra.mxu0 %v886
      %1803 = vmatprep.subr.mxu0 0.0
      %1804 = vmatpush1.msra.mxu0 %v889
      %1805 = vmatprep.subr.mxu0 0.0
      %1806 = vmatpush1.msra.mxu0 %v892
      %1807 = vmatprep.subr.mxu0 0.0
      %1808 = vmatpush1.msra.mxu0 %v895
      %1809 = vmatprep.subr.mxu0 0.0
      %1810 = vmatpush1.msra.mxu0 %v898
      %1811 = vmatprep.subr.mxu0 0.0
      %1812 = vmatpush1.msra.mxu0 %v901
      %1813 = vmatprep.subr.mxu0 0.0
      %1814 = vmatpush1.msra.mxu0 %v904
      %1815 = vmatprep.subr.mxu0 0.0
      %1816 = vmatpush1.msra.mxu0 %v907
      %1817 = vmatprep.subr.mxu0 0.0
      %1818 = vmatpush1.msra.mxu0 %v910
      %1819 = vmatprep.subr.mxu0 0.0
      %1820 = vmatpush1.msra.mxu0 %v913
      %1821 = vmatprep.subr.mxu0 0.0
      %1822 = vmatpush1.msra.mxu0 %v916
      %1823 = vmatprep.subr.mxu0 0.0
      %1824 = vmatpush1.msra.mxu0 %v919
      %1825 = vmatprep.subr.mxu0 0.0
      %1826 = vmatpush1.msra.mxu0 %v922
      %1827 = vmatprep.subr.mxu0 0.0
      %1828 = vmatpush1.msra.mxu0 %v925
      %1829 = vmatprep.subr.mxu0 0.0
      %1830 = vmatpush1.msra.mxu0 0.0
      %1831 = vmatprep.subr.mxu0 0.0
      %1832 = vmatpush1.msra.mxu0 0.0
      %1833 = vmatprep.subr.mxu0 0.0
      %1834 = vmatpush1.msra.mxu0 0.0
      %1835 = vmatprep.subr.mxu0 0.0
      %1836 = vmatpush1.msra.mxu0 0.0
      %1837 = vmatprep.subr.mxu0 0.0
      %1838 = vmatpush1.msra.mxu0 0.0
      %1839 = vmatprep.subr.mxu0 0.0
      %1840 = vmatpush1.msra.mxu0 0.0
      %1841 = vmatprep.subr.mxu0 0.0
      %1842 = vmatpush1.msra.mxu0 0.0
      %1843 = vmatprep.subr.mxu0 0.0
      %1844 = vmatpush1.msra.mxu0 0.0
      %1845 = vmatprep.subr.mxu0 0.0
      %1846 = vmatpush1.msra.mxu0 0.0
      %1847 = vmatprep.subr.mxu0 0.0
      %1848 = vmatpush1.msra.mxu0 0.0
      %1849 = vmatprep.subr.mxu0 0.0
      %1850 = vmatpush1.msra.mxu0 0.0
      %1851 = vmatprep.subr.mxu0 0.0
      %1852 = vmatpush1.msra.mxu0 0.0
      %1853 = vmatprep.subr.mxu0 0.0
      %1854 = vmatpush1.msra.mxu0 0.0
      %1855 = vmatprep.subr.mxu0 0.0
      %1856 = vmatpush1.msra.mxu0 0.0
      %1857 = vmatprep.subr.mxu0 0.0
      %1858 = vmatpush1.msra.mxu0 0.0
      %1859 = vmatprep.subr.mxu0 0.0
      %1860 = vmatpush1.msra.mxu0 0.0
      %1861 = vmatprep.mubr.f32.mxu0 0.0
      %1862 = vmatmul.mubr.f32.gmra.mrb[0].mxu0 %v1706
      %v1863 = vpop.f32.mrb[0].mxu0
      %v1864 = vadd.f32 %v954, %v1863
      %v1865 = vpop.f32.mrb[0].mxu0
      %1866 = vdwg.mxu0
      %v1867 = vadd.f32 %v1723, %v1793
      %v1868 = vxor.u32 %v1867, 2147483648
      %v1869 = vmul.f32 %v1868, 1.442695
      %v1870 = vpow.pop %v1869
      %v1871 = vadd.f32 %v1870, 1.0
      %v1872 = vrcp.pop %v1871
      %v1873 = vmul.f32 1.0, %v1872
      %v1874 = vadd.f32 %v1724, %v1795
      %v1875 = vxor.u32 %v1874, 2147483648
      %v1876 = vmul.f32 %v1875, 1.442695
      %v1877 = vpow.pop %v1876
      %v1878 = vadd.f32 %v1877, 1.0
      %v1879 = vrcp.pop %v1878
      %v1880 = vmul.f32 1.0, %v1879
      %v1881 = vmul.f32 %v1873, %v1864
      %v1882 = vadd.f32 %v1725, %v1881
      %v1883 = vtanh.pop %v1882
      %v1884 = vsub.f32 %v1706, %v1883
      %v1885 = vmul.f32 %v1880, %v1884
      %v1886 = vadd.f32 %v1883, %v1885
      %v1887 = vstv %s1716
      %vm1888 = vcmp.gt.s32.totalorder %v877, %v1887
      %v1889 = vsel %vm1888, 1, 0
      %v1890 = vcvt.s32.f32 %v1889
      %v1891 = vsub.f32 %v1886, %v1706
      %1893 = vset.pattern.permute.xlu0 0
      %1894 = vperm.xlu0 %1893, %v1890
      %v1895 = vpop.permute.xlu0 %1894
      %v1897 = vmul.f32 %v1895, %v1891
      %v1898 = vadd.f32 %v1706, %v1897
      %v1899 = vmul.f32 %v1895, %v1886
      %s1900 = scalar_lea.vmem %s427, %s1717
      %1901 = vst [vmem:[%s1900] sm:$0xff] %v1899
      %s1902 = smul.u32 %s23, 5
      %s1903 = sadd.s32 %s1902, 5
      %s1904 = sadd.s32 %s928, 5
      %s1905 = smul.u32 %s1904, 2
      %s1906 = ssub.s32 15, %s1905
      %s1907 = smul.u32 %s23, %s1906
      %s1908 = sadd.s32 %s1904, %s1907
      %s1909 = smul.u32 %s1903, 8
      %s1910 = sshra.s32 %s1909, 3
      %s1911 = sand.u32 %s1909, 7
      %s1912 = smul.u32 %s1910, 3
      %s1913 = smul.addr %s1912, 8
      %s1914 = scalar_lea.vmem [#allocation2], %s1913
      %v1915 = vld [vmem:[%s1914] sm:$0xff]
      %v1916 = vld [vmem:[%s1914 + $0x8] sm:$0xff]
      %v1917 = vld [vmem:[%s1914 + $0x10] sm:$0xff]
      %1918 = vmatprep.subr.mxu0 %v879
      %1919 = vmatpush1.msra.mxu0 %v878
      %1920 = vmatprep.subr.mxu0 %v882
      %1921 = vmatpush1.msra.mxu0 %v881
      %1922 = vmatprep.subr.mxu0 %v885
      %1923 = vmatpush1.msra.mxu0 %v884
      %1924 = vmatprep.subr.mxu0 %v888
      %1925 = vmatpush1.msra.mxu0 %v887
      %1926 = vmatprep.subr.mxu0 %v891
      %1927 = vmatpush1.msra.mxu0 %v890
      %1928 = vmatprep.subr.mxu0 %v894
      %1929 = vmatpush1.msra.mxu0 %v893
      %1930 = vmatprep.subr.mxu0 %v897
      %1931 = vmatpush1.msra.mxu0 %v896
      %1932 = vmatprep.subr.mxu0 %v900
      %1933 = vmatpush1.msra.mxu0 %v899
      %1934 = vmatprep.subr.mxu0 %v903
      %1935 = vmatpush1.msra.mxu0 %v902
      %1936 = vmatprep.subr.mxu0 %v906
      %1937 = vmatpush1.msra.mxu0 %v905
      %1938 = vmatprep.subr.mxu0 %v909
      %1939 = vmatpush1.msra.mxu0 %v908
      %1940 = vmatprep.subr.mxu0 %v912
      %1941 = vmatpush1.msra.mxu0 %v911
      %1942 = vmatprep.subr.mxu0 %v915
      %1943 = vmatpush1.msra.mxu0 %v914
      %1944 = vmatprep.subr.mxu0 %v918
      %1945 = vmatpush1.msra.mxu0 %v917
      %1946 = vmatprep.subr.mxu0 %v921
      %1947 = vmatpush1.msra.mxu0 %v920
      %1948 = vmatprep.subr.mxu0 %v924
      %1949 = vmatpush1.msra.mxu0 %v923
      %1950 = vmatprep.subr.mxu0 0.0
      %1951 = vmatpush1.msra.mxu0 0.0
      %1952 = vmatprep.subr.mxu0 0.0
      %1953 = vmatpush1.msra.mxu0 0.0
      %1954 = vmatprep.subr.mxu0 0.0
      %1955 = vmatpush1.msra.mxu0 0.0
      %1956 = vmatprep.subr.mxu0 0.0
      %1957 = vmatpush1.msra.mxu0 0.0
      %1958 = vmatprep.subr.mxu0 0.0
      %1959 = vmatpush1.msra.mxu0 0.0
      %1960 = vmatprep.subr.mxu0 0.0
      %1961 = vmatpush1.msra.mxu0 0.0
      %1962 = vmatprep.subr.mxu0 0.0
      %1963 = vmatpush1.msra.mxu0 0.0
      %1964 = vmatprep.subr.mxu0 0.0
      %1965 = vmatpush1.msra.mxu0 0.0
      %1966 = vmatprep.subr.mxu0 0.0
      %1967 = vmatpush1.msra.mxu0 0.0
      %1968 = vmatprep.subr.mxu0 0.0
      %1969 = vmatpush1.msra.mxu0 0.0
      %1970 = vmatprep.subr.mxu0 0.0
      %1971 = vmatpush1.msra.mxu0 0.0
      %1972 = vmatprep.subr.mxu0 0.0
      %1973 = vmatpush1.msra.mxu0 0.0
      %1974 = vmatprep.subr.mxu0 0.0
      %1975 = vmatpush1.msra.mxu0 0.0
      %1976 = vmatprep.subr.mxu0 0.0
      %1977 = vmatpush1.msra.mxu0 0.0
      %1978 = vmatprep.subr.mxu0 0.0
      %1979 = vmatpush1.msra.mxu0 0.0
      %1980 = vmatprep.subr.mxu0 0.0
      %1981 = vmatpush1.msra.mxu0 0.0
      %1982 = vmatprep.mubr.f32.mxu0 0.0
      %1983 = vmatmul.mubr.f32.gmra.mrb[0].mxu0 %v1898
      %v1984 = vpop.f32.mrb[0].mxu0
      %v1985 = vadd.f32 %v946, %v1984
      %v1986 = vpop.f32.mrb[0].mxu0
      %v1987 = vadd.f32 %v950, %v1986
      %1988 = vdwg.mxu0
      %1989 = vmatprep.subr.mxu0 0.0
      %1990 = vmatpush1.msra.mxu0 %v880
      %1991 = vmatprep.subr.mxu0 0.0
      %1992 = vmatpush1.msra.mxu0 %v883
      %1993 = vmatprep.subr.mxu0 0.0
      %1994 = vmatpush1.msra.mxu0 %v886
      %1995 = vmatprep.subr.mxu0 0.0
      %1996 = vmatpush1.msra.mxu0 %v889
      %1997 = vmatprep.subr.mxu0 0.0
      %1998 = vmatpush1.msra.mxu0 %v892
      %1999 = vmatprep.subr.mxu0 0.0
      %2000 = vmatpush1.msra.mxu0 %v895
      %2001 = vmatprep.subr.mxu0 0.0
      %2002 = vmatpush1.msra.mxu0 %v898
      %2003 = vmatprep.subr.mxu0 0.0
      %2004 = vmatpush1.msra.mxu0 %v901
      %2005 = vmatprep.subr.mxu0 0.0
      %2006 = vmatpush1.msra.mxu0 %v904
      %2007 = vmatprep.subr.mxu0 0.0
      %2008 = vmatpush1.msra.mxu0 %v907
      %2009 = vmatprep.subr.mxu0 0.0
      %2010 = vmatpush1.msra.mxu0 %v910
      %2011 = vmatprep.subr.mxu0 0.0
      %2012 = vmatpush1.msra.mxu0 %v913
      %2013 = vmatprep.subr.mxu0 0.0
      %2014 = vmatpush1.msra.mxu0 %v916
      %2015 = vmatprep.subr.mxu0 0.0
      %2016 = vmatpush1.msra.mxu0 %v919
      %2017 = vmatprep.subr.mxu0 0.0
      %2018 = vmatpush1.msra.mxu0 %v922
      %2019 = vmatprep.subr.mxu0 0.0
      %2020 = vmatpush1.msra.mxu0 %v925
      %2021 = vmatprep.subr.mxu0 0.0
      %2022 = vmatpush1.msra.mxu0 0.0
      %2023 = vmatprep.subr.mxu0 0.0
      %2024 = vmatpush1.msra.mxu0 0.0
      %2025 = vmatprep.subr.mxu0 0.0
      %2026 = vmatpush1.msra.mxu0 0.0
      %2027 = vmatprep.subr.mxu0 0.0
      %2028 = vmatpush1.msra.mxu0 0.0
      %2029 = vmatprep.subr.mxu0 0.0
      %2030 = vmatpush1.msra.mxu0 0.0
      %2031 = vmatprep.subr.mxu0 0.0
      %2032 = vmatpush1.msra.mxu0 0.0
      %2033 = vmatprep.subr.mxu0 0.0
      %2034 = vmatpush1.msra.mxu0 0.0
      %2035 = vmatprep.subr.mxu0 0.0
      %2036 = vmatpush1.msra.mxu0 0.0
      %2037 = vmatprep.subr.mxu0 0.0
      %2038 = vmatpush1.msra.mxu0 0.0
      %2039 = vmatprep.subr.mxu0 0.0
      %2040 = vmatpush1.msra.mxu0 0.0
      %2041 = vmatprep.subr.mxu0 0.0
      %2042 = vmatpush1.msra.mxu0 0.0
      %2043 = vmatprep.subr.mxu0 0.0
      %2044 = vmatpush1.msra.mxu0 0.0
      %2045 = vmatprep.subr.mxu0 0.0
      %2046 = vmatpush1.msra.mxu0 0.0
      %2047 = vmatprep.subr.mxu0 0.0
      %2048 = vmatpush1.msra.mxu0 0.0
      %2049 = vmatprep.subr.mxu0 0.0
      %2050 = vmatpush1.msra.mxu0 0.0
      %2051 = vmatprep.subr.mxu0 0.0
      %2052 = vmatpush1.msra.mxu0 0.0
      %2053 = vmatprep.mubr.f32.mxu0 0.0
      %2054 = vmatmul.mubr.f32.gmra.mrb[0].mxu0 %v1898
      %v2055 = vpop.f32.mrb[0].mxu0
      %v2056 = vadd.f32 %v954, %v2055
      %v2057 = vpop.f32.mrb[0].mxu0
      %2058 = vdwg.mxu0
      %v2059 = vadd.f32 %v1915, %v1985
      %v2060 = vxor.u32 %v2059, 2147483648
      %v2061 = vmul.f32 %v2060, 1.442695
      %v2062 = vpow.pop %v2061
      %v2063 = vadd.f32 %v2062, 1.0
      %v2064 = vrcp.pop %v2063
      %v2065 = vmul.f32 1.0, %v2064
      %v2066 = vadd.f32 %v1916, %v1987
      %v2067 = vxor.u32 %v2066, 2147483648
      %v2068 = vmul.f32 %v2067, 1.442695
      %v2069 = vpow.pop %v2068
      %v2070 = vadd.f32 %v2069, 1.0
      %v2071 = vrcp.pop %v2070
      %v2072 = vmul.f32 1.0, %v2071
      %v2073 = vmul.f32 %v2065, %v2056
      %v2074 = vadd.f32 %v1917, %v2073
      %v2075 = vtanh.pop %v2074
      %v2076 = vsub.f32 %v1898, %v2075
      %v2077 = vmul.f32 %v2072, %v2076
      %v2078 = vadd.f32 %v2075, %v2077
      %v2079 = vstv %s1908
      %vm2080 = vcmp.gt.s32.totalorder %v877, %v2079
      %v2081 = vsel %vm2080, 1, 0
      %v2082 = vcvt.s32.f32 %v2081
      %v2083 = vsub.f32 %v2078, %v1898
      %2085 = vset.pattern.permute.xlu0 0
      %2086 = vperm.xlu0 %2085, %v2082
      %v2087 = vpop.permute.xlu0 %2086
      %v2089 = vmul.f32 %v2087, %v2083
      %v2090 = vadd.f32 %v1898, %v2089
      %v2091 = vmul.f32 %v2087, %v2078
      %s2092 = scalar_lea.vmem %s427, %s1909
      %2093 = vst [vmem:[%s2092] sm:$0xff] %v2091
      %s2094 = smul.u32 %s23, 3
      %s2095 = sadd.s32 %s2094, 6
      %s2096 = sadd.s32 %s928, 6
      %s2097 = smul.u32 %s2096, 2
      %s2098 = ssub.s32 15, %s2097
      %s2099 = smul.u32 %s23, %s2098
      %s2100 = sadd.s32 %s2096, %s2099
      %s2101 = smul.u32 %s2095, 8
      %s2102 = sshra.s32 %s2101, 3
      %s2103 = sand.u32 %s2101, 7
      %s2104 = smul.u32 %s2102, 3
      %s2105 = smul.addr %s2104, 8
      %s2106 = scalar_lea.vmem [#allocation2], %s2105
      %v2107 = vld [vmem:[%s2106] sm:$0xff]
      %v2108 = vld [vmem:[%s2106 + $0x8] sm:$0xff]
      %v2109 = vld [vmem:[%s2106 + $0x10] sm:$0xff]
      %2110 = vmatprep.subr.mxu0 %v879
      %2111 = vmatpush1.msra.mxu0 %v878
      %2112 = vmatprep.subr.mxu0 %v882
      %2113 = vmatpush1.msra.mxu0 %v881
      %2114 = vmatprep.subr.mxu0 %v885
      %2115 = vmatpush1.msra.mxu0 %v884
      %2116 = vmatprep.subr.mxu0 %v888
      %2117 = vmatpush1.msra.mxu0 %v887
      %2118 = vmatprep.subr.mxu0 %v891
      %2119 = vmatpush1.msra.mxu0 %v890
      %2120 = vmatprep.subr.mxu0 %v894
      %2121 = vmatpush1.msra.mxu0 %v893
      %2122 = vmatprep.subr.mxu0 %v897
      %2123 = vmatpush1.msra.mxu0 %v896
      %2124 = vmatprep.subr.mxu0 %v900
      %2125 = vmatpush1.msra.mxu0 %v899
      %2126 = vmatprep.subr.mxu0 %v903
      %2127 = vmatpush1.msra.mxu0 %v902
      %2128 = vmatprep.subr.mxu0 %v906
      %2129 = vmatpush1.msra.mxu0 %v905
      %2130 = vmatprep.subr.mxu0 %v909
      %2131 = vmatpush1.msra.mxu0 %v908
      %2132 = vmatprep.subr.mxu0 %v912
      %2133 = vmatpush1.msra.mxu0 %v911
      %2134 = vmatprep.subr.mxu0 %v915
      %2135 = vmatpush1.msra.mxu0 %v914
      %2136 = vmatprep.subr.mxu0 %v918
      %2137 = vmatpush1.msra.mxu0 %v917
      %2138 = vmatprep.subr.mxu0 %v921
      %2139 = vmatpush1.msra.mxu0 %v920
      %2140 = vmatprep.subr.mxu0 %v924
      %2141 = vmatpush1.msra.mxu0 %v923
      %2142 = vmatprep.subr.mxu0 0.0
      %2143 = vmatpush1.msra.mxu0 0.0
      %2144 = vmatprep.subr.mxu0 0.0
      %2145 = vmatpush1.msra.mxu0 0.0
      %2146 = vmatprep.subr.mxu0 0.0
      %2147 = vmatpush1.msra.mxu0 0.0
      %2148 = vmatprep.subr.mxu0 0.0
      %2149 = vmatpush1.msra.mxu0 0.0
      %2150 = vmatprep.subr.mxu0 0.0
      %2151 = vmatpush1.msra.mxu0 0.0
      %2152 = vmatprep.subr.mxu0 0.0
      %2153 = vmatpush1.msra.mxu0 0.0
      %2154 = vmatprep.subr.mxu0 0.0
      %2155 = vmatpush1.msra.mxu0 0.0
      %2156 = vmatprep.subr.mxu0 0.0
      %2157 = vmatpush1.msra.mxu0 0.0
      %2158 = vmatprep.subr.mxu0 0.0
      %2159 = vmatpush1.msra.mxu0 0.0
      %2160 = vmatprep.subr.mxu0 0.0
      %2161 = vmatpush1.msra.mxu0 0.0
      %2162 = vmatprep.subr.mxu0 0.0
      %2163 = vmatpush1.msra.mxu0 0.0
      %2164 = vmatprep.subr.mxu0 0.0
      %2165 = vmatpush1.msra.mxu0 0.0
      %2166 = vmatprep.subr.mxu0 0.0
      %2167 = vmatpush1.msra.mxu0 0.0
      %2168 = vmatprep.subr.mxu0 0.0
      %2169 = vmatpush1.msra.mxu0 0.0
      %2170 = vmatprep.subr.mxu0 0.0
      %2171 = vmatpush1.msra.mxu0 0.0
      %2172 = vmatprep.subr.mxu0 0.0
      %2173 = vmatpush1.msra.mxu0 0.0
      %2174 = vmatprep.mubr.f32.mxu0 0.0
      %2175 = vmatmul.mubr.f32.gmra.mrb[0].mxu0 %v2090
      %v2176 = vpop.f32.mrb[0].mxu0
      %v2177 = vadd.f32 %v946, %v2176
      %v2178 = vpop.f32.mrb[0].mxu0
      %v2179 = vadd.f32 %v950, %v2178
      %2180 = vdwg.mxu0
      %2181 = vmatprep.subr.mxu0 0.0
      %2182 = vmatpush1.msra.mxu0 %v880
      %2183 = vmatprep.subr.mxu0 0.0
      %2184 = vmatpush1.msra.mxu0 %v883
      %2185 = vmatprep.subr.mxu0 0.0
      %2186 = vmatpush1.msra.mxu0 %v886
      %2187 = vmatprep.subr.mxu0 0.0
      %2188 = vmatpush1.msra.mxu0 %v889
      %2189 = vmatprep.subr.mxu0 0.0
      %2190 = vmatpush1.msra.mxu0 %v892
      %2191 = vmatprep.subr.mxu0 0.0
      %2192 = vmatpush1.msra.mxu0 %v895
      %2193 = vmatprep.subr.mxu0 0.0
      %2194 = vmatpush1.msra.mxu0 %v898
      %2195 = vmatprep.subr.mxu0 0.0
      %2196 = vmatpush1.msra.mxu0 %v901
      %2197 = vmatprep.subr.mxu0 0.0
      %2198 = vmatpush1.msra.mxu0 %v904
      %2199 = vmatprep.subr.mxu0 0.0
      %2200 = vmatpush1.msra.mxu0 %v907
      %2201 = vmatprep.subr.mxu0 0.0
      %2202 = vmatpush1.msra.mxu0 %v910
      %2203 = vmatprep.subr.mxu0 0.0
      %2204 = vmatpush1.msra.mxu0 %v913
      %2205 = vmatprep.subr.mxu0 0.0
      %2206 = vmatpush1.msra.mxu0 %v916
      %2207 = vmatprep.subr.mxu0 0.0
      %2208 = vmatpush1.msra.mxu0 %v919
      %2209 = vmatprep.subr.mxu0 0.0
      %2210 = vmatpush1.msra.mxu0 %v922
      %2211 = vmatprep.subr.mxu0 0.0
      %2212 = vmatpush1.msra.mxu0 %v925
      %2213 = vmatprep.subr.mxu0 0.0
      %2214 = vmatpush1.msra.mxu0 0.0
      %2215 = vmatprep.subr.mxu0 0.0
      %2216 = vmatpush1.msra.mxu0 0.0
      %2217 = vmatprep.subr.mxu0 0.0
      %2218 = vmatpush1.msra.mxu0 0.0
      %2219 = vmatprep.subr.mxu0 0.0
      %2220 = vmatpush1.msra.mxu0 0.0
      %2221 = vmatprep.subr.mxu0 0.0
      %2222 = vmatpush1.msra.mxu0 0.0
      %2223 = vmatprep.subr.mxu0 0.0
      %2224 = vmatpush1.msra.mxu0 0.0
      %2225 = vmatprep.subr.mxu0 0.0
      %2226 = vmatpush1.msra.mxu0 0.0
      %2227 = vmatprep.subr.mxu0 0.0
      %2228 = vmatpush1.msra.mxu0 0.0
      %2229 = vmatprep.subr.mxu0 0.0
      %2230 = vmatpush1.msra.mxu0 0.0
      %2231 = vmatprep.subr.mxu0 0.0
      %2232 = vmatpush1.msra.mxu0 0.0
      %2233 = vmatprep.subr.mxu0 0.0
      %2234 = vmatpush1.msra.mxu0 0.0
      %2235 = vmatprep.subr.mxu0 0.0
      %2236 = vmatpush1.msra.mxu0 0.0
      %2237 = vmatprep.subr.mxu0 0.0
      %2238 = vmatpush1.msra.mxu0 0.0
      %2239 = vmatprep.subr.mxu0 0.0
      %2240 = vmatpush1.msra.mxu0 0.0
      %2241 = vmatprep.subr.mxu0 0.0
      %2242 = vmatpush1.msra.mxu0 0.0
      %2243 = vmatprep.subr.mxu0 0.0
      %2244 = vmatpush1.msra.mxu0 0.0
      %2245 = vmatprep.mubr.f32.mxu0 0.0
      %2246 = vmatmul.mubr.f32.gmra.mrb[0].mxu0 %v2090
      %v2247 = vpop.f32.mrb[0].mxu0
      %v2248 = vadd.f32 %v954, %v2247
      %v2249 = vpop.f32.mrb[0].mxu0
      %2250 = vdwg.mxu0
      %v2251 = vadd.f32 %v2107, %v2177
      %v2252 = vxor.u32 %v2251, 2147483648
      %v2253 = vmul.f32 %v2252, 1.442695
      %v2254 = vpow.pop %v2253
      %v2255 = vadd.f32 %v2254, 1.0
      %v2256 = vrcp.pop %v2255
      %v2257 = vmul.f32 1.0, %v2256
      %v2258 = vadd.f32 %v2108, %v2179
      %v2259 = vxor.u32 %v2258, 2147483648
      %v2260 = vmul.f32 %v2259, 1.442695
      %v2261 = vpow.pop %v2260
      %v2262 = vadd.f32 %v2261, 1.0
      %v2263 = vrcp.pop %v2262
      %v2264 = vmul.f32 1.0, %v2263
      %v2265 = vmul.f32 %v2257, %v2248
      %v2266 = vadd.f32 %v2109, %v2265
      %v2267 = vtanh.pop %v2266
      %v2268 = vsub.f32 %v2090, %v2267
      %v2269 = vmul.f32 %v2264, %v2268
      %v2270 = vadd.f32 %v2267, %v2269
      %v2271 = vstv %s2100
      %vm2272 = vcmp.gt.s32.totalorder %v877, %v2271
      %v2273 = vsel %vm2272, 1, 0
      %v2274 = vcvt.s32.f32 %v2273
      %v2275 = vsub.f32 %v2270, %v2090
      %2277 = vset.pattern.permute.xlu0 0
      %2278 = vperm.xlu0 %2277, %v2274
      %v2279 = vpop.permute.xlu0 %2278
      %v2281 = vmul.f32 %v2279, %v2275
      %v2282 = vadd.f32 %v2090, %v2281
      %v2283 = vmul.f32 %v2279, %v2270
      %s2284 = scalar_lea.vmem %s427, %s2101
      %2285 = vst [vmem:[%s2284] sm:$0xff] %v2283
      %s2286 = sadd.s32 %s23, 7
      %s2287 = sadd.s32 %s928, 7
      %s2288 = smul.u32 %s2287, 2
      %s2289 = ssub.s32 15, %s2288
      %s2290 = smul.u32 %s23, %s2289
      %s2291 = sadd.s32 %s2287, %s2290
      %s2292 = smul.u32 %s2286, 8
      %s2293 = sshra.s32 %s2292, 3
      %s2294 = sand.u32 %s2292, 7
      %s2295 = smul.u32 %s2293, 3
      %s2296 = smul.addr %s2295, 8
      %s2297 = scalar_lea.vmem [#allocation2], %s2296
      %v2298 = vld [vmem:[%s2297] sm:$0xff]
      %v2299 = vld [vmem:[%s2297 + $0x8] sm:$0xff]
      %v2300 = vld [vmem:[%s2297 + $0x10] sm:$0xff]
      %2301 = vmatprep.subr.mxu0 %v879
      %2302 = vmatpush1.msra.mxu0 %v878
      %2303 = vmatprep.subr.mxu0 %v882
      %2304 = vmatpush1.msra.mxu0 %v881
      %2305 = vmatprep.subr.mxu0 %v885
      %2306 = vmatpush1.msra.mxu0 %v884
      %2307 = vmatprep.subr.mxu0 %v888
      %2308 = vmatpush1.msra.mxu0 %v887
      %2309 = vmatprep.subr.mxu0 %v891
      %2310 = vmatpush1.msra.mxu0 %v890
      %2311 = vmatprep.subr.mxu0 %v894
      %2312 = vmatpush1.msra.mxu0 %v893
      %2313 = vmatprep.subr.mxu0 %v897
      %2314 = vmatpush1.msra.mxu0 %v896
      %2315 = vmatprep.subr.mxu0 %v900
      %2316 = vmatpush1.msra.mxu0 %v899
      %2317 = vmatprep.subr.mxu0 %v903
      %2318 = vmatpush1.msra.mxu0 %v902
      %2319 = vmatprep.subr.mxu0 %v906
      %2320 = vmatpush1.msra.mxu0 %v905
      %2321 = vmatprep.subr.mxu0 %v909
      %2322 = vmatpush1.msra.mxu0 %v908
      %2323 = vmatprep.subr.mxu0 %v912
      %2324 = vmatpush1.msra.mxu0 %v911
      %2325 = vmatprep.subr.mxu0 %v915
      %2326 = vmatpush1.msra.mxu0 %v914
      %2327 = vmatprep.subr.mxu0 %v918
      %2328 = vmatpush1.msra.mxu0 %v917
      %2329 = vmatprep.subr.mxu0 %v921
      %2330 = vmatpush1.msra.mxu0 %v920
      %2331 = vmatprep.subr.mxu0 %v924
      %2332 = vmatpush1.msra.mxu0 %v923
      %2333 = vmatprep.subr.mxu0 0.0
      %2334 = vmatpush1.msra.mxu0 0.0
      %2335 = vmatprep.subr.mxu0 0.0
      %2336 = vmatpush1.msra.mxu0 0.0
      %2337 = vmatprep.subr.mxu0 0.0
      %2338 = vmatpush1.msra.mxu0 0.0
      %2339 = vmatprep.subr.mxu0 0.0
      %2340 = vmatpush1.msra.mxu0 0.0
      %2341 = vmatprep.subr.mxu0 0.0
      %2342 = vmatpush1.msra.mxu0 0.0
      %2343 = vmatprep.subr.mxu0 0.0
      %2344 = vmatpush1.msra.mxu0 0.0
      %2345 = vmatprep.subr.mxu0 0.0
      %2346 = vmatpush1.msra.mxu0 0.0
      %2347 = vmatprep.subr.mxu0 0.0
      %2348 = vmatpush1.msra.mxu0 0.0
      %2349 = vmatprep.subr.mxu0 0.0
      %2350 = vmatpush1.msra.mxu0 0.0
      %2351 = vmatprep.subr.mxu0 0.0
      %2352 = vmatpush1.msra.mxu0 0.0
      %2353 = vmatprep.subr.mxu0 0.0
      %2354 = vmatpush1.msra.mxu0 0.0
      %2355 = vmatprep.subr.mxu0 0.0
      %2356 = vmatpush1.msra.mxu0 0.0
      %2357 = vmatprep.subr.mxu0 0.0
      %2358 = vmatpush1.msra.mxu0 0.0
      %2359 = vmatprep.subr.mxu0 0.0
      %2360 = vmatpush1.msra.mxu0 0.0
      %2361 = vmatprep.subr.mxu0 0.0
      %2362 = vmatpush1.msra.mxu0 0.0
      %2363 = vmatprep.subr.mxu0 0.0
      %2364 = vmatpush1.msra.mxu0 0.0
      %2365 = vmatprep.mubr.f32.mxu0 0.0
      %2366 = vmatmul.mubr.f32.gmra.mrb[0].mxu0 %v2282
      %v2367 = vpop.f32.mrb[0].mxu0
      %v2368 = vadd.f32 %v946, %v2367
      %v2369 = vpop.f32.mrb[0].mxu0
      %v2370 = vadd.f32 %v950, %v2369
      %2371 = vdwg.mxu0
      %2372 = vmatprep.subr.mxu0 0.0
      %2373 = vmatpush1.msra.mxu0 %v880
      %2374 = vmatprep.subr.mxu0 0.0
      %2375 = vmatpush1.msra.mxu0 %v883
      %2376 = vmatprep.subr.mxu0 0.0
      %2377 = vmatpush1.msra.mxu0 %v886
      %2378 = vmatprep.subr.mxu0 0.0
      %2379 = vmatpush1.msra.mxu0 %v889
      %2380 = vmatprep.subr.mxu0 0.0
      %2381 = vmatpush1.msra.mxu0 %v892
      %2382 = vmatprep.subr.mxu0 0.0
      %2383 = vmatpush1.msra.mxu0 %v895
      %2384 = vmatprep.subr.mxu0 0.0
      %2385 = vmatpush1.msra.mxu0 %v898
      %2386 = vmatprep.subr.mxu0 0.0
      %2387 = vmatpush1.msra.mxu0 %v901
      %2388 = vmatprep.subr.mxu0 0.0
      %2389 = vmatpush1.msra.mxu0 %v904
      %2390 = vmatprep.subr.mxu0 0.0
      %2391 = vmatpush1.msra.mxu0 %v907
      %2392 = vmatprep.subr.mxu0 0.0
      %2393 = vmatpush1.msra.mxu0 %v910
      %2394 = vmatprep.subr.mxu0 0.0
      %2395 = vmatpush1.msra.mxu0 %v913
      %2396 = vmatprep.subr.mxu0 0.0
      %2397 = vmatpush1.msra.mxu0 %v916
      %2398 = vmatprep.subr.mxu0 0.0
      %2399 = vmatpush1.msra.mxu0 %v919
      %2400 = vmatprep.subr.mxu0 0.0
      %2401 = vmatpush1.msra.mxu0 %v922
      %2402 = vmatprep.subr.mxu0 0.0
      %2403 = vmatpush1.msra.mxu0 %v925
      %2404 = vmatprep.subr.mxu0 0.0
      %2405 = vmatpush1.msra.mxu0 0.0
      %2406 = vmatprep.subr.mxu0 0.0
      %2407 = vmatpush1.msra.mxu0 0.0
      %2408 = vmatprep.subr.mxu0 0.0
      %2409 = vmatpush1.msra.mxu0 0.0
      %2410 = vmatprep.subr.mxu0 0.0
      %2411 = vmatpush1.msra.mxu0 0.0
      %2412 = vmatprep.subr.mxu0 0.0
      %2413 = vmatpush1.msra.mxu0 0.0
      %2414 = vmatprep.subr.mxu0 0.0
      %2415 = vmatpush1.msra.mxu0 0.0
      %2416 = vmatprep.subr.mxu0 0.0
      %2417 = vmatpush1.msra.mxu0 0.0
      %2418 = vmatprep.subr.mxu0 0.0
      %2419 = vmatpush1.msra.mxu0 0.0
      %2420 = vmatprep.subr.mxu0 0.0
      %2421 = vmatpush1.msra.mxu0 0.0
      %2422 = vmatprep.subr.mxu0 0.0
      %2423 = vmatpush1.msra.mxu0 0.0
      %2424 = vmatprep.subr.mxu0 0.0
      %2425 = vmatpush1.msra.mxu0 0.0
      %2426 = vmatprep.subr.mxu0 0.0
      %2427 = vmatpush1.msra.mxu0 0.0
      %2428 = vmatprep.subr.mxu0 0.0
      %2429 = vmatpush1.msra.mxu0 0.0
      %2430 = vmatprep.subr.mxu0 0.0
      %2431 = vmatpush1.msra.mxu0 0.0
      %2432 = vmatprep.subr.mxu0 0.0
      %2433 = vmatpush1.msra.mxu0 0.0
      %2434 = vmatprep.subr.mxu0 0.0
      %2435 = vmatpush1.msra.mxu0 0.0
      %2436 = vmatprep.mubr.f32.mxu0 0.0
      %2437 = vmatmul.mubr.f32.gmra.mrb[0].mxu0 %v2282
      %v2438 = vpop.f32.mrb[0].mxu0
      %v2439 = vadd.f32 %v954, %v2438
      %v2440 = vpop.f32.mrb[0].mxu0
      %2441 = vdwg.mxu0
      %v2442 = vadd.f32 %v2298, %v2368
      %v2443 = vxor.u32 %v2442, 2147483648
      %v2444 = vmul.f32 %v2443, 1.442695
      %v2445 = vpow.pop %v2444
      %v2446 = vadd.f32 %v2445, 1.0
      %v2447 = vrcp.pop %v2446
      %v2448 = vmul.f32 1.0, %v2447
      %v2449 = vadd.f32 %v2299, %v2370
      %v2450 = vxor.u32 %v2449, 2147483648
      %v2451 = vmul.f32 %v2450, 1.442695
      %v2452 = vpow.pop %v2451
      %v2453 = vadd.f32 %v2452, 1.0
      %v2454 = vrcp.pop %v2453
      %v2455 = vmul.f32 1.0, %v2454
      %v2456 = vmul.f32 %v2448, %v2439
      %v2457 = vadd.f32 %v2300, %v2456
      %v2458 = vtanh.pop %v2457
      %v2459 = vsub.f32 %v2282, %v2458
      %v2460 = vmul.f32 %v2455, %v2459
      %v2461 = vadd.f32 %v2458, %v2460
      %v2462 = vstv %s2291
      %vm2463 = vcmp.gt.s32.totalorder %v877, %v2462
      %v2464 = vsel %vm2463, 1, 0
      %v2465 = vcvt.s32.f32 %v2464
      %v2466 = vsub.f32 %v2461, %v2282
      %2468 = vset.pattern.permute.xlu0 0
      %2469 = vperm.xlu0 %2468, %v2465
      %v2470 = vpop.permute.xlu0 %2469
      %v2472 = vmul.f32 %v2470, %v2466
      %v2473 = vadd.f32 %v2282, %v2472
      %v2474 = vmul.f32 %v2470, %v2461
      %s2475 = scalar_lea.vmem %s427, %s2292
      %2476 = vst [vmem:[%s2475] sm:$0xff] %v2474
      %s2477 = ssub.s32 8, %s23
      %s2478 = sadd.s32 %s928, 8
      %s2479 = smul.u32 %s2478, 2
      %s2480 = ssub.s32 15, %s2479
      %s2481 = smul.u32 %s23, %s2480
      %s2482 = sadd.s32 %s2478, %s2481
      %s2483 = smul.u32 %s2477, 8
      %s2484 = sshra.s32 %s2483, 3
      %s2485 = sand.u32 %s2483, 7
      %s2486 = smul.u32 %s2484, 3
      %s2487 = smul.addr %s2486, 8
      %s2488 = scalar_lea.vmem [#allocation2], %s2487
      %v2489 = vld [vmem:[%s2488] sm:$0xff]
      %v2490 = vld [vmem:[%s2488 + $0x8] sm:$0xff]
      %v2491 = vld [vmem:[%s2488 + $0x10] sm:$0xff]
      %2492 = vmatprep.subr.mxu0 %v879
      %2493 = vmatpush1.msra.mxu0 %v878
      %2494 = vmatprep.subr.mxu0 %v882
      %2495 = vmatpush1.msra.mxu0 %v881
      %2496 = vmatprep.subr.mxu0 %v885
      %2497 = vmatpush1.msra.mxu0 %v884
      %2498 = vmatprep.subr.mxu0 %v888
      %2499 = vmatpush1.msra.mxu0 %v887
      %2500 = vmatprep.subr.mxu0 %v891
      %2501 = vmatpush1.msra.mxu0 %v890
      %2502 = vmatprep.subr.mxu0 %v894
      %2503 = vmatpush1.msra.mxu0 %v893
      %2504 = vmatprep.subr.mxu0 %v897
      %2505 = vmatpush1.msra.mxu0 %v896
      %2506 = vmatprep.subr.mxu0 %v900
      %2507 = vmatpush1.msra.mxu0 %v899
      %2508 = vmatprep.subr.mxu0 %v903
      %2509 = vmatpush1.msra.mxu0 %v902
      %2510 = vmatprep.subr.mxu0 %v906
      %2511 = vmatpush1.msra.mxu0 %v905
      %2512 = vmatprep.subr.mxu0 %v909
      %2513 = vmatpush1.msra.mxu0 %v908
      %2514 = vmatprep.subr.mxu0 %v912
      %2515 = vmatpush1.msra.mxu0 %v911
      %2516 = vmatprep.subr.mxu0 %v915
      %2517 = vmatpush1.msra.mxu0 %v914
      %2518 = vmatprep.subr.mxu0 %v918
      %2519 = vmatpush1.msra.mxu0 %v917
      %2520 = vmatprep.subr.mxu0 %v921
      %2521 = vmatpush1.msra.mxu0 %v920
      %2522 = vmatprep.subr.mxu0 %v924
      %2523 = vmatpush1.msra.mxu0 %v923
      %2524 = vmatprep.subr.mxu0 0.0
      %2525 = vmatpush1.msra.mxu0 0.0
      %2526 = vmatprep.subr.mxu0 0.0
      %2527 = vmatpush1.msra.mxu0 0.0
      %2528 = vmatprep.subr.mxu0 0.0
      %2529 = vmatpush1.msra.mxu0 0.0
      %2530 = vmatprep.subr.mxu0 0.0
      %2531 = vmatpush1.msra.mxu0 0.0
      %2532 = vmatprep.subr.mxu0 0.0
      %2533 = vmatpush1.msra.mxu0 0.0
      %2534 = vmatprep.subr.mxu0 0.0
      %2535 = vmatpush1.msra.mxu0 0.0
      %2536 = vmatprep.subr.mxu0 0.0
      %2537 = vmatpush1.msra.mxu0 0.0
      %2538 = vmatprep.subr.mxu0 0.0
      %2539 = vmatpush1.msra.mxu0 0.0
      %2540 = vmatprep.subr.mxu0 0.0
      %2541 = vmatpush1.msra.mxu0 0.0
      %2542 = vmatprep.subr.mxu0 0.0
      %2543 = vmatpush1.msra.mxu0 0.0
      %2544 = vmatprep.subr.mxu0 0.0
      %2545 = vmatpush1.msra.mxu0 0.0
      %2546 = vmatprep.subr.mxu0 0.0
      %2547 = vmatpush1.msra.mxu0 0.0
      %2548 = vmatprep.subr.mxu0 0.0
      %2549 = vmatpush1.msra.mxu0 0.0
      %2550 = vmatprep.subr.mxu0 0.0
      %2551 = vmatpush1.msra.mxu0 0.0
      %2552 = vmatprep.subr.mxu0 0.0
      %2553 = vmatpush1.msra.mxu0 0.0
      %2554 = vmatprep.subr.mxu0 0.0
      %2555 = vmatpush1.msra.mxu0 0.0
      %2556 = vmatprep.mubr.f32.mxu0 0.0
      %2557 = vmatmul.mubr.f32.gmra.mrb[0].mxu0 %v2473
      %v2558 = vpop.f32.mrb[0].mxu0
      %v2559 = vadd.f32 %v946, %v2558
      %v2560 = vpop.f32.mrb[0].mxu0
      %v2561 = vadd.f32 %v950, %v2560
      %2562 = vdwg.mxu0
      %2563 = vmatprep.subr.mxu0 0.0
      %2564 = vmatpush1.msra.mxu0 %v880
      %2565 = vmatprep.subr.mxu0 0.0
      %2566 = vmatpush1.msra.mxu0 %v883
      %2567 = vmatprep.subr.mxu0 0.0
      %2568 = vmatpush1.msra.mxu0 %v886
      %2569 = vmatprep.subr.mxu0 0.0
      %2570 = vmatpush1.msra.mxu0 %v889
      %2571 = vmatprep.subr.mxu0 0.0
      %2572 = vmatpush1.msra.mxu0 %v892
      %2573 = vmatprep.subr.mxu0 0.0
      %2574 = vmatpush1.msra.mxu0 %v895
      %2575 = vmatprep.subr.mxu0 0.0
      %2576 = vmatpush1.msra.mxu0 %v898
      %2577 = vmatprep.subr.mxu0 0.0
      %2578 = vmatpush1.msra.mxu0 %v901
      %2579 = vmatprep.subr.mxu0 0.0
      %2580 = vmatpush1.msra.mxu0 %v904
      %2581 = vmatprep.subr.mxu0 0.0
      %2582 = vmatpush1.msra.mxu0 %v907
      %2583 = vmatprep.subr.mxu0 0.0
      %2584 = vmatpush1.msra.mxu0 %v910
      %2585 = vmatprep.subr.mxu0 0.0
      %2586 = vmatpush1.msra.mxu0 %v913
      %2587 = vmatprep.subr.mxu0 0.0
      %2588 = vmatpush1.msra.mxu0 %v916
      %2589 = vmatprep.subr.mxu0 0.0
      %2590 = vmatpush1.msra.mxu0 %v919
      %2591 = vmatprep.subr.mxu0 0.0
      %2592 = vmatpush1.msra.mxu0 %v922
      %2593 = vmatprep.subr.mxu0 0.0
      %2594 = vmatpush1.msra.mxu0 %v925
      %2595 = vmatprep.subr.mxu0 0.0
      %2596 = vmatpush1.msra.mxu0 0.0
      %2597 = vmatprep.subr.mxu0 0.0
      %2598 = vmatpush1.msra.mxu0 0.0
      %2599 = vmatprep.subr.mxu0 0.0
      %2600 = vmatpush1.msra.mxu0 0.0
      %2601 = vmatprep.subr.mxu0 0.0
      %2602 = vmatpush1.msra.mxu0 0.0
      %2603 = vmatprep.subr.mxu0 0.0
      %2604 = vmatpush1.msra.mxu0 0.0
      %2605 = vmatprep.subr.mxu0 0.0
      %2606 = vmatpush1.msra.mxu0 0.0
      %2607 = vmatprep.subr.mxu0 0.0
      %2608 = vmatpush1.msra.mxu0 0.0
      %2609 = vmatprep.subr.mxu0 0.0
      %2610 = vmatpush1.msra.mxu0 0.0
      %2611 = vmatprep.subr.mxu0 0.0
      %2612 = vmatpush1.msra.mxu0 0.0
      %2613 = vmatprep.subr.mxu0 0.0
      %2614 = vmatpush1.msra.mxu0 0.0
      %2615 = vmatprep.subr.mxu0 0.0
      %2616 = vmatpush1.msra.mxu0 0.0
      %2617 = vmatprep.subr.mxu0 0.0
      %2618 = vmatpush1.msra.mxu0 0.0
      %2619 = vmatprep.subr.mxu0 0.0
      %2620 = vmatpush1.msra.mxu0 0.0
      %2621 = vmatprep.subr.mxu0 0.0
      %2622 = vmatpush1.msra.mxu0 0.0
      %2623 = vmatprep.subr.mxu0 0.0
      %2624 = vmatpush1.msra.mxu0 0.0
      %2625 = vmatprep.subr.mxu0 0.0
      %2626 = vmatpush1.msra.mxu0 0.0
      %2627 = vmatprep.mubr.f32.mxu0 0.0
      %2628 = vmatmul.mubr.f32.gmra.mrb[0].mxu0 %v2473
      %v2629 = vpop.f32.mrb[0].mxu0
      %v2630 = vadd.f32 %v954, %v2629
      %v2631 = vpop.f32.mrb[0].mxu0
      %2632 = vdwg.mxu0
      %v2633 = vadd.f32 %v2489, %v2559
      %v2634 = vxor.u32 %v2633, 2147483648
      %v2635 = vmul.f32 %v2634, 1.442695
      %v2636 = vpow.pop %v2635
      %v2637 = vadd.f32 %v2636, 1.0
      %v2638 = vrcp.pop %v2637
      %v2639 = vmul.f32 1.0, %v2638
      %v2640 = vadd.f32 %v2490, %v2561
      %v2641 = vxor.u32 %v2640, 2147483648
      %v2642 = vmul.f32 %v2641, 1.442695
      %v2643 = vpow.pop %v2642
      %v2644 = vadd.f32 %v2643, 1.0
      %v2645 = vrcp.pop %v2644
      %v2646 = vmul.f32 1.0, %v2645
      %v2647 = vmul.f32 %v2639, %v2630
      %v2648 = vadd.f32 %v2491, %v2647
      %v2649 = vtanh.pop %v2648
      %v2650 = vsub.f32 %v2473, %v2649
      %v2651 = vmul.f32 %v2646, %v2650
      %v2652 = vadd.f32 %v2649, %v2651
      %v2653 = vstv %s2482
      %vm2654 = vcmp.gt.s32.totalorder %v877, %v2653
      %v2655 = vsel %vm2654, 1, 0
      %v2656 = vcvt.s32.f32 %v2655
      %v2657 = vsub.f32 %v2652, %v2473
      %2659 = vset.pattern.permute.xlu0 0
      %2660 = vperm.xlu0 %2659, %v2656
      %v2661 = vpop.permute.xlu0 %2660
      %v2663 = vmul.f32 %v2661, %v2657
      %v2664 = vadd.f32 %v2473, %v2663
      %v2665 = vmul.f32 %v2661, %v2652
      %s2666 = scalar_lea.vmem %s427, %s2483
      %2667 = vst [vmem:[%s2666] sm:$0xff] %v2665
      %s2668 = smul.u32 %s23, 4294967293
      %s2669 = sadd.s32 %s2668, 9
      %s2670 = sadd.s32 %s928, 9
      %s2671 = smul.u32 %s2670, 2
      %s2672 = ssub.s32 15, %s2671
      %s2673 = smul.u32 %s23, %s2672
      %s2674 = sadd.s32 %s2670, %s2673
      %s2675 = smul.u32 %s2669, 8
      %s2676 = sshra.s32 %s2675, 3
      %s2677 = sand.u32 %s2675, 7
      %s2678 = smul.u32 %s2676, 3
      %s2679 = smul.addr %s2678, 8
      %s2680 = scalar_lea.vmem [#allocation2], %s2679
      %v2681 = vld [vmem:[%s2680] sm:$0xff]
      %v2682 = vld [vmem:[%s2680 + $0x8] sm:$0xff]
      %v2683 = vld [vmem:[%s2680 + $0x10] sm:$0xff]
      %2684 = vmatprep.subr.mxu0 %v879
      %2685 = vmatpush1.msra.mxu0 %v878
      %2686 = vmatprep.subr.mxu0 %v882
      %2687 = vmatpush1.msra.mxu0 %v881
      %2688 = vmatprep.subr.mxu0 %v885
      %2689 = vmatpush1.msra.mxu0 %v884
      %2690 = vmatprep.subr.mxu0 %v888
      %2691 = vmatpush1.msra.mxu0 %v887
      %2692 = vmatprep.subr.mxu0 %v891
      %2693 = vmatpush1.msra.mxu0 %v890
      %2694 = vmatprep.subr.mxu0 %v894
      %2695 = vmatpush1.msra.mxu0 %v893
      %2696 = vmatprep.subr.mxu0 %v897
      %2697 = vmatpush1.msra.mxu0 %v896
      %2698 = vmatprep.subr.mxu0 %v900
      %2699 = vmatpush1.msra.mxu0 %v899
      %2700 = vmatprep.subr.mxu0 %v903
      %2701 = vmatpush1.msra.mxu0 %v902
      %2702 = vmatprep.subr.mxu0 %v906
      %2703 = vmatpush1.msra.mxu0 %v905
      %2704 = vmatprep.subr.mxu0 %v909
      %2705 = vmatpush1.msra.mxu0 %v908
      %2706 = vmatprep.subr.mxu0 %v912
      %2707 = vmatpush1.msra.mxu0 %v911
      %2708 = vmatprep.subr.mxu0 %v915
      %2709 = vmatpush1.msra.mxu0 %v914
      %2710 = vmatprep.subr.mxu0 %v918
      %2711 = vmatpush1.msra.mxu0 %v917
      %2712 = vmatprep.subr.mxu0 %v921
      %2713 = vmatpush1.msra.mxu0 %v920
      %2714 = vmatprep.subr.mxu0 %v924
      %2715 = vmatpush1.msra.mxu0 %v923
      %2716 = vmatprep.subr.mxu0 0.0
      %2717 = vmatpush1.msra.mxu0 0.0
      %2718 = vmatprep.subr.mxu0 0.0
      %2719 = vmatpush1.msra.mxu0 0.0
      %2720 = vmatprep.subr.mxu0 0.0
      %2721 = vmatpush1.msra.mxu0 0.0
      %2722 = vmatprep.subr.mxu0 0.0
      %2723 = vmatpush1.msra.mxu0 0.0
      %2724 = vmatprep.subr.mxu0 0.0
      %2725 = vmatpush1.msra.mxu0 0.0
      %2726 = vmatprep.subr.mxu0 0.0
      %2727 = vmatpush1.msra.mxu0 0.0
      %2728 = vmatprep.subr.mxu0 0.0
      %2729 = vmatpush1.msra.mxu0 0.0
      %2730 = vmatprep.subr.mxu0 0.0
      %2731 = vmatpush1.msra.mxu0 0.0
      %2732 = vmatprep.subr.mxu0 0.0
      %2733 = vmatpush1.msra.mxu0 0.0
      %2734 = vmatprep.subr.mxu0 0.0
      %2735 = vmatpush1.msra.mxu0 0.0
      %2736 = vmatprep.subr.mxu0 0.0
      %2737 = vmatpush1.msra.mxu0 0.0
      %2738 = vmatprep.subr.mxu0 0.0
      %2739 = vmatpush1.msra.mxu0 0.0
      %2740 = vmatprep.subr.mxu0 0.0
      %2741 = vmatpush1.msra.mxu0 0.0
      %2742 = vmatprep.subr.mxu0 0.0
      %2743 = vmatpush1.msra.mxu0 0.0
      %2744 = vmatprep.subr.mxu0 0.0
      %2745 = vmatpush1.msra.mxu0 0.0
      %2746 = vmatprep.subr.mxu0 0.0
      %2747 = vmatpush1.msra.mxu0 0.0
      %2748 = vmatprep.mubr.f32.mxu0 0.0
      %2749 = vmatmul.mubr.f32.gmra.mrb[0].mxu0 %v2664
      %v2750 = vpop.f32.mrb[0].mxu0
      %v2751 = vadd.f32 %v946, %v2750
      %v2752 = vpop.f32.mrb[0].mxu0
      %v2753 = vadd.f32 %v950, %v2752
      %2754 = vdwg.mxu0
      %2755 = vmatprep.subr.mxu0 0.0
      %2756 = vmatpush1.msra.mxu0 %v880
      %2757 = vmatprep.subr.mxu0 0.0
      %2758 = vmatpush1.msra.mxu0 %v883
      %2759 = vmatprep.subr.mxu0 0.0
      %2760 = vmatpush1.msra.mxu0 %v886
      %2761 = vmatprep.subr.mxu0 0.0
      %2762 = vmatpush1.msra.mxu0 %v889
      %2763 = vmatprep.subr.mxu0 0.0
      %2764 = vmatpush1.msra.mxu0 %v892
      %2765 = vmatprep.subr.mxu0 0.0
      %2766 = vmatpush1.msra.mxu0 %v895
      %2767 = vmatprep.subr.mxu0 0.0
      %2768 = vmatpush1.msra.mxu0 %v898
      %2769 = vmatprep.subr.mxu0 0.0
      %2770 = vmatpush1.msra.mxu0 %v901
      %2771 = vmatprep.subr.mxu0 0.0
      %2772 = vmatpush1.msra.mxu0 %v904
      %2773 = vmatprep.subr.mxu0 0.0
      %2774 = vmatpush1.msra.mxu0 %v907
      %2775 = vmatprep.subr.mxu0 0.0
      %2776 = vmatpush1.msra.mxu0 %v910
      %2777 = vmatprep.subr.mxu0 0.0
      %2778 = vmatpush1.msra.mxu0 %v913
      %2779 = vmatprep.subr.mxu0 0.0
      %2780 = vmatpush1.msra.mxu0 %v916
      %2781 = vmatprep.subr.mxu0 0.0
      %2782 = vmatpush1.msra.mxu0 %v919
      %2783 = vmatprep.subr.mxu0 0.0
      %2784 = vmatpush1.msra.mxu0 %v922
      %2785 = vmatprep.subr.mxu0 0.0
      %2786 = vmatpush1.msra.mxu0 %v925
      %2787 = vmatprep.subr.mxu0 0.0
      %2788 = vmatpush1.msra.mxu0 0.0
      %2789 = vmatprep.subr.mxu0 0.0
      %2790 = vmatpush1.msra.mxu0 0.0
      %2791 = vmatprep.subr.mxu0 0.0
      %2792 = vmatpush1.msra.mxu0 0.0
      %2793 = vmatprep.subr.mxu0 0.0
      %2794 = vmatpush1.msra.mxu0 0.0
      %2795 = vmatprep.subr.mxu0 0.0
      %2796 = vmatpush1.msra.mxu0 0.0
      %2797 = vmatprep.subr.mxu0 0.0
      %2798 = vmatpush1.msra.mxu0 0.0
      %2799 = vmatprep.subr.mxu0 0.0
      %2800 = vmatpush1.msra.mxu0 0.0
      %2801 = vmatprep.subr.mxu0 0.0
      %2802 = vmatpush1.msra.mxu0 0.0
      %2803 = vmatprep.subr.mxu0 0.0
      %2804 = vmatpush1.msra.mxu0 0.0
      %2805 = vmatprep.subr.mxu0 0.0
      %2806 = vmatpush1.msra.mxu0 0.0
      %2807 = vmatprep.subr.mxu0 0.0
      %2808 = vmatpush1.msra.mxu0 0.0
      %2809 = vmatprep.subr.mxu0 0.0
      %2810 = vmatpush1.msra.mxu0 0.0
      %2811 = vmatprep.subr.mxu0 0.0
      %2812 = vmatpush1.msra.mxu0 0.0
      %2813 = vmatprep.subr.mxu0 0.0
      %2814 = vmatpush1.msra.mxu0 0.0
      %2815 = vmatprep.subr.mxu0 0.0
      %2816 = vmatpush1.msra.mxu0 0.0
      %2817 = vmatprep.subr.mxu0 0.0
      %2818 = vmatpush1.msra.mxu0 0.0
      %2819 = vmatprep.mubr.f32.mxu0 0.0
      %2820 = vmatmul.mubr.f32.gmra.mrb[0].mxu0 %v2664
      %v2821 = vpop.f32.mrb[0].mxu0
      %v2822 = vadd.f32 %v954, %v2821
      %v2823 = vpop.f32.mrb[0].mxu0
      %2824 = vdwg.mxu0
      %v2825 = vadd.f32 %v2681, %v2751
      %v2826 = vxor.u32 %v2825, 2147483648
      %v2827 = vmul.f32 %v2826, 1.442695
      %v2828 = vpow.pop %v2827
      %v2829 = vadd.f32 %v2828, 1.0
      %v2830 = vrcp.pop %v2829
      %v2831 = vmul.f32 1.0, %v2830
      %v2832 = vadd.f32 %v2682, %v2753
      %v2833 = vxor.u32 %v2832, 2147483648
      %v2834 = vmul.f32 %v2833, 1.442695
      %v2835 = vpow.pop %v2834
      %v2836 = vadd.f32 %v2835, 1.0
      %v2837 = vrcp.pop %v2836
      %v2838 = vmul.f32 1.0, %v2837
      %v2839 = vmul.f32 %v2831, %v2822
      %v2840 = vadd.f32 %v2683, %v2839
      %v2841 = vtanh.pop %v2840
      %v2842 = vsub.f32 %v2664, %v2841
      %v2843 = vmul.f32 %v2838, %v2842
      %v2844 = vadd.f32 %v2841, %v2843
      %v2845 = vstv %s2674
      %vm2846 = vcmp.gt.s32.totalorder %v877, %v2845
      %v2847 = vsel %vm2846, 1, 0
      %v2848 = vcvt.s32.f32 %v2847
      %v2849 = vsub.f32 %v2844, %v2664
      %2851 = vset.pattern.permute.xlu0 0
      %2852 = vperm.xlu0 %2851, %v2848
      %v2853 = vpop.permute.xlu0 %2852
      %v2855 = vmul.f32 %v2853, %v2849
      %v2856 = vadd.f32 %v2664, %v2855
      %v2857 = vmul.f32 %v2853, %v2844
      %s2858 = scalar_lea.vmem %s427, %s2675
      %2859 = vst [vmem:[%s2858] sm:$0xff] %v2857
      %s2860 = smul.u32 %s23, 4294967291
      %s2861 = sadd.s32 %s2860, 10
      %s2862 = sadd.s32 %s928, 10
      %s2863 = smul.u32 %s2862, 2
      %s2864 = ssub.s32 15, %s2863
      %s2865 = smul.u32 %s23, %s2864
      %s2866 = sadd.s32 %s2862, %s2865
      %s2867 = smul.u32 %s2861, 8
      %s2868 = sshra.s32 %s2867, 3
      %s2869 = sand.u32 %s2867, 7
      %s2870 = smul.u32 %s2868, 3
      %s2871 = smul.addr %s2870, 8
      %s2872 = scalar_lea.vmem [#allocation2], %s2871
      %v2873 = vld [vmem:[%s2872] sm:$0xff]
      %v2874 = vld [vmem:[%s2872 + $0x8] sm:$0xff]
      %v2875 = vld [vmem:[%s2872 + $0x10] sm:$0xff]
      %2876 = vmatprep.subr.mxu0 %v879
      %2877 = vmatpush1.msra.mxu0 %v878
      %2878 = vmatprep.subr.mxu0 %v882
      %2879 = vmatpush1.msra.mxu0 %v881
      %2880 = vmatprep.subr.mxu0 %v885
      %2881 = vmatpush1.msra.mxu0 %v884
      %2882 = vmatprep.subr.mxu0 %v888
      %2883 = vmatpush1.msra.mxu0 %v887
      %2884 = vmatprep.subr.mxu0 %v891
      %2885 = vmatpush1.msra.mxu0 %v890
      %2886 = vmatprep.subr.mxu0 %v894
      %2887 = vmatpush1.msra.mxu0 %v893
      %2888 = vmatprep.subr.mxu0 %v897
      %2889 = vmatpush1.msra.mxu0 %v896
      %2890 = vmatprep.subr.mxu0 %v900
      %2891 = vmatpush1.msra.mxu0 %v899
      %2892 = vmatprep.subr.mxu0 %v903
      %2893 = vmatpush1.msra.mxu0 %v902
      %2894 = vmatprep.subr.mxu0 %v906
      %2895 = vmatpush1.msra.mxu0 %v905
      %2896 = vmatprep.subr.mxu0 %v909
      %2897 = vmatpush1.msra.mxu0 %v908
      %2898 = vmatprep.subr.mxu0 %v912
      %2899 = vmatpush1.msra.mxu0 %v911
      %2900 = vmatprep.subr.mxu0 %v915
      %2901 = vmatpush1.msra.mxu0 %v914
      %2902 = vmatprep.subr.mxu0 %v918
      %2903 = vmatpush1.msra.mxu0 %v917
      %2904 = vmatprep.subr.mxu0 %v921
      %2905 = vmatpush1.msra.mxu0 %v920
      %2906 = vmatprep.subr.mxu0 %v924
      %2907 = vmatpush1.msra.mxu0 %v923
      %2908 = vmatprep.subr.mxu0 0.0
      %2909 = vmatpush1.msra.mxu0 0.0
      %2910 = vmatprep.subr.mxu0 0.0
      %2911 = vmatpush1.msra.mxu0 0.0
      %2912 = vmatprep.subr.mxu0 0.0
      %2913 = vmatpush1.msra.mxu0 0.0
      %2914 = vmatprep.subr.mxu0 0.0
      %2915 = vmatpush1.msra.mxu0 0.0
      %2916 = vmatprep.subr.mxu0 0.0
      %2917 = vmatpush1.msra.mxu0 0.0
      %2918 = vmatprep.subr.mxu0 0.0
      %2919 = vmatpush1.msra.mxu0 0.0
      %2920 = vmatprep.subr.mxu0 0.0
      %2921 = vmatpush1.msra.mxu0 0.0
      %2922 = vmatprep.subr.mxu0 0.0
      %2923 = vmatpush1.msra.mxu0 0.0
      %2924 = vmatprep.subr.mxu0 0.0
      %2925 = vmatpush1.msra.mxu0 0.0
      %2926 = vmatprep.subr.mxu0 0.0
      %2927 = vmatpush1.msra.mxu0 0.0
      %2928 = vmatprep.subr.mxu0 0.0
      %2929 = vmatpush1.msra.mxu0 0.0
      %2930 = vmatprep.subr.mxu0 0.0
      %2931 = vmatpush1.msra.mxu0 0.0
      %2932 = vmatprep.subr.mxu0 0.0
      %2933 = vmatpush1.msra.mxu0 0.0
      %2934 = vmatprep.subr.mxu0 0.0
      %2935 = vmatpush1.msra.mxu0 0.0
      %2936 = vmatprep.subr.mxu0 0.0
      %2937 = vmatpush1.msra.mxu0 0.0
      %2938 = vmatprep.subr.mxu0 0.0
      %2939 = vmatpush1.msra.mxu0 0.0
      %2940 = vmatprep.mubr.f32.mxu0 0.0
      %2941 = vmatmul.mubr.f32.gmra.mrb[0].mxu0 %v2856
      %v2942 = vpop.f32.mrb[0].mxu0
      %v2943 = vadd.f32 %v946, %v2942
      %v2944 = vpop.f32.mrb[0].mxu0
      %v2945 = vadd.f32 %v950, %v2944
      %2946 = vdwg.mxu0
      %2947 = vmatprep.subr.mxu0 0.0
      %2948 = vmatpush1.msra.mxu0 %v880
      %2949 = vmatprep.subr.mxu0 0.0
      %2950 = vmatpush1.msra.mxu0 %v883
      %2951 = vmatprep.subr.mxu0 0.0
      %2952 = vmatpush1.msra.mxu0 %v886
      %2953 = vmatprep.subr.mxu0 0.0
      %2954 = vmatpush1.msra.mxu0 %v889
      %2955 = vmatprep.subr.mxu0 0.0
      %2956 = vmatpush1.msra.mxu0 %v892
      %2957 = vmatprep.subr.mxu0 0.0
      %2958 = vmatpush1.msra.mxu0 %v895
      %2959 = vmatprep.subr.mxu0 0.0
      %2960 = vmatpush1.msra.mxu0 %v898
      %2961 = vmatprep.subr.mxu0 0.0
      %2962 = vmatpush1.msra.mxu0 %v901
      %2963 = vmatprep.subr.mxu0 0.0
      %2964 = vmatpush1.msra.mxu0 %v904
      %2965 = vmatprep.subr.mxu0 0.0
      %2966 = vmatpush1.msra.mxu0 %v907
      %2967 = vmatprep.subr.mxu0 0.0
      %2968 = vmatpush1.msra.mxu0 %v910
      %2969 = vmatprep.subr.mxu0 0.0
      %2970 = vmatpush1.msra.mxu0 %v913
      %2971 = vmatprep.subr.mxu0 0.0
      %2972 = vmatpush1.msra.mxu0 %v916
      %2973 = vmatprep.subr.mxu0 0.0
      %2974 = vmatpush1.msra.mxu0 %v919
      %2975 = vmatprep.subr.mxu0 0.0
      %2976 = vmatpush1.msra.mxu0 %v922
      %2977 = vmatprep.subr.mxu0 0.0
      %2978 = vmatpush1.msra.mxu0 %v925
      %2979 = vmatprep.subr.mxu0 0.0
      %2980 = vmatpush1.msra.mxu0 0.0
      %2981 = vmatprep.subr.mxu0 0.0
      %2982 = vmatpush1.msra.mxu0 0.0
      %2983 = vmatprep.subr.mxu0 0.0
      %2984 = vmatpush1.msra.mxu0 0.0
      %2985 = vmatprep.subr.mxu0 0.0
      %2986 = vmatpush1.msra.mxu0 0.0
      %2987 = vmatprep.subr.mxu0 0.0
      %2988 = vmatpush1.msra.mxu0 0.0
      %2989 = vmatprep.subr.mxu0 0.0
      %2990 = vmatpush1.msra.mxu0 0.0
      %2991 = vmatprep.subr.mxu0 0.0
      %2992 = vmatpush1.msra.mxu0 0.0
      %2993 = vmatprep.subr.mxu0 0.0
      %2994 = vmatpush1.msra.mxu0 0.0
      %2995 = vmatprep.subr.mxu0 0.0
      %2996 = vmatpush1.msra.mxu0 0.0
      %2997 = vmatprep.subr.mxu0 0.0
      %2998 = vmatpush1.msra.mxu0 0.0
      %2999 = vmatprep.subr.mxu0 0.0
      %3000 = vmatpush1.msra.mxu0 0.0
      %3001 = vmatprep.subr.mxu0 0.0
      %3002 = vmatpush1.msra.mxu0 0.0
      %3003 = vmatprep.subr.mxu0 0.0
      %3004 = vmatpush1.msra.mxu0 0.0
      %3005 = vmatprep.subr.mxu0 0.0
      %3006 = vmatpush1.msra.mxu0 0.0
      %3007 = vmatprep.subr.mxu0 0.0
      %3008 = vmatpush1.msra.mxu0 0.0
      %3009 = vmatprep.subr.mxu0 0.0
      %3010 = vmatpush1.msra.mxu0 0.0
      %3011 = vmatprep.mubr.f32.mxu0 0.0
      %3012 = vmatmul.mubr.f32.gmra.mrb[0].mxu0 %v2856
      %v3013 = vpop.f32.mrb[0].mxu0
      %v3014 = vadd.f32 %v954, %v3013
      %v3015 = vpop.f32.mrb[0].mxu0
      %3016 = vdwg.mxu0
      %v3017 = vadd.f32 %v2873, %v2943
      %v3018 = vxor.u32 %v3017, 2147483648
      %v3019 = vmul.f32 %v3018, 1.442695
      %v3020 = vpow.pop %v3019
      %v3021 = vadd.f32 %v3020, 1.0
      %v3022 = vrcp.pop %v3021
      %v3023 = vmul.f32 1.0, %v3022
      %v3024 = vadd.f32 %v2874, %v2945
      %v3025 = vxor.u32 %v3024, 2147483648
      %v3026 = vmul.f32 %v3025, 1.442695
      %v3027 = vpow.pop %v3026
      %v3028 = vadd.f32 %v3027, 1.0
      %v3029 = vrcp.pop %v3028
      %v3030 = vmul.f32 1.0, %v3029
      %v3031 = vmul.f32 %v3023, %v3014
      %v3032 = vadd.f32 %v2875, %v3031
      %v3033 = vtanh.pop %v3032
      %v3034 = vsub.f32 %v2856, %v3033
      %v3035 = vmul.f32 %v3030, %v3034
      %v3036 = vadd.f32 %v3033, %v3035
      %v3037 = vstv %s2866
      %vm3038 = vcmp.gt.s32.totalorder %v877, %v3037
      %v3039 = vsel %vm3038, 1, 0
      %v3040 = vcvt.s32.f32 %v3039
      %v3041 = vsub.f32 %v3036, %v2856
      %3043 = vset.pattern.permute.xlu0 0
      %3044 = vperm.xlu0 %3043, %v3040
      %v3045 = vpop.permute.xlu0 %3044
      %v3047 = vmul.f32 %v3045, %v3041
      %v3048 = vadd.f32 %v2856, %v3047
      %v3049 = vmul.f32 %v3045, %v3036
      %s3050 = scalar_lea.vmem %s427, %s2867
      %3051 = vst [vmem:[%s3050] sm:$0xff] %v3049
      %s3052 = smul.u32 %s23, 4294967289
      %s3053 = sadd.s32 %s3052, 11
      %s3054 = sadd.s32 %s928, 11
      %s3055 = smul.u32 %s3054, 2
      %s3056 = ssub.s32 15, %s3055
      %s3057 = smul.u32 %s23, %s3056
      %s3058 = sadd.s32 %s3054, %s3057
      %s3059 = smul.u32 %s3053, 8
      %s3060 = sshra.s32 %s3059, 3
      %s3061 = sand.u32 %s3059, 7
      %s3062 = smul.u32 %s3060, 3
      %s3063 = smul.addr %s3062, 8
      %s3064 = scalar_lea.vmem [#allocation2], %s3063
      %v3065 = vld [vmem:[%s3064] sm:$0xff]
      %v3066 = vld [vmem:[%s3064 + $0x8] sm:$0xff]
      %v3067 = vld [vmem:[%s3064 + $0x10] sm:$0xff]
      %3068 = vmatprep.subr.mxu0 %v879
      %3069 = vmatpush1.msra.mxu0 %v878
      %3070 = vmatprep.subr.mxu0 %v882
      %3071 = vmatpush1.msra.mxu0 %v881
      %3072 = vmatprep.subr.mxu0 %v885
      %3073 = vmatpush1.msra.mxu0 %v884
      %3074 = vmatprep.subr.mxu0 %v888
      %3075 = vmatpush1.msra.mxu0 %v887
      %3076 = vmatprep.subr.mxu0 %v891
      %3077 = vmatpush1.msra.mxu0 %v890
      %3078 = vmatprep.subr.mxu0 %v894
      %3079 = vmatpush1.msra.mxu0 %v893
      %3080 = vmatprep.subr.mxu0 %v897
      %3081 = vmatpush1.msra.mxu0 %v896
      %3082 = vmatprep.subr.mxu0 %v900
      %3083 = vmatpush1.msra.mxu0 %v899
      %3084 = vmatprep.subr.mxu0 %v903
      %3085 = vmatpush1.msra.mxu0 %v902
      %3086 = vmatprep.subr.mxu0 %v906
      %3087 = vmatpush1.msra.mxu0 %v905
      %3088 = vmatprep.subr.mxu0 %v909
      %3089 = vmatpush1.msra.mxu0 %v908
      %3090 = vmatprep.subr.mxu0 %v912
      %3091 = vmatpush1.msra.mxu0 %v911
      %3092 = vmatprep.subr.mxu0 %v915
      %3093 = vmatpush1.msra.mxu0 %v914
      %3094 = vmatprep.subr.mxu0 %v918
      %3095 = vmatpush1.msra.mxu0 %v917
      %3096 = vmatprep.subr.mxu0 %v921
      %3097 = vmatpush1.msra.mxu0 %v920
      %3098 = vmatprep.subr.mxu0 %v924
      %3099 = vmatpush1.msra.mxu0 %v923
      %3100 = vmatprep.subr.mxu0 0.0
      %3101 = vmatpush1.msra.mxu0 0.0
      %3102 = vmatprep.subr.mxu0 0.0
      %3103 = vmatpush1.msra.mxu0 0.0
      %3104 = vmatprep.subr.mxu0 0.0
      %3105 = vmatpush1.msra.mxu0 0.0
      %3106 = vmatprep.subr.mxu0 0.0
      %3107 = vmatpush1.msra.mxu0 0.0
      %3108 = vmatprep.subr.mxu0 0.0
      %3109 = vmatpush1.msra.mxu0 0.0
      %3110 = vmatprep.subr.mxu0 0.0
      %3111 = vmatpush1.msra.mxu0 0.0
      %3112 = vmatprep.subr.mxu0 0.0
      %3113 = vmatpush1.msra.mxu0 0.0
      %3114 = vmatprep.subr.mxu0 0.0
      %3115 = vmatpush1.msra.mxu0 0.0
      %3116 = vmatprep.subr.mxu0 0.0
      %3117 = vmatpush1.msra.mxu0 0.0
      %3118 = vmatprep.subr.mxu0 0.0
      %3119 = vmatpush1.msra.mxu0 0.0
      %3120 = vmatprep.subr.mxu0 0.0
      %3121 = vmatpush1.msra.mxu0 0.0
      %3122 = vmatprep.subr.mxu0 0.0
      %3123 = vmatpush1.msra.mxu0 0.0
      %3124 = vmatprep.subr.mxu0 0.0
      %3125 = vmatpush1.msra.mxu0 0.0
      %3126 = vmatprep.subr.mxu0 0.0
      %3127 = vmatpush1.msra.mxu0 0.0
      %3128 = vmatprep.subr.mxu0 0.0
      %3129 = vmatpush1.msra.mxu0 0.0
      %3130 = vmatprep.subr.mxu0 0.0
      %3131 = vmatpush1.msra.mxu0 0.0
      %3132 = vmatprep.mubr.f32.mxu0 0.0
      %3133 = vmatmul.mubr.f32.gmra.mrb[0].mxu0 %v3048
      %v3134 = vpop.f32.mrb[0].mxu0
      %v3135 = vadd.f32 %v946, %v3134
      %v3136 = vpop.f32.mrb[0].mxu0
      %v3137 = vadd.f32 %v950, %v3136
      %3138 = vdwg.mxu0
      %3139 = vmatprep.subr.mxu0 0.0
      %3140 = vmatpush1.msra.mxu0 %v880
      %3141 = vmatprep.subr.mxu0 0.0
      %3142 = vmatpush1.msra.mxu0 %v883
      %3143 = vmatprep.subr.mxu0 0.0
      %3144 = vmatpush1.msra.mxu0 %v886
      %3145 = vmatprep.subr.mxu0 0.0
      %3146 = vmatpush1.msra.mxu0 %v889
      %3147 = vmatprep.subr.mxu0 0.0
      %3148 = vmatpush1.msra.mxu0 %v892
      %3149 = vmatprep.subr.mxu0 0.0
      %3150 = vmatpush1.msra.mxu0 %v895
      %3151 = vmatprep.subr.mxu0 0.0
      %3152 = vmatpush1.msra.mxu0 %v898
      %3153 = vmatprep.subr.mxu0 0.0
      %3154 = vmatpush1.msra.mxu0 %v901
      %3155 = vmatprep.subr.mxu0 0.0
      %3156 = vmatpush1.msra.mxu0 %v904
      %3157 = vmatprep.subr.mxu0 0.0
      %3158 = vmatpush1.msra.mxu0 %v907
      %3159 = vmatprep.subr.mxu0 0.0
      %3160 = vmatpush1.msra.mxu0 %v910
      %3161 = vmatprep.subr.mxu0 0.0
      %3162 = vmatpush1.msra.mxu0 %v913
      %3163 = vmatprep.subr.mxu0 0.0
      %3164 = vmatpush1.msra.mxu0 %v916
      %3165 = vmatprep.subr.mxu0 0.0
      %3166 = vmatpush1.msra.mxu0 %v919
      %3167 = vmatprep.subr.mxu0 0.0
      %3168 = vmatpush1.msra.mxu0 %v922
      %3169 = vmatprep.subr.mxu0 0.0
      %3170 = vmatpush1.msra.mxu0 %v925
      %3171 = vmatprep.subr.mxu0 0.0
      %3172 = vmatpush1.msra.mxu0 0.0
      %3173 = vmatprep.subr.mxu0 0.0
      %3174 = vmatpush1.msra.mxu0 0.0
      %3175 = vmatprep.subr.mxu0 0.0
      %3176 = vmatpush1.msra.mxu0 0.0
      %3177 = vmatprep.subr.mxu0 0.0
      %3178 = vmatpush1.msra.mxu0 0.0
      %3179 = vmatprep.subr.mxu0 0.0
      %3180 = vmatpush1.msra.mxu0 0.0
      %3181 = vmatprep.subr.mxu0 0.0
      %3182 = vmatpush1.msra.mxu0 0.0
      %3183 = vmatprep.subr.mxu0 0.0
      %3184 = vmatpush1.msra.mxu0 0.0
      %3185 = vmatprep.subr.mxu0 0.0
      %3186 = vmatpush1.msra.mxu0 0.0
      %3187 = vmatprep.subr.mxu0 0.0
      %3188 = vmatpush1.msra.mxu0 0.0
      %3189 = vmatprep.subr.mxu0 0.0
      %3190 = vmatpush1.msra.mxu0 0.0
      %3191 = vmatprep.subr.mxu0 0.0
      %3192 = vmatpush1.msra.mxu0 0.0
      %3193 = vmatprep.subr.mxu0 0.0
      %3194 = vmatpush1.msra.mxu0 0.0
      %3195 = vmatprep.subr.mxu0 0.0
      %3196 = vmatpush1.msra.mxu0 0.0
      %3197 = vmatprep.subr.mxu0 0.0
      %3198 = vmatpush1.msra.mxu0 0.0
      %3199 = vmatprep.subr.mxu0 0.0
      %3200 = vmatpush1.msra.mxu0 0.0
      %3201 = vmatprep.subr.mxu0 0.0
      %3202 = vmatpush1.msra.mxu0 0.0
      %3203 = vmatprep.mubr.f32.mxu0 0.0
      %3204 = vmatmul.mubr.f32.gmra.mrb[0].mxu0 %v3048
      %v3205 = vpop.f32.mrb[0].mxu0
      %v3206 = vadd.f32 %v954, %v3205
      %v3207 = vpop.f32.mrb[0].mxu0
      %3208 = vdwg.mxu0
      %v3209 = vadd.f32 %v3065, %v3135
      %v3210 = vxor.u32 %v3209, 2147483648
      %v3211 = vmul.f32 %v3210, 1.442695
      %v3212 = vpow.pop %v3211
      %v3213 = vadd.f32 %v3212, 1.0
      %v3214 = vrcp.pop %v3213
      %v3215 = vmul.f32 1.0, %v3214
      %v3216 = vadd.f32 %v3066, %v3137
      %v3217 = vxor.u32 %v3216, 2147483648
      %v3218 = vmul.f32 %v3217, 1.442695
      %v3219 = vpow.pop %v3218
      %v3220 = vadd.f32 %v3219, 1.0
      %v3221 = vrcp.pop %v3220
      %v3222 = vmul.f32 1.0, %v3221
      %v3223 = vmul.f32 %v3215, %v3206
      %v3224 = vadd.f32 %v3067, %v3223
      %v3225 = vtanh.pop %v3224
      %v3226 = vsub.f32 %v3048, %v3225
      %v3227 = vmul.f32 %v3222, %v3226
      %v3228 = vadd.f32 %v3225, %v3227
      %v3229 = vstv %s3058
      %vm3230 = vcmp.gt.s32.totalorder %v877, %v3229
      %v3231 = vsel %vm3230, 1, 0
      %v3232 = vcvt.s32.f32 %v3231
      %v3233 = vsub.f32 %v3228, %v3048
      %3235 = vset.pattern.permute.xlu0 0
      %3236 = vperm.xlu0 %3235, %v3232
      %v3237 = vpop.permute.xlu0 %3236
      %v3239 = vmul.f32 %v3237, %v3233
      %v3240 = vadd.f32 %v3048, %v3239
      %v3241 = vmul.f32 %v3237, %v3228
      %s3242 = scalar_lea.vmem %s427, %s3059
      %3243 = vst [vmem:[%s3242] sm:$0xff] %v3241
      %s3244 = smul.u32 %s23, 4294967287
      %s3245 = sadd.s32 %s3244, 12
      %s3246 = sadd.s32 %s928, 12
      %s3247 = smul.u32 %s3246, 2
      %s3248 = ssub.s32 15, %s3247
      %s3249 = smul.u32 %s23, %s3248
      %s3250 = sadd.s32 %s3246, %s3249
      %s3251 = smul.u32 %s3245, 8
      %s3252 = sshra.s32 %s3251, 3
      %s3253 = sand.u32 %s3251, 7
      %s3254 = smul.u32 %s3252, 3
      %s3255 = smul.addr %s3254, 8
      %s3256 = scalar_lea.vmem [#allocation2], %s3255
      %v3257 = vld [vmem:[%s3256] sm:$0xff]
      %v3258 = vld [vmem:[%s3256 + $0x8] sm:$0xff]
      %v3259 = vld [vmem:[%s3256 + $0x10] sm:$0xff]
      %3260 = vmatprep.subr.mxu0 %v879
      %3261 = vmatpush1.msra.mxu0 %v878
      %3262 = vmatprep.subr.mxu0 %v882
      %3263 = vmatpush1.msra.mxu0 %v881
      %3264 = vmatprep.subr.mxu0 %v885
      %3265 = vmatpush1.msra.mxu0 %v884
      %3266 = vmatprep.subr.mxu0 %v888
      %3267 = vmatpush1.msra.mxu0 %v887
      %3268 = vmatprep.subr.mxu0 %v891
      %3269 = vmatpush1.msra.mxu0 %v890
      %3270 = vmatprep.subr.mxu0 %v894
      %3271 = vmatpush1.msra.mxu0 %v893
      %3272 = vmatprep.subr.mxu0 %v897
      %3273 = vmatpush1.msra.mxu0 %v896
      %3274 = vmatprep.subr.mxu0 %v900
      %3275 = vmatpush1.msra.mxu0 %v899
      %3276 = vmatprep.subr.mxu0 %v903
      %3277 = vmatpush1.msra.mxu0 %v902
      %3278 = vmatprep.subr.mxu0 %v906
      %3279 = vmatpush1.msra.mxu0 %v905
      %3280 = vmatprep.subr.mxu0 %v909
      %3281 = vmatpush1.msra.mxu0 %v908
      %3282 = vmatprep.subr.mxu0 %v912
      %3283 = vmatpush1.msra.mxu0 %v911
      %3284 = vmatprep.subr.mxu0 %v915
      %3285 = vmatpush1.msra.mxu0 %v914
      %3286 = vmatprep.subr.mxu0 %v918
      %3287 = vmatpush1.msra.mxu0 %v917
      %3288 = vmatprep.subr.mxu0 %v921
      %3289 = vmatpush1.msra.mxu0 %v920
      %3290 = vmatprep.subr.mxu0 %v924
      %3291 = vmatpush1.msra.mxu0 %v923
      %3292 = vmatprep.subr.mxu0 0.0
      %3293 = vmatpush1.msra.mxu0 0.0
      %3294 = vmatprep.subr.mxu0 0.0
      %3295 = vmatpush1.msra.mxu0 0.0
      %3296 = vmatprep.subr.mxu0 0.0
      %3297 = vmatpush1.msra.mxu0 0.0
      %3298 = vmatprep.subr.mxu0 0.0
      %3299 = vmatpush1.msra.mxu0 0.0
      %3300 = vmatprep.subr.mxu0 0.0
      %3301 = vmatpush1.msra.mxu0 0.0
      %3302 = vmatprep.subr.mxu0 0.0
      %3303 = vmatpush1.msra.mxu0 0.0
      %3304 = vmatprep.subr.mxu0 0.0
      %3305 = vmatpush1.msra.mxu0 0.0
      %3306 = vmatprep.subr.mxu0 0.0
      %3307 = vmatpush1.msra.mxu0 0.0
      %3308 = vmatprep.subr.mxu0 0.0
      %3309 = vmatpush1.msra.mxu0 0.0
      %3310 = vmatprep.subr.mxu0 0.0
      %3311 = vmatpush1.msra.mxu0 0.0
      %3312 = vmatprep.subr.mxu0 0.0
      %3313 = vmatpush1.msra.mxu0 0.0
      %3314 = vmatprep.subr.mxu0 0.0
      %3315 = vmatpush1.msra.mxu0 0.0
      %3316 = vmatprep.subr.mxu0 0.0
      %3317 = vmatpush1.msra.mxu0 0.0
      %3318 = vmatprep.subr.mxu0 0.0
      %3319 = vmatpush1.msra.mxu0 0.0
      %3320 = vmatprep.subr.mxu0 0.0
      %3321 = vmatpush1.msra.mxu0 0.0
      %3322 = vmatprep.subr.mxu0 0.0
      %3323 = vmatpush1.msra.mxu0 0.0
      %3324 = vmatprep.mubr.f32.mxu0 0.0
      %3325 = vmatmul.mubr.f32.gmra.mrb[0].mxu0 %v3240
      %v3326 = vpop.f32.mrb[0].mxu0
      %v3327 = vadd.f32 %v946, %v3326
      %v3328 = vpop.f32.mrb[0].mxu0
      %v3329 = vadd.f32 %v950, %v3328
      %3330 = vdwg.mxu0
      %3331 = vmatprep.subr.mxu0 0.0
      %3332 = vmatpush1.msra.mxu0 %v880
      %3333 = vmatprep.subr.mxu0 0.0
      %3334 = vmatpush1.msra.mxu0 %v883
      %3335 = vmatprep.subr.mxu0 0.0
      %3336 = vmatpush1.msra.mxu0 %v886
      %3337 = vmatprep.subr.mxu0 0.0
      %3338 = vmatpush1.msra.mxu0 %v889
      %3339 = vmatprep.subr.mxu0 0.0
      %3340 = vmatpush1.msra.mxu0 %v892
      %3341 = vmatprep.subr.mxu0 0.0
      %3342 = vmatpush1.msra.mxu0 %v895
      %3343 = vmatprep.subr.mxu0 0.0
      %3344 = vmatpush1.msra.mxu0 %v898
      %3345 = vmatprep.subr.mxu0 0.0
      %3346 = vmatpush1.msra.mxu0 %v901
      %3347 = vmatprep.subr.mxu0 0.0
      %3348 = vmatpush1.msra.mxu0 %v904
      %3349 = vmatprep.subr.mxu0 0.0
      %3350 = vmatpush1.msra.mxu0 %v907
      %3351 = vmatprep.subr.mxu0 0.0
      %3352 = vmatpush1.msra.mxu0 %v910
      %3353 = vmatprep.subr.mxu0 0.0
      %3354 = vmatpush1.msra.mxu0 %v913
      %3355 = vmatprep.subr.mxu0 0.0
      %3356 = vmatpush1.msra.mxu0 %v916
      %3357 = vmatprep.subr.mxu0 0.0
      %3358 = vmatpush1.msra.mxu0 %v919
      %3359 = vmatprep.subr.mxu0 0.0
      %3360 = vmatpush1.msra.mxu0 %v922
      %3361 = vmatprep.subr.mxu0 0.0
      %3362 = vmatpush1.msra.mxu0 %v925
      %3363 = vmatprep.subr.mxu0 0.0
      %3364 = vmatpush1.msra.mxu0 0.0
      %3365 = vmatprep.subr.mxu0 0.0
      %3366 = vmatpush1.msra.mxu0 0.0
      %3367 = vmatprep.subr.mxu0 0.0
      %3368 = vmatpush1.msra.mxu0 0.0
      %3369 = vmatprep.subr.mxu0 0.0
      %3370 = vmatpush1.msra.mxu0 0.0
      %3371 = vmatprep.subr.mxu0 0.0
      %3372 = vmatpush1.msra.mxu0 0.0
      %3373 = vmatprep.subr.mxu0 0.0
      %3374 = vmatpush1.msra.mxu0 0.0
      %3375 = vmatprep.subr.mxu0 0.0
      %3376 = vmatpush1.msra.mxu0 0.0
      %3377 = vmatprep.subr.mxu0 0.0
      %3378 = vmatpush1.msra.mxu0 0.0
      %3379 = vmatprep.subr.mxu0 0.0
      %3380 = vmatpush1.msra.mxu0 0.0
      %3381 = vmatprep.subr.mxu0 0.0
      %3382 = vmatpush1.msra.mxu0 0.0
      %3383 = vmatprep.subr.mxu0 0.0
      %3384 = vmatpush1.msra.mxu0 0.0
      %3385 = vmatprep.subr.mxu0 0.0
      %3386 = vmatpush1.msra.mxu0 0.0
      %3387 = vmatprep.subr.mxu0 0.0
      %3388 = vmatpush1.msra.mxu0 0.0
      %3389 = vmatprep.subr.mxu0 0.0
      %3390 = vmatpush1.msra.mxu0 0.0
      %3391 = vmatprep.subr.mxu0 0.0
      %3392 = vmatpush1.msra.mxu0 0.0
      %3393 = vmatprep.subr.mxu0 0.0
      %3394 = vmatpush1.msra.mxu0 0.0
      %3395 = vmatprep.mubr.f32.mxu0 0.0
      %3396 = vmatmul.mubr.f32.gmra.mrb[0].mxu0 %v3240
      %v3397 = vpop.f32.mrb[0].mxu0
      %v3398 = vadd.f32 %v954, %v3397
      %v3399 = vpop.f32.mrb[0].mxu0
      %3400 = vdwg.mxu0
      %v3401 = vadd.f32 %v3257, %v3327
      %v3402 = vxor.u32 %v3401, 2147483648
      %v3403 = vmul.f32 %v3402, 1.442695
      %v3404 = vpow.pop %v3403
      %v3405 = vadd.f32 %v3404, 1.0
      %v3406 = vrcp.pop %v3405
      %v3407 = vmul.f32 1.0, %v3406
      %v3408 = vadd.f32 %v3258, %v3329
      %v3409 = vxor.u32 %v3408, 2147483648
      %v3410 = vmul.f32 %v3409, 1.442695
      %v3411 = vpow.pop %v3410
      %v3412 = vadd.f32 %v3411, 1.0
      %v3413 = vrcp.pop %v3412
      %v3414 = vmul.f32 1.0, %v3413
      %v3415 = vmul.f32 %v3407, %v3398
      %v3416 = vadd.f32 %v3259, %v3415
      %v3417 = vtanh.pop %v3416
      %v3418 = vsub.f32 %v3240, %v3417
      %v3419 = vmul.f32 %v3414, %v3418
      %v3420 = vadd.f32 %v3417, %v3419
      %v3421 = vstv %s3250
      %vm3422 = vcmp.gt.s32.totalorder %v877, %v3421
      %v3423 = vsel %vm3422, 1, 0
      %v3424 = vcvt.s32.f32 %v3423
      %v3425 = vsub.f32 %v3420, %v3240
      %3427 = vset.pattern.permute.xlu0 0
      %3428 = vperm.xlu0 %3427, %v3424
      %v3429 = vpop.permute.xlu0 %3428
      %v3431 = vmul.f32 %v3429, %v3425
      %v3432 = vadd.f32 %v3240, %v3431
      %v3433 = vmul.f32 %v3429, %v3420
      %s3434 = scalar_lea.vmem %s427, %s3251
      %3435 = vst [vmem:[%s3434] sm:$0xff] %v3433
      %s3436 = smul.u32 %s23, 4294967285
      %s3437 = sadd.s32 %s3436, 13
      %s3438 = sadd.s32 %s928, 13
      %s3439 = smul.u32 %s3438, 2
      %s3440 = ssub.s32 15, %s3439
      %s3441 = smul.u32 %s23, %s3440
      %s3442 = sadd.s32 %s3438, %s3441
      %s3443 = smul.u32 %s3437, 8
      %s3444 = sshra.s32 %s3443, 3
      %s3445 = sand.u32 %s3443, 7
      %s3446 = smul.u32 %s3444, 3
      %s3447 = smul.addr %s3446, 8
      %s3448 = scalar_lea.vmem [#allocation2], %s3447
      %v3449 = vld [vmem:[%s3448] sm:$0xff]
      %v3450 = vld [vmem:[%s3448 + $0x8] sm:$0xff]
      %v3451 = vld [vmem:[%s3448 + $0x10] sm:$0xff]
      %3452 = vmatprep.subr.mxu0 %v879
      %3453 = vmatpush1.msra.mxu0 %v878
      %3454 = vmatprep.subr.mxu0 %v882
      %3455 = vmatpush1.msra.mxu0 %v881
      %3456 = vmatprep.subr.mxu0 %v885
      %3457 = vmatpush1.msra.mxu0 %v884
      %3458 = vmatprep.subr.mxu0 %v888
      %3459 = vmatpush1.msra.mxu0 %v887
      %3460 = vmatprep.subr.mxu0 %v891
      %3461 = vmatpush1.msra.mxu0 %v890
      %3462 = vmatprep.subr.mxu0 %v894
      %3463 = vmatpush1.msra.mxu0 %v893
      %3464 = vmatprep.subr.mxu0 %v897
      %3465 = vmatpush1.msra.mxu0 %v896
      %3466 = vmatprep.subr.mxu0 %v900
      %3467 = vmatpush1.msra.mxu0 %v899
      %3468 = vmatprep.subr.mxu0 %v903
      %3469 = vmatpush1.msra.mxu0 %v902
      %3470 = vmatprep.subr.mxu0 %v906
      %3471 = vmatpush1.msra.mxu0 %v905
      %3472 = vmatprep.subr.mxu0 %v909
      %3473 = vmatpush1.msra.mxu0 %v908
      %3474 = vmatprep.subr.mxu0 %v912
      %3475 = vmatpush1.msra.mxu0 %v911
      %3476 = vmatprep.subr.mxu0 %v915
      %3477 = vmatpush1.msra.mxu0 %v914
      %3478 = vmatprep.subr.mxu0 %v918
      %3479 = vmatpush1.msra.mxu0 %v917
      %3480 = vmatprep.subr.mxu0 %v921
      %3481 = vmatpush1.msra.mxu0 %v920
      %3482 = vmatprep.subr.mxu0 %v924
      %3483 = vmatpush1.msra.mxu0 %v923
      %3484 = vmatprep.subr.mxu0 0.0
      %3485 = vmatpush1.msra.mxu0 0.0
      %3486 = vmatprep.subr.mxu0 0.0
      %3487 = vmatpush1.msra.mxu0 0.0
      %3488 = vmatprep.subr.mxu0 0.0
      %3489 = vmatpush1.msra.mxu0 0.0
      %3490 = vmatprep.subr.mxu0 0.0
      %3491 = vmatpush1.msra.mxu0 0.0
      %3492 = vmatprep.subr.mxu0 0.0
      %3493 = vmatpush1.msra.mxu0 0.0
      %3494 = vmatprep.subr.mxu0 0.0
      %3495 = vmatpush1.msra.mxu0 0.0
      %3496 = vmatprep.subr.mxu0 0.0
      %3497 = vmatpush1.msra.mxu0 0.0
      %3498 = vmatprep.subr.mxu0 0.0
      %3499 = vmatpush1.msra.mxu0 0.0
      %3500 = vmatprep.subr.mxu0 0.0
      %3501 = vmatpush1.msra.mxu0 0.0
      %3502 = vmatprep.subr.mxu0 0.0
      %3503 = vmatpush1.msra.mxu0 0.0
      %3504 = vmatprep.subr.mxu0 0.0
      %3505 = vmatpush1.msra.mxu0 0.0
      %3506 = vmatprep.subr.mxu0 0.0
      %3507 = vmatpush1.msra.mxu0 0.0
      %3508 = vmatprep.subr.mxu0 0.0
      %3509 = vmatpush1.msra.mxu0 0.0
      %3510 = vmatprep.subr.mxu0 0.0
      %3511 = vmatpush1.msra.mxu0 0.0
      %3512 = vmatprep.subr.mxu0 0.0
      %3513 = vmatpush1.msra.mxu0 0.0
      %3514 = vmatprep.subr.mxu0 0.0
      %3515 = vmatpush1.msra.mxu0 0.0
      %3516 = vmatprep.mubr.f32.mxu0 0.0
      %3517 = vmatmul.mubr.f32.gmra.mrb[0].mxu0 %v3432
      %v3518 = vpop.f32.mrb[0].mxu0
      %v3519 = vadd.f32 %v946, %v3518
      %v3520 = vpop.f32.mrb[0].mxu0
      %v3521 = vadd.f32 %v950, %v3520
      %3522 = vdwg.mxu0
      %3523 = vmatprep.subr.mxu0 0.0
      %3524 = vmatpush1.msra.mxu0 %v880
      %3525 = vmatprep.subr.mxu0 0.0
      %3526 = vmatpush1.msra.mxu0 %v883
      %3527 = vmatprep.subr.mxu0 0.0
      %3528 = vmatpush1.msra.mxu0 %v886
      %3529 = vmatprep.subr.mxu0 0.0
      %3530 = vmatpush1.msra.mxu0 %v889
      %3531 = vmatprep.subr.mxu0 0.0
      %3532 = vmatpush1.msra.mxu0 %v892
      %3533 = vmatprep.subr.mxu0 0.0
      %3534 = vmatpush1.msra.mxu0 %v895
      %3535 = vmatprep.subr.mxu0 0.0
      %3536 = vmatpush1.msra.mxu0 %v898
      %3537 = vmatprep.subr.mxu0 0.0
      %3538 = vmatpush1.msra.mxu0 %v901
      %3539 = vmatprep.subr.mxu0 0.0
      %3540 = vmatpush1.msra.mxu0 %v904
      %3541 = vmatprep.subr.mxu0 0.0
      %3542 = vmatpush1.msra.mxu0 %v907
      %3543 = vmatprep.subr.mxu0 0.0
      %3544 = vmatpush1.msra.mxu0 %v910
      %3545 = vmatprep.subr.mxu0 0.0
      %3546 = vmatpush1.msra.mxu0 %v913
      %3547 = vmatprep.subr.mxu0 0.0
      %3548 = vmatpush1.msra.mxu0 %v916
      %3549 = vmatprep.subr.mxu0 0.0
      %3550 = vmatpush1.msra.mxu0 %v919
      %3551 = vmatprep.subr.mxu0 0.0
      %3552 = vmatpush1.msra.mxu0 %v922
      %3553 = vmatprep.subr.mxu0 0.0
      %3554 = vmatpush1.msra.mxu0 %v925
      %3555 = vmatprep.subr.mxu0 0.0
      %3556 = vmatpush1.msra.mxu0 0.0
      %3557 = vmatprep.subr.mxu0 0.0
      %3558 = vmatpush1.msra.mxu0 0.0
      %3559 = vmatprep.subr.mxu0 0.0
      %3560 = vmatpush1.msra.mxu0 0.0
      %3561 = vmatprep.subr.mxu0 0.0
      %3562 = vmatpush1.msra.mxu0 0.0
      %3563 = vmatprep.subr.mxu0 0.0
      %3564 = vmatpush1.msra.mxu0 0.0
      %3565 = vmatprep.subr.mxu0 0.0
      %3566 = vmatpush1.msra.mxu0 0.0
      %3567 = vmatprep.subr.mxu0 0.0
      %3568 = vmatpush1.msra.mxu0 0.0
      %3569 = vmatprep.subr.mxu0 0.0
      %3570 = vmatpush1.msra.mxu0 0.0
      %3571 = vmatprep.subr.mxu0 0.0
      %3572 = vmatpush1.msra.mxu0 0.0
      %3573 = vmatprep.subr.mxu0 0.0
      %3574 = vmatpush1.msra.mxu0 0.0
      %3575 = vmatprep.subr.mxu0 0.0
      %3576 = vmatpush1.msra.mxu0 0.0
      %3577 = vmatprep.subr.mxu0 0.0
      %3578 = vmatpush1.msra.mxu0 0.0
      %3579 = vmatprep.subr.mxu0 0.0
      %3580 = vmatpush1.msra.mxu0 0.0
      %3581 = vmatprep.subr.mxu0 0.0
      %3582 = vmatpush1.msra.mxu0 0.0
      %3583 = vmatprep.subr.mxu0 0.0
      %3584 = vmatpush1.msra.mxu0 0.0
      %3585 = vmatprep.subr.mxu0 0.0
      %3586 = vmatpush1.msra.mxu0 0.0
      %3587 = vmatprep.mubr.f32.mxu0 0.0
      %3588 = vmatmul.mubr.f32.gmra.mrb[0].mxu0 %v3432
      %v3589 = vpop.f32.mrb[0].mxu0
      %v3590 = vadd.f32 %v954, %v3589
      %v3591 = vpop.f32.mrb[0].mxu0
      %3592 = vdwg.mxu0
      %v3593 = vadd.f32 %v3449, %v3519
      %v3594 = vxor.u32 %v3593, 2147483648
      %v3595 = vmul.f32 %v3594, 1.442695
      %v3596 = vpow.pop %v3595
      %v3597 = vadd.f32 %v3596, 1.0
      %v3598 = vrcp.pop %v3597
      %v3599 = vmul.f32 1.0, %v3598
      %v3600 = vadd.f32 %v3450, %v3521
      %v3601 = vxor.u32 %v3600, 2147483648
      %v3602 = vmul.f32 %v3601, 1.442695
      %v3603 = vpow.pop %v3602
      %v3604 = vadd.f32 %v3603, 1.0
      %v3605 = vrcp.pop %v3604
      %v3606 = vmul.f32 1.0, %v3605
      %v3607 = vmul.f32 %v3599, %v3590
      %v3608 = vadd.f32 %v3451, %v3607
      %v3609 = vtanh.pop %v3608
      %v3610 = vsub.f32 %v3432, %v3609
      %v3611 = vmul.f32 %v3606, %v3610
      %v3612 = vadd.f32 %v3609, %v3611
      %v3613 = vstv %s3442
      %vm3614 = vcmp.gt.s32.totalorder %v877, %v3613
      %v3615 = vsel %vm3614, 1, 0
      %v3616 = vcvt.s32.f32 %v3615
      %v3617 = vsub.f32 %v3612, %v3432
      %3619 = vset.pattern.permute.xlu0 0
      %3620 = vperm.xlu0 %3619, %v3616
      %v3621 = vpop.permute.xlu0 %3620
      %v3623 = vmul.f32 %v3621, %v3617
      %v3624 = vadd.f32 %v3432, %v3623
      %v3625 = vmul.f32 %v3621, %v3612
      %s3626 = scalar_lea.vmem %s427, %s3443
      %3627 = vst [vmem:[%s3626] sm:$0xff] %v3625
      %s3628 = smul.u32 %s23, 4294967283
      %s3629 = sadd.s32 %s3628, 14
      %s3630 = sadd.s32 %s928, 14
      %s3631 = smul.u32 %s3630, 2
      %s3632 = ssub.s32 15, %s3631
      %s3633 = smul.u32 %s23, %s3632
      %s3634 = sadd.s32 %s3630, %s3633
      %s3635 = smul.u32 %s3629, 8
      %s3636 = sshra.s32 %s3635, 3
      %s3637 = sand.u32 %s3635, 7
      %s3638 = smul.u32 %s3636, 3
      %s3639 = smul.addr %s3638, 8
      %s3640 = scalar_lea.vmem [#allocation2], %s3639
      %v3641 = vld [vmem:[%s3640] sm:$0xff]
      %v3642 = vld [vmem:[%s3640 + $0x8] sm:$0xff]
      %v3643 = vld [vmem:[%s3640 + $0x10] sm:$0xff]
      %3644 = vmatprep.subr.mxu0 %v879
      %3645 = vmatpush1.msra.mxu0 %v878
      %3646 = vmatprep.subr.mxu0 %v882
      %3647 = vmatpush1.msra.mxu0 %v881
      %3648 = vmatprep.subr.mxu0 %v885
      %3649 = vmatpush1.msra.mxu0 %v884
      %3650 = vmatprep.subr.mxu0 %v888
      %3651 = vmatpush1.msra.mxu0 %v887
      %3652 = vmatprep.subr.mxu0 %v891
      %3653 = vmatpush1.msra.mxu0 %v890
      %3654 = vmatprep.subr.mxu0 %v894
      %3655 = vmatpush1.msra.mxu0 %v893
      %3656 = vmatprep.subr.mxu0 %v897
      %3657 = vmatpush1.msra.mxu0 %v896
      %3658 = vmatprep.subr.mxu0 %v900
      %3659 = vmatpush1.msra.mxu0 %v899
      %3660 = vmatprep.subr.mxu0 %v903
      %3661 = vmatpush1.msra.mxu0 %v902
      %3662 = vmatprep.subr.mxu0 %v906
      %3663 = vmatpush1.msra.mxu0 %v905
      %3664 = vmatprep.subr.mxu0 %v909
      %3665 = vmatpush1.msra.mxu0 %v908
      %3666 = vmatprep.subr.mxu0 %v912
      %3667 = vmatpush1.msra.mxu0 %v911
      %3668 = vmatprep.subr.mxu0 %v915
      %3669 = vmatpush1.msra.mxu0 %v914
      %3670 = vmatprep.subr.mxu0 %v918
      %3671 = vmatpush1.msra.mxu0 %v917
      %3672 = vmatprep.subr.mxu0 %v921
      %3673 = vmatpush1.msra.mxu0 %v920
      %3674 = vmatprep.subr.mxu0 %v924
      %3675 = vmatpush1.msra.mxu0 %v923
      %3676 = vmatprep.subr.mxu0 0.0
      %3677 = vmatpush1.msra.mxu0 0.0
      %3678 = vmatprep.subr.mxu0 0.0
      %3679 = vmatpush1.msra.mxu0 0.0
      %3680 = vmatprep.subr.mxu0 0.0
      %3681 = vmatpush1.msra.mxu0 0.0
      %3682 = vmatprep.subr.mxu0 0.0
      %3683 = vmatpush1.msra.mxu0 0.0
      %3684 = vmatprep.subr.mxu0 0.0
      %3685 = vmatpush1.msra.mxu0 0.0
      %3686 = vmatprep.subr.mxu0 0.0
      %3687 = vmatpush1.msra.mxu0 0.0
      %3688 = vmatprep.subr.mxu0 0.0
      %3689 = vmatpush1.msra.mxu0 0.0
      %3690 = vmatprep.subr.mxu0 0.0
      %3691 = vmatpush1.msra.mxu0 0.0
      %3692 = vmatprep.subr.mxu0 0.0
      %3693 = vmatpush1.msra.mxu0 0.0
      %3694 = vmatprep.subr.mxu0 0.0
      %3695 = vmatpush1.msra.mxu0 0.0
      %3696 = vmatprep.subr.mxu0 0.0
      %3697 = vmatpush1.msra.mxu0 0.0
      %3698 = vmatprep.subr.mxu0 0.0
      %3699 = vmatpush1.msra.mxu0 0.0
      %3700 = vmatprep.subr.mxu0 0.0
      %3701 = vmatpush1.msra.mxu0 0.0
      %3702 = vmatprep.subr.mxu0 0.0
      %3703 = vmatpush1.msra.mxu0 0.0
      %3704 = vmatprep.subr.mxu0 0.0
      %3705 = vmatpush1.msra.mxu0 0.0
      %3706 = vmatprep.subr.mxu0 0.0
      %3707 = vmatpush1.msra.mxu0 0.0
      %3708 = vmatprep.mubr.f32.mxu0 0.0
      %3709 = vmatmul.mubr.f32.gmra.mrb[0].mxu0 %v3624
      %v3710 = vpop.f32.mrb[0].mxu0
      %v3711 = vadd.f32 %v946, %v3710
      %v3712 = vpop.f32.mrb[0].mxu0
      %v3713 = vadd.f32 %v950, %v3712
      %3714 = vdwg.mxu0
      %3715 = vmatprep.subr.mxu0 0.0
      %3716 = vmatpush1.msra.mxu0 %v880
      %3717 = vmatprep.subr.mxu0 0.0
      %3718 = vmatpush1.msra.mxu0 %v883
      %3719 = vmatprep.subr.mxu0 0.0
      %3720 = vmatpush1.msra.mxu0 %v886
      %3721 = vmatprep.subr.mxu0 0.0
      %3722 = vmatpush1.msra.mxu0 %v889
      %3723 = vmatprep.subr.mxu0 0.0
      %3724 = vmatpush1.msra.mxu0 %v892
      %3725 = vmatprep.subr.mxu0 0.0
      %3726 = vmatpush1.msra.mxu0 %v895
      %3727 = vmatprep.subr.mxu0 0.0
      %3728 = vmatpush1.msra.mxu0 %v898
      %3729 = vmatprep.subr.mxu0 0.0
      %3730 = vmatpush1.msra.mxu0 %v901
      %3731 = vmatprep.subr.mxu0 0.0
      %3732 = vmatpush1.msra.mxu0 %v904
      %3733 = vmatprep.subr.mxu0 0.0
      %3734 = vmatpush1.msra.mxu0 %v907
      %3735 = vmatprep.subr.mxu0 0.0
      %3736 = vmatpush1.msra.mxu0 %v910
      %3737 = vmatprep.subr.mxu0 0.0
      %3738 = vmatpush1.msra.mxu0 %v913
      %3739 = vmatprep.subr.mxu0 0.0
      %3740 = vmatpush1.msra.mxu0 %v916
      %3741 = vmatprep.subr.mxu0 0.0
      %3742 = vmatpush1.msra.mxu0 %v919
      %3743 = vmatprep.subr.mxu0 0.0
      %3744 = vmatpush1.msra.mxu0 %v922
      %3745 = vmatprep.subr.mxu0 0.0
      %3746 = vmatpush1.msra.mxu0 %v925
      %3747 = vmatprep.subr.mxu0 0.0
      %3748 = vmatpush1.msra.mxu0 0.0
      %3749 = vmatprep.subr.mxu0 0.0
      %3750 = vmatpush1.msra.mxu0 0.0
      %3751 = vmatprep.subr.mxu0 0.0
      %3752 = vmatpush1.msra.mxu0 0.0
      %3753 = vmatprep.subr.mxu0 0.0
      %3754 = vmatpush1.msra.mxu0 0.0
      %3755 = vmatprep.subr.mxu0 0.0
      %3756 = vmatpush1.msra.mxu0 0.0
      %3757 = vmatprep.subr.mxu0 0.0
      %3758 = vmatpush1.msra.mxu0 0.0
      %3759 = vmatprep.subr.mxu0 0.0
      %3760 = vmatpush1.msra.mxu0 0.0
      %3761 = vmatprep.subr.mxu0 0.0
      %3762 = vmatpush1.msra.mxu0 0.0
      %3763 = vmatprep.subr.mxu0 0.0
      %3764 = vmatpush1.msra.mxu0 0.0
      %3765 = vmatprep.subr.mxu0 0.0
      %3766 = vmatpush1.msra.mxu0 0.0
      %3767 = vmatprep.subr.mxu0 0.0
      %3768 = vmatpush1.msra.mxu0 0.0
      %3769 = vmatprep.subr.mxu0 0.0
      %3770 = vmatpush1.msra.mxu0 0.0
      %3771 = vmatprep.subr.mxu0 0.0
      %3772 = vmatpush1.msra.mxu0 0.0
      %3773 = vmatprep.subr.mxu0 0.0
      %3774 = vmatpush1.msra.mxu0 0.0
      %3775 = vmatprep.subr.mxu0 0.0
      %3776 = vmatpush1.msra.mxu0 0.0
      %3777 = vmatprep.subr.mxu0 0.0
      %3778 = vmatpush1.msra.mxu0 0.0
      %3779 = vmatprep.mubr.f32.mxu0 0.0
      %3780 = vmatmul.mubr.f32.gmra.mrb[0].mxu0 %v3624
      %v3781 = vpop.f32.mrb[0].mxu0
      %v3782 = vadd.f32 %v954, %v3781
      %v3783 = vpop.f32.mrb[0].mxu0
      %3784 = vdwg.mxu0
      %v3785 = vadd.f32 %v3641, %v3711
      %v3786 = vxor.u32 %v3785, 2147483648
      %v3787 = vmul.f32 %v3786, 1.442695
      %v3788 = vpow.pop %v3787
      %v3789 = vadd.f32 %v3788, 1.0
      %v3790 = vrcp.pop %v3789
      %v3791 = vmul.f32 1.0, %v3790
      %v3792 = vadd.f32 %v3642, %v3713
      %v3793 = vxor.u32 %v3792, 2147483648
      %v3794 = vmul.f32 %v3793, 1.442695
      %v3795 = vpow.pop %v3794
      %v3796 = vadd.f32 %v3795, 1.0
      %v3797 = vrcp.pop %v3796
      %v3798 = vmul.f32 1.0, %v3797
      %v3799 = vmul.f32 %v3791, %v3782
      %v3800 = vadd.f32 %v3643, %v3799
      %v3801 = vtanh.pop %v3800
      %v3802 = vsub.f32 %v3624, %v3801
      %v3803 = vmul.f32 %v3798, %v3802
      %v3804 = vadd.f32 %v3801, %v3803
      %v3805 = vstv %s3634
      %vm3806 = vcmp.gt.s32.totalorder %v877, %v3805
      %v3807 = vsel %vm3806, 1, 0
      %v3808 = vcvt.s32.f32 %v3807
      %v3809 = vsub.f32 %v3804, %v3624
      %3811 = vset.pattern.permute.xlu0 0
      %3812 = vperm.xlu0 %3811, %v3808
      %v3813 = vpop.permute.xlu0 %3812
      %v3815 = vmul.f32 %v3813, %v3809
      %v3816 = vadd.f32 %v3624, %v3815
      %v3817 = vmul.f32 %v3813, %v3804
      %s3818 = scalar_lea.vmem %s427, %s3635
      %3819 = vst [vmem:[%s3818] sm:$0xff] %v3817
      %s3820 = smul.u32 %s23, 4294967281
      %s3821 = sadd.s32 %s3820, 15
      %s3822 = sadd.s32 %s928, 15
      %s3823 = smul.u32 %s3822, 2
      %s3824 = ssub.s32 15, %s3823
      %s3825 = smul.u32 %s23, %s3824
      %s3826 = sadd.s32 %s3822, %s3825
      %s3827 = smul.u32 %s3821, 8
      %s3828 = sshra.s32 %s3827, 3
      %s3829 = sand.u32 %s3827, 7
      %s3830 = smul.u32 %s3828, 3
      %s3831 = smul.addr %s3830, 8
      %s3832 = scalar_lea.vmem [#allocation2], %s3831
      %v3833 = vld [vmem:[%s3832] sm:$0xff]
      %v3834 = vld [vmem:[%s3832 + $0x8] sm:$0xff]
      %v3835 = vld [vmem:[%s3832 + $0x10] sm:$0xff]
      %3836 = vmatprep.subr.mxu0 %v879
      %3837 = vmatpush1.msra.mxu0 %v878
      %3838 = vmatprep.subr.mxu0 %v882
      %3839 = vmatpush1.msra.mxu0 %v881
      %3840 = vmatprep.subr.mxu0 %v885
      %3841 = vmatpush1.msra.mxu0 %v884
      %3842 = vmatprep.subr.mxu0 %v888
      %3843 = vmatpush1.msra.mxu0 %v887
      %3844 = vmatprep.subr.mxu0 %v891
      %3845 = vmatpush1.msra.mxu0 %v890
      %3846 = vmatprep.subr.mxu0 %v894
      %3847 = vmatpush1.msra.mxu0 %v893
      %3848 = vmatprep.subr.mxu0 %v897
      %3849 = vmatpush1.msra.mxu0 %v896
      %3850 = vmatprep.subr.mxu0 %v900
      %3851 = vmatpush1.msra.mxu0 %v899
      %3852 = vmatprep.subr.mxu0 %v903
      %3853 = vmatpush1.msra.mxu0 %v902
      %3854 = vmatprep.subr.mxu0 %v906
      %3855 = vmatpush1.msra.mxu0 %v905
      %3856 = vmatprep.subr.mxu0 %v909
      %3857 = vmatpush1.msra.mxu0 %v908
      %3858 = vmatprep.subr.mxu0 %v912
      %3859 = vmatpush1.msra.mxu0 %v911
      %3860 = vmatprep.subr.mxu0 %v915
      %3861 = vmatpush1.msra.mxu0 %v914
      %3862 = vmatprep.subr.mxu0 %v918
      %3863 = vmatpush1.msra.mxu0 %v917
      %3864 = vmatprep.subr.mxu0 %v921
      %3865 = vmatpush1.msra.mxu0 %v920
      %3866 = vmatprep.subr.mxu0 %v924
      %3867 = vmatpush1.msra.mxu0 %v923
      %3868 = vmatprep.subr.mxu0 0.0
      %3869 = vmatpush1.msra.mxu0 0.0
      %3870 = vmatprep.subr.mxu0 0.0
      %3871 = vmatpush1.msra.mxu0 0.0
      %3872 = vmatprep.subr.mxu0 0.0
      %3873 = vmatpush1.msra.mxu0 0.0
      %3874 = vmatprep.subr.mxu0 0.0
      %3875 = vmatpush1.msra.mxu0 0.0
      %3876 = vmatprep.subr.mxu0 0.0
      %3877 = vmatpush1.msra.mxu0 0.0
      %3878 = vmatprep.subr.mxu0 0.0
      %3879 = vmatpush1.msra.mxu0 0.0
      %3880 = vmatprep.subr.mxu0 0.0
      %3881 = vmatpush1.msra.mxu0 0.0
      %3882 = vmatprep.subr.mxu0 0.0
      %3883 = vmatpush1.msra.mxu0 0.0
      %3884 = vmatprep.subr.mxu0 0.0
      %3885 = vmatpush1.msra.mxu0 0.0
      %3886 = vmatprep.subr.mxu0 0.0
      %3887 = vmatpush1.msra.mxu0 0.0
      %3888 = vmatprep.subr.mxu0 0.0
      %3889 = vmatpush1.msra.mxu0 0.0
      %3890 = vmatprep.subr.mxu0 0.0
      %3891 = vmatpush1.msra.mxu0 0.0
      %3892 = vmatprep.subr.mxu0 0.0
      %3893 = vmatpush1.msra.mxu0 0.0
      %3894 = vmatprep.subr.mxu0 0.0
      %3895 = vmatpush1.msra.mxu0 0.0
      %3896 = vmatprep.subr.mxu0 0.0
      %3897 = vmatpush1.msra.mxu0 0.0
      %3898 = vmatprep.subr.mxu0 0.0
      %3899 = vmatpush1.msra.mxu0 0.0
      %3900 = vmatprep.mubr.f32.mxu0 0.0
      %3901 = vmatmul.mubr.f32.gmra.mrb[0].mxu0 %v3816
      %v3902 = vpop.f32.mrb[0].mxu0
      %v3903 = vadd.f32 %v946, %v3902
      %v3904 = vpop.f32.mrb[0].mxu0
      %v3905 = vadd.f32 %v950, %v3904
      %3906 = vdwg.mxu0
      %3907 = vmatprep.subr.mxu0 0.0
      %3908 = vmatpush1.msra.mxu0 %v880
      %3909 = vmatprep.subr.mxu0 0.0
      %3910 = vmatpush1.msra.mxu0 %v883
      %3911 = vmatprep.subr.mxu0 0.0
      %3912 = vmatpush1.msra.mxu0 %v886
      %3913 = vmatprep.subr.mxu0 0.0
      %3914 = vmatpush1.msra.mxu0 %v889
      %3915 = vmatprep.subr.mxu0 0.0
      %3916 = vmatpush1.msra.mxu0 %v892
      %3917 = vmatprep.subr.mxu0 0.0
      %3918 = vmatpush1.msra.mxu0 %v895
      %3919 = vmatprep.subr.mxu0 0.0
      %3920 = vmatpush1.msra.mxu0 %v898
      %3921 = vmatprep.subr.mxu0 0.0
      %3922 = vmatpush1.msra.mxu0 %v901
      %3923 = vmatprep.subr.mxu0 0.0
      %3924 = vmatpush1.msra.mxu0 %v904
      %3925 = vmatprep.subr.mxu0 0.0
      %3926 = vmatpush1.msra.mxu0 %v907
      %3927 = vmatprep.subr.mxu0 0.0
      %3928 = vmatpush1.msra.mxu0 %v910
      %3929 = vmatprep.subr.mxu0 0.0
      %3930 = vmatpush1.msra.mxu0 %v913
      %3931 = vmatprep.subr.mxu0 0.0
      %3932 = vmatpush1.msra.mxu0 %v916
      %3933 = vmatprep.subr.mxu0 0.0
      %3934 = vmatpush1.msra.mxu0 %v919
      %3935 = vmatprep.subr.mxu0 0.0
      %3936 = vmatpush1.msra.mxu0 %v922
      %3937 = vmatprep.subr.mxu0 0.0
      %3938 = vmatpush1.msra.mxu0 %v925
      %3939 = vmatprep.subr.mxu0 0.0
      %3940 = vmatpush1.msra.mxu0 0.0
      %3941 = vmatprep.subr.mxu0 0.0
      %3942 = vmatpush1.msra.mxu0 0.0
      %3943 = vmatprep.subr.mxu0 0.0
      %3944 = vmatpush1.msra.mxu0 0.0
      %3945 = vmatprep.subr.mxu0 0.0
      %3946 = vmatpush1.msra.mxu0 0.0
      %3947 = vmatprep.subr.mxu0 0.0
      %3948 = vmatpush1.msra.mxu0 0.0
      %3949 = vmatprep.subr.mxu0 0.0
      %3950 = vmatpush1.msra.mxu0 0.0
      %3951 = vmatprep.subr.mxu0 0.0
      %3952 = vmatpush1.msra.mxu0 0.0
      %3953 = vmatprep.subr.mxu0 0.0
      %3954 = vmatpush1.msra.mxu0 0.0
      %3955 = vmatprep.subr.mxu0 0.0
      %3956 = vmatpush1.msra.mxu0 0.0
      %3957 = vmatprep.subr.mxu0 0.0
      %3958 = vmatpush1.msra.mxu0 0.0
      %3959 = vmatprep.subr.mxu0 0.0
      %3960 = vmatpush1.msra.mxu0 0.0
      %3961 = vmatprep.subr.mxu0 0.0
      %3962 = vmatpush1.msra.mxu0 0.0
      %3963 = vmatprep.subr.mxu0 0.0
      %3964 = vmatpush1.msra.mxu0 0.0
      %3965 = vmatprep.subr.mxu0 0.0
      %3966 = vmatpush1.msra.mxu0 0.0
      %3967 = vmatprep.subr.mxu0 0.0
      %3968 = vmatpush1.msra.mxu0 0.0
      %3969 = vmatprep.subr.mxu0 0.0
      %3970 = vmatpush1.msra.mxu0 0.0
      %3971 = vmatprep.mubr.f32.mxu0 0.0
      %3972 = vmatmul.mubr.f32.gmra.mrb[0].mxu0 %v3816
      %v3973 = vpop.f32.mrb[0].mxu0
      %v3974 = vadd.f32 %v954, %v3973
      %v3975 = vpop.f32.mrb[0].mxu0
      %3976 = vdwg.mxu0
      %v3977 = vadd.f32 %v3833, %v3903
      %v3978 = vxor.u32 %v3977, 2147483648
      %v3979 = vmul.f32 %v3978, 1.442695
      %v3980 = vpow.pop %v3979
      %v3981 = vadd.f32 %v3980, 1.0
      %v3982 = vrcp.pop %v3981
      %v3983 = vmul.f32 1.0, %v3982
      %v3984 = vadd.f32 %v3834, %v3905
      %v3985 = vxor.u32 %v3984, 2147483648
      %v3986 = vmul.f32 %v3985, 1.442695
      %v3987 = vpow.pop %v3986
      %v3988 = vadd.f32 %v3987, 1.0
      %v3989 = vrcp.pop %v3988
      %v3990 = vmul.f32 1.0, %v3989
      %v3991 = vmul.f32 %v3983, %v3974
      %v3992 = vadd.f32 %v3835, %v3991
      %v3993 = vtanh.pop %v3992
      %v3994 = vsub.f32 %v3816, %v3993
      %v3995 = vmul.f32 %v3990, %v3994
      %v3996 = vadd.f32 %v3993, %v3995
      %v3997 = vstv %s3826
      %vm3998 = vcmp.gt.s32.totalorder %v877, %v3997
      %v3999 = vsel %vm3998, 1, 0
      %v4000 = vcvt.s32.f32 %v3999
      %v4001 = vsub.f32 %v3996, %v3816
      %4003 = vset.pattern.permute.xlu0 0
      %4004 = vperm.xlu0 %4003, %v4000
      %v4005 = vpop.permute.xlu0 %4004
      %v4007 = vmul.f32 %v4005, %v4001
      %v4008 = vadd.f32 %v3816, %v4007
      %v4009 = vmul.f32 %v4005, %v3996
      %s4010 = scalar_lea.vmem %s427, %s3827
      %4011 = vst [vmem:[%s4010] sm:$0xff] %v4009
      %4012 = vst [vmem:[%s436] sm:$0xff] %v4008
      %s4013 = smul.u32 %s24, 2
      %s4014 = ssub.s32 0, %s4013
      %s4015 = smul.u32 %s23, %s4014
      %s4016 = sadd.s32 %s24, %s4015
      %s4017 = smul.u32 16, %s4016
      %p4018 = scmp.lt.s32.totalorder %s23, 1
      %s4019 = scalar_select %p4018, %s23, 1
      %p4020 = scmp.lt.s32.totalorder %s4017, 15
      %s4021 = scalar_select %p4020, %s4017, 15
      %s4022 = smul.addr %s4019, 16
      %s4023 = sadd.s32 %s4021, %s4022
      %s4024 = smul.addr %s4023, 8
      %s4025 = scalar_lea.vmem %s6, %s4024
      %p4026 = scmp.lt.s32.totalorder %s23, 1
      %s4027 = scalar_select %p4026, %s23, 1
      %s4028 = smul.addr %s4027, 8
      %s4029 = scalar_lea.vmem %s7, %s4028
      // Predicated region
      $region49: #{encoder_rnn_forward.1} parent=43 // pred_check
        %p4030 = pneg %p218
      $region50: #{encoder_rnn_forward.1} parent=43 // pred_check_branch
        %4032 = sbr.rel (%p4030) target = $region52
      $region51: #{encoder_rnn_forward.1} parent=43 // pred_region
        %s4033 = smul.u32 %s24, 2
        %s4034 = ssub.s32 0, %s4033
        %s4035 = smul.u32 %s23, %s4034
        %s4036 = sadd.s32 %s24, %s4035
        %s4037 = smul.u32 16, %s4036
      $region52: #{encoder_rnn_forward.1} parent=43 // pred_fallthru
        _
      // Predicated region
      $region53: #{encoder_rnn_forward.1} parent=43 // pred_check
        %p4038 = pneg %p244
      $region54: #{encoder_rnn_forward.1} parent=43 // pred_check_branch
        %4040 = sbr.rel (%p4038) target = $region56
      $region55: #{encoder_rnn_forward.1} parent=43 // pred_region
        _
      $region56: #{encoder_rnn_forward.1} parent=43 // pred_fallthru
        _
    $region44: #{encoder_rnn_forward.1} parent=5 // pred_fallthru
      _
    %p4041 = scmp.le.s32.totalorder 2, %s14
    // Predicated region
    $region57: #{encoder_rnn_forward.1} parent=5 // pred_check
      %p4042 = pneg %p4041
    $region58: #{encoder_rnn_forward.1} parent=5 // pred_check_branch
      %4044 = sbr.rel (%p4042) target = $region60
    $region59: #{encoder_rnn_forward.1} parent=5 // pred_region
      %s4045 = ssub.s32 %s14, 2
      // Predicated region
      $region61: #{encoder_rnn_forward.1} parent=59 // pred_check
        %p4046 = pneg %p224
      $region62: #{encoder_rnn_forward.1} parent=59 // pred_check_branch
        %4048 = sbr.rel (%p4046) target = $region64
      $region63: #{encoder_rnn_forward.1} parent=59 // pred_region
        %s4049 = smul.u32 %s26, 2
        %s4050 = ssub.s32 0, %s4049
        %s4051 = smul.u32 %s25, %s4050
        %s4052 = sadd.s32 %s26, %s4051
        %s4053 = smul.u32 16, %s4052
        %p4054 = scmp.lt.s32.totalorder %s25, 1
        %s4055 = scalar_select %p4054, %s25, 1
        %p4056 = scmp.lt.s32.totalorder %s4053, 15
        %s4057 = scalar_select %p4056, %s4053, 15
        %s4058 = smul.addr %s4055, 16
        %s4059 = sadd.s32 %s4057, %s4058
        %s4060 = smul.addr %s4059, 8
        %s4061 = scalar_lea.vmem %s6, %s4060
      $region64: #{encoder_rnn_forward.1} parent=59 // pred_fallthru
        _
      // Predicated region
      $region65: #{encoder_rnn_forward.1} parent=59 // pred_check
        %p4062 = pneg %p250
      $region66: #{encoder_rnn_forward.1} parent=59 // pred_check_branch
        %4064 = sbr.rel (%p4062) target = $region68
      $region67: #{encoder_rnn_forward.1} parent=59 // pred_region
        %p4065 = scmp.lt.s32.totalorder %s25, 1
        %s4066 = scalar_select %p4065, %s25, 1
        %s4067 = smul.addr %s4066, 8
        %s4068 = scalar_lea.vmem %s7, %s4067
      $region68: #{encoder_rnn_forward.1} parent=59 // pred_fallthru
        _
    $region60: #{encoder_rnn_forward.1} parent=5 // pred_fallthru
      _
  $region6: #{encoder_rnn_forward.1} parent=0 // loop_footer
    %s18 = sadd.s32 1, %s14
  $region7: #{encoder_rnn_forward.1} parent=0 // loop_footer_branch
    %13 = sbr.rel target = $region3
  $region8: #{encoder_rnn_forward.1} parent=0 // loop_exit
    _

</llo_original>
